<compile_context>
chip_gen: v5e
topology: v5e:2x2
jax: 0.10.0
libtpu: 0.0.40
codegen_flags: <defaults>
</compile_context>

<pallas_src>
import functools

import jax
import jax.numpy as jnp
from jax.experimental import pallas as pl
from jax.experimental.pallas import tpu as pltpu

# Fixed conv hyper-parameters of SoftQNetwork.
K1, S1 = 8, 4
K2, S2 = 4, 2
K3, S3 = 3, 1
C1_OUT, C2_OUT, C3_OUT, FC1 = 32, 64, 64, 512


def _conv_out(size, k, s):
    return (size - k) // s + 1


def _round_up(x, m):
    return (x + m - 1) // m * m


def _pick_batch_tile(batch, w0):
    """Rows per grid step.  Whole batch when small; for production SAC batches
    (256-1024) pick the largest divisor that keeps the x/out blocks
    (8,128)-tileable so the batch axis pipelines and megacore-shards."""
    if batch <= 8:
        return batch
    for bt in range(min(batch, 32), 7, -1):
        if batch % bt == 0 and bt % 8 == 0 and (bt * w0) % 8 == 0:
            return bt
    return batch


# ------------------------------ fused kernel ------------------------------- #
def _softq_kernel(x_ref, w1_ref, b1_ref, w2_ref, b2_ref, w3_ref, b3_ref,
                  fw1_ref, fb1_ref, fwq_ref, fbq_ref, out_ref,
                  p1_ref, a1_ref, p2_ref, a2_ref, p3_ref, a3_ref,
                  *, bt, c_in, w0, ph_off, o1, o2, o3):
    h1, w1 = o1
    h2, w2 = o2
    h3, w3 = o3

    def dense(x, w_ref, b_ref, relu):
        # bf16 operands on the MXU, f32 accumulation, f32 bias/ReLU epilogue.
        if x.dtype != w_ref.dtype:
            x = x.astype(w_ref.dtype)
        acc = jnp.dot(x, w_ref[...], preferred_element_type=jnp.float32)
        acc = acc + b_ref[...]
        return jnp.maximum(acc, 0.0) if relu else acc

    # ---- conv1 patches --------------------------------------------------- #
    # x_ref rows = (n, w % S1, w // S1), cols = (h, c): every kw needs a
    # CONTIGUOUS block of w1 sublanes (no strided loads).  Reads are hoisted
    # out of the oh loop; per (n, oh) the K1 32-lane windows are concatenated
    # into one (w1, K1*K1*c_in) row block and stored with a single store.
    win = K1 * c_in
    for n in range(bt):
        blks = [x_ref[pl.ds(n * w0 + ph_off[kw % S1] + kw // S1, w1), :]
                for kw in range(K1)]
        for oh in range(h1):
            c0 = S1 * oh * c_in
            row = jnp.concatenate([b[:, c0:c0 + win] for b in blks], axis=1)
            d0 = (n * h1 + oh) * w1
            p1_ref[d0:d0 + w1, :] = row.astype(p1_ref.dtype)
    # p1 rows = (n, oh, ow); cols = (kw, kh, ci) -> matches w1_ref ordering.
    a1_ref[...] = dense(p1_ref[...], w1_ref, b1_ref, relu=True)

    # ---- generic lane-dense im2col for activations stored as ((n,h,w), c) - #
    def im2col(src_ref, dst_ref, H, W, C, K, S, OH, OW):
        for n in range(bt):
            for oh in range(OH):
                pieces = []
                for kh in range(K):
                    for kw in range(K):
                        s0 = n * H * W + (S * oh + kh) * W + kw
                        sl = pl.ds(s0, OW) if S == 1 else pl.ds(s0, OW, stride=S)
                        pieces.append(src_ref[sl, :])
                # ONE (OW, K*K*C) store per (n, oh); cols ordered (kh, kw, ci).
                d0 = (n * OH + oh) * OW
                dst_ref[d0:d0 + OW, :] = jnp.concatenate(pieces, axis=1)

    # ---- conv2 ----
    im2col(a1_ref, p2_ref, h1, w1, C1_OUT, K2, S2, h2, w2)
    a2_ref[...] = dense(p2_ref[...], w2_ref, b2_ref, relu=True)

    # ---- conv3 (ReLU here == F.relu applied after Flatten in the reference).
    im2col(a2_ref, p3_ref, h2, w2, C2_OUT, K3, S3, h3, w3)
    a3_ref[...] = dense(p3_ref[...], w3_ref, b3_ref, relu=True)

    # ---- flatten (n, oh3, ow3, c) -> (n, (oh3, ow3, c)); fc1 weight rows were
    # permuted at prep time to match this ordering.
    spatial = h3 * w3
    if spatial == 1:
        flat = a3_ref[...]
    else:
        flat = jnp.concatenate(
            [a3_ref[pl.ds(p, bt, stride=spatial), :] for p in range(spatial)],
            axis=1)

    hidden = dense(flat, fw1_ref, fb1_ref, relu=True)
    out_ref[...] = dense(hidden, fwq_ref, fbq_ref, relu=False)


# ------------------------------ forward wrapper ----------------------------- #
def soft_q_forward(kparams, x, action_dim):
    n, c_in, h0, w0 = x.shape
    h1, w1 = _conv_out(h0, K1, S1), _conv_out(w0, K1, S1)
    h2, w2 = _conv_out(h1, K2, S2), _conv_out(w1, K2, S2)
    h3, w3 = _conv_out(h2, K3, S3), _conv_out(w2, K3, S3)
    assert h3 >= 1 and w3 >= 1, "obs spatial size too small for the conv stack"
    qpad = kparams["fbq"].shape[1]

    # Phase-grouped ((n, w%S1, w//S1), (h, c)) layout: every conv1 patch read
    # in the kernel is a contiguous 8-sublane read.  Cheap one-time XLA gather.
    perm = jnp.asarray([w for p in range(S1) for w in range(p, w0, S1)],
                       dtype=jnp.int32)
    xk = (x.astype(jnp.float32).transpose(0, 3, 2, 1)[:, perm, :, :]
          .reshape(n * w0, h0 * c_in))
    ph_cnt = [(w0 - p + S1 - 1) // S1 for p in range(S1)]
    ph_off = tuple(int(sum(ph_cnt[:p])) for p in range(S1))

    bt = _pick_batch_tile(n, w0)
    grid = (n // bt,)

    # p1 dominates patch bytes -> bf16 (stores stay whole-packed-sublane
    # aligned because w1-row blocks land at even offsets).  conv2/conv3
    # buffers are tiny and keep f32 to avoid packed sub-sublane store/strided
    # load paths; their bf16 cast happens once at the matmul operand.
    p1_dtype = jnp.bfloat16 if (w1 % 2 == 0) else jnp.float32

    weight_args = (kparams["w1"], kparams["b1"], kparams["w2"], kparams["b2"],
                   kparams["w3"], kparams["b3"], kparams["fw1"], kparams["fb1"],
                   kparams["fwq"], kparams["fbq"])

    kernel = functools.partial(
        _softq_kernel, bt=bt, c_in=c_in, w0=w0, ph_off=ph_off,
        o1=(h1, w1), o2=(h2, w2), o3=(h3, w3))

    # Advisory cost estimate so XLA schedules neighbours around the call.
    mm = [(n * h1 * w1, K1 * K1 * c_in, C1_OUT),
          (n * h2 * w2, K2 * K2 * C1_OUT, C2_OUT),
          (n * h3 * w3, K3 * K3 * C2_OUT, C3_OUT),
          (n, C3_OUT * h3 * w3, FC1),
          (n, FC1, qpad)]
    flops = 2 * sum(m * k * c for m, k, c in mm)
    bytes_accessed = (int(xk.size) * xk.dtype.itemsize
                      + sum(int(a.size) * a.dtype.itemsize for a in weight_args)
                      + n * qpad * 4)

    out = pl.pallas_call(
        kernel,
        out_shape=jax.ShapeDtypeStruct((n, qpad), jnp.float32),
        grid=grid,
        in_specs=[pl.BlockSpec((bt * w0, h0 * c_in), lambda i: (i, 0))] +
                 [pl.BlockSpec(w.shape, lambda i: (0, 0)) for w in weight_args],
        out_specs=pl.BlockSpec((bt, qpad), lambda i: (i, 0)),
        scratch_shapes=[
            pltpu.VMEM((bt * h1 * w1, K1 * K1 * c_in), p1_dtype),      # p1
            pltpu.VMEM((bt * h1 * w1, C1_OUT), jnp.float32),           # a1
            pltpu.VMEM((bt * h2 * w2, K2 * K2 * C1_OUT), jnp.float32),  # p2
            pltpu.VMEM((bt * h2 * w2, C2_OUT), jnp.float32),           # a2
            pltpu.VMEM((bt * h3 * w3, K3 * K3 * C2_OUT), jnp.float32),  # p3
            pltpu.VMEM((bt * h3 * w3, C3_OUT), jnp.float32),           # a3
        ],
        compiler_params=pltpu.CompilerParams(
            dimension_semantics=("parallel",),
            vmem_limit_bytes=32 * 1024 * 1024),
        cost_estimate=pl.CostEstimate(flops=int(flops), transcendentals=0,
                                      bytes_accessed=int(bytes_accessed)),
    )(xk, *weight_args)
    return out[:, :action_dim]


# ------------------------------- parameters --------------------------------- #
def _kaiming_normal(key, shape, fan_in):
    # matches torch.nn.init.kaiming_normal_ (fan_in, gain=sqrt(2)); bias = 0.
    return jnp.sqrt(2.0 / fan_in) * jax.random.normal(key, shape, jnp.float32)


def init_params(key, obs_shape, action_dim):
    """PyTorch-layout parameters (same shapes as the nn.Module)."""
    c_in, h0, w0 = obs_shape
    h1, w1 = _conv_out(h0, K1, S1), _conv_out(w0, K1, S1)
    h2, w2 = _conv_out(h1, K2, S2), _conv_out(w1, K2, S2)
    h3, w3 = _conv_out(h2, K3, S3), _conv_out(w2, K3, S3)
    output_dim = C3_OUT * h3 * w3
    ks = jax.random.split(key, 5)
    return {
        "c1w": _kaiming_normal(ks[0], (C1_OUT, c_in, K1, K1), c_in * K1 * K1),
        "c1b": jnp.zeros((C1_OUT,), jnp.float32),
        "c2w": _kaiming_normal(ks[1], (C2_OUT, C1_OUT, K2, K2), C1_OUT * K2 * K2),
        "c2b": jnp.zeros((C2_OUT,), jnp.float32),
        "c3w": _kaiming_normal(ks[2], (C3_OUT, C2_OUT, K3, K3), C2_OUT * K3 * K3),
        "c3b": jnp.zeros((C3_OUT,), jnp.float32),
        "f1w": _kaiming_normal(ks[3], (FC1, output_dim), output_dim),
        "f1b": jnp.zeros((FC1,), jnp.float32),
        "fqw": _kaiming_normal(ks[4], (action_dim, FC1), FC1),
        "fqb": jnp.zeros((action_dim,), jnp.float32),
    }


def prepare_params(params, obs_shape, action_dim):
    """One-time permutation of PyTorch-layout weights into kernel layout."""
    c_in, h0, w0 = obs_shape
    h3 = _conv_out(_conv_out(_conv_out(h0, K1, S1), K2, S2), K3, S3)
    w3 = _conv_out(_conv_out(_conv_out(w0, K1, S1), K2, S2), K3, S3)
    f32, bf16 = jnp.float32, jnp.bfloat16
    qpad = _round_up(action_dim, 128)   # 128-lane slab for the Q head

    # fc1 input index in torch is (c, oh, ow); kernel flatten is ((oh, ow), c).
    fw1 = (params["f1w"].reshape(FC1, C3_OUT, h3, w3)
           .transpose(2, 3, 1, 0).reshape(h3 * w3 * C3_OUT, FC1))
    fwq = jnp.zeros((FC1, qpad), f32).at[:, :action_dim].set(params["fqw"].T)
    fbq = jnp.zeros((1, qpad), f32).at[0, :action_dim].set(params["fqb"])

    return {
        # conv1 patch columns are ordered (kw, kh, ci).
        "w1": params["c1w"].transpose(3, 2, 1, 0)
              .reshape(K1 * K1 * c_in, C1_OUT).astype(bf16),
        "b1": params["c1b"].reshape(1, C1_OUT).astype(f32),
        # conv2 / conv3 patch columns are ordered (kh, kw, ci).
        "w2": params["c2w"].transpose(2, 3, 1, 0)
              .reshape(K2 * K2 * C1_OUT, C2_OUT).astype(bf16),
        "b2": params["c2b"].reshape(1, C2_OUT).astype(f32),
        "w3": params["c3w"].transpose(2, 3, 1, 0)
              .reshape(K3 * K3 * C2_OUT, C3_OUT).astype(bf16),
        "b3": params["c3b"].reshape(1, C3_OUT).astype(f32),
        "fw1": fw1.astype(bf16),
        "fb1": params["f1b"].reshape(1, FC1).astype(f32),
        "fwq": fwq.astype(bf16),
        "fbq": fbq,
    }


# ------------------------------- f32 reference ------------------------------- #
def softq_ref(params, x):
    """Pure-JAX f32 reference of the PyTorch forward (for tolerance checks)."""
    dn = ("NCHW", "OIHW", "NCHW")
    hp = jax.lax.Precision.HIGHEST
    a = x.astype(jnp.float32)
    a = jax.lax.conv_general_dilated(a, params["c1w"], (S1, S1), "VALID",
                                     dimension_numbers=dn, precision=hp)
    a = jax.nn.relu(a + params["c1b"][None, :, None, None])
    a = jax.lax.conv_general_dilated(a, params["c2w"], (S2, S2), "VALID",
                                     dimension_numbers=dn, precision=hp)
    a = jax.nn.relu(a + params["c2b"][None, :, None, None])
    a = jax.lax.conv_general_dilated(a, params["c3w"], (S3, S3), "VALID",
                                     dimension_numbers=dn, precision=hp)
    a = a + params["c3b"][None, :, None, None]
    a = jax.nn.relu(a.reshape(a.shape[0], -1))       # Flatten + F.relu
    a = jax.nn.relu(jnp.dot(a, params["f1w"].T, precision=hp) + params["f1b"])
    return jnp.dot(a, params["fqw"].T, precision=hp) + params["fqb"]


# ----------------------------------- main ----------------------------------- #
if __name__ == "__main__":
    key = jax.random.PRNGKey(0)
    k_param, k_x = jax.random.split(key)

    # 36x36 is the smallest spatial size the 8/4 -> 4/2 -> 3/1 stack admits:
    # 36 -> 8 -> 3 -> 1, flatten dim = 64.
    obs_shape = (4, 36, 36)   # (C, H, W)
    action_dim = 6
    batch = 2

    params = init_params(k_param, obs_shape, action_dim)
    kparams = prepare_params(params, obs_shape, action_dim)
    x = jax.random.uniform(k_x, (batch,) + obs_shape, dtype=jnp.float32)

    forward = jax.jit(soft_q_forward, static_argnames="action_dim")
    q = forward(kparams, x, action_dim=action_dim)
    q = jax.block_until_ready(q)
    assert q.shape == (batch, action_dim)

    # Tolerance-assert against the f32 reference (kernel uses bf16 MXU
    # operands with f32 accumulation, so a small deviation is expected).
    q_ref = softq_ref(params, x)
    err = float(jnp.max(jnp.abs(q - q_ref)))
    scale = float(jnp.max(jnp.abs(q_ref)))
    assert err <= 5e-2 * (1.0 + scale), f"max|q - q_ref| = {err} (scale={scale})"
    print("KERNEL_OK")
</pallas_src>

<mosaic_0001>
module attributes {stable_mosaic.version = 11 : i64} {
  func.func @_softq_kernel(%arg0: i32, %arg1: memref<72x144xf32, #tpu.memory_space<vmem>>, %arg2: memref<256x32xbf16, #tpu.memory_space<vmem>>, %arg3: memref<1x32xf32, #tpu.memory_space<vmem>>, %arg4: memref<512x64xbf16, #tpu.memory_space<vmem>>, %arg5: memref<1x64xf32, #tpu.memory_space<vmem>>, %arg6: memref<576x64xbf16, #tpu.memory_space<vmem>>, %arg7: memref<1x64xf32, #tpu.memory_space<vmem>>, %arg8: memref<64x512xbf16, #tpu.memory_space<vmem>>, %arg9: memref<1x512xf32, #tpu.memory_space<vmem>>, %arg10: memref<512x128xbf16, #tpu.memory_space<vmem>>, %arg11: memref<1x128xf32, #tpu.memory_space<vmem>>, %arg12: memref<2x128xf32, #tpu.memory_space<vmem>>, %arg13: memref<128x256xbf16, #tpu.memory_space<vmem>>, %arg14: memref<128x32xf32, #tpu.memory_space<vmem>>, %arg15: memref<18x512xf32, #tpu.memory_space<vmem>>, %arg16: memref<18x64xf32, #tpu.memory_space<vmem>>, %arg17: memref<2x576xf32, #tpu.memory_space<vmem>>, %arg18: memref<2x64xf32, #tpu.memory_space<vmem>>) attributes {dimension_semantics = [#tpu.dimension_semantics<parallel>], iteration_bounds = array<i64: 1>, scalar_prefetch = 0 : i64, scratch_operands = 6 : i64, tpu.core_type = #tpu.core_type<tc>, window_params = [{transform_indices = @transform_0, window_bounds = array<i64: 72, 144>}, {pipeline_mode = #tpu.pipeline_mode<synchronous>, transform_indices = @transform_1, window_bounds = array<i64: 256, 32>}, {pipeline_mode = #tpu.pipeline_mode<synchronous>, transform_indices = @transform_2, window_bounds = array<i64: 1, 32>}, {pipeline_mode = #tpu.pipeline_mode<synchronous>, transform_indices = @transform_3, window_bounds = array<i64: 512, 64>}, {pipeline_mode = #tpu.pipeline_mode<synchronous>, transform_indices = @transform_4, window_bounds = array<i64: 1, 64>}, {pipeline_mode = #tpu.pipeline_mode<synchronous>, transform_indices = @transform_5, window_bounds = array<i64: 576, 64>}, {pipeline_mode = #tpu.pipeline_mode<synchronous>, transform_indices = @transform_6, window_bounds = array<i64: 1, 64>}, {pipeline_mode = #tpu.pipeline_mode<synchronous>, transform_indices = @transform_7, window_bounds = array<i64: 64, 512>}, {pipeline_mode = #tpu.pipeline_mode<synchronous>, transform_indices = @transform_8, window_bounds = array<i64: 1, 512>}, {pipeline_mode = #tpu.pipeline_mode<synchronous>, transform_indices = @transform_9, window_bounds = array<i64: 512, 128>}, {pipeline_mode = #tpu.pipeline_mode<synchronous>, transform_indices = @transform_10, window_bounds = array<i64: 1, 128>}, {transform_indices = @transform_11, window_bounds = array<i64: 2, 128>}]} {
    %c0 = arith.constant 0 : index
    %c0_0 = arith.constant 0 : index
    %0 = vector.load %arg1[%c0, %c0_0] : memref<72x144xf32, #tpu.memory_space<vmem>>, vector<8x144xf32>
    %c9 = arith.constant 9 : index
    %c0_1 = arith.constant 0 : index
    %1 = vector.load %arg1[%c9, %c0_1] : memref<72x144xf32, #tpu.memory_space<vmem>>, vector<8x144xf32>
    %c18 = arith.constant 18 : index
    %c0_2 = arith.constant 0 : index
    %2 = vector.load %arg1[%c18, %c0_2] : memref<72x144xf32, #tpu.memory_space<vmem>>, vector<8x144xf32>
    %c27 = arith.constant 27 : index
    %c0_3 = arith.constant 0 : index
    %3 = vector.load %arg1[%c27, %c0_3] : memref<72x144xf32, #tpu.memory_space<vmem>>, vector<8x144xf32>
    %c1 = arith.constant 1 : index
    %c0_4 = arith.constant 0 : index
    %4 = vector.load %arg1[%c1, %c0_4] : memref<72x144xf32, #tpu.memory_space<vmem>>, vector<8x144xf32>
    %c10 = arith.constant 10 : index
    %c0_5 = arith.constant 0 : index
    %5 = vector.load %arg1[%c10, %c0_5] : memref<72x144xf32, #tpu.memory_space<vmem>>, vector<8x144xf32>
    %c19 = arith.constant 19 : index
    %c0_6 = arith.constant 0 : index
    %6 = vector.load %arg1[%c19, %c0_6] : memref<72x144xf32, #tpu.memory_space<vmem>>, vector<8x144xf32>
    %c28 = arith.constant 28 : index
    %c0_7 = arith.constant 0 : index
    %7 = vector.load %arg1[%c28, %c0_7] : memref<72x144xf32, #tpu.memory_space<vmem>>, vector<8x144xf32>
    %8 = vector.extract_strided_slice %0 {offsets = [0, 0], sizes = [8, 32], strides = [1, 1]} : vector<8x144xf32> to vector<8x32xf32>
    %9 = vector.extract_strided_slice %1 {offsets = [0, 0], sizes = [8, 32], strides = [1, 1]} : vector<8x144xf32> to vector<8x32xf32>
    %10 = vector.extract_strided_slice %2 {offsets = [0, 0], sizes = [8, 32], strides = [1, 1]} : vector<8x144xf32> to vector<8x32xf32>
    %11 = vector.extract_strided_slice %3 {offsets = [0, 0], sizes = [8, 32], strides = [1, 1]} : vector<8x144xf32> to vector<8x32xf32>
    %12 = vector.extract_strided_slice %4 {offsets = [0, 0], sizes = [8, 32], strides = [1, 1]} : vector<8x144xf32> to vector<8x32xf32>
    %13 = vector.extract_strided_slice %5 {offsets = [0, 0], sizes = [8, 32], strides = [1, 1]} : vector<8x144xf32> to vector<8x32xf32>
    %14 = vector.extract_strided_slice %6 {offsets = [0, 0], sizes = [8, 32], strides = [1, 1]} : vector<8x144xf32> to vector<8x32xf32>
    %15 = vector.extract_strided_slice %7 {offsets = [0, 0], sizes = [8, 32], strides = [1, 1]} : vector<8x144xf32> to vector<8x32xf32>
    %16 = tpu.concatenate %8, %9, %10, %11, %12, %13, %14, %15 in 1 : vector<8x32xf32>, vector<8x32xf32>, vector<8x32xf32>, vector<8x32xf32>, vector<8x32xf32>, vector<8x32xf32>, vector<8x32xf32>, vector<8x32xf32> -> vector<8x256xf32>
    %17 = arith.truncf %16 : vector<8x256xf32> to vector<8x256xbf16>
    %c0_8 = arith.constant 0 : index
    %c0_9 = arith.constant 0 : index
    %18 = vector.load %arg13[%c0_8, %c0_9] : memref<128x256xbf16, #tpu.memory_space<vmem>>, vector<8x256xbf16>
    tpu.vector_store %arg13[%c0_8, %c0_9], %17 {strides = array<i32>} : memref<128x256xbf16, #tpu.memory_space<vmem>>, vector<8x256xbf16>,
    %19 = vector.extract_strided_slice %0 {offsets = [0, 16], sizes = [8, 32], strides = [1, 1]} : vector<8x144xf32> to vector<8x32xf32>
    %20 = vector.extract_strided_slice %1 {offsets = [0, 16], sizes = [8, 32], strides = [1, 1]} : vector<8x144xf32> to vector<8x32xf32>
    %21 = vector.extract_strided_slice %2 {offsets = [0, 16], sizes = [8, 32], strides = [1, 1]} : vector<8x144xf32> to vector<8x32xf32>
    %22 = vector.extract_strided_slice %3 {offsets = [0, 16], sizes = [8, 32], strides = [1, 1]} : vector<8x144xf32> to vector<8x32xf32>
    %23 = vector.extract_strided_slice %4 {offsets = [0, 16], sizes = [8, 32], strides = [1, 1]} : vector<8x144xf32> to vector<8x32xf32>
    %24 = vector.extract_strided_slice %5 {offsets = [0, 16], sizes = [8, 32], strides = [1, 1]} : vector<8x144xf32> to vector<8x32xf32>
    %25 = vector.extract_strided_slice %6 {offsets = [0, 16], sizes = [8, 32], strides = [1, 1]} : vector<8x144xf32> to vector<8x32xf32>
    %26 = vector.extract_strided_slice %7 {offsets = [0, 16], sizes = [8, 32], strides = [1, 1]} : vector<8x144xf32> to vector<8x32xf32>
    %27 = tpu.concatenate %19, %20, %21, %22, %23, %24, %25, %26 in 1 : vector<8x32xf32>, vector<8x32xf32>, vector<8x32xf32>, vector<8x32xf32>, vector<8x32xf32>, vector<8x32xf32>, vector<8x32xf32>, vector<8x32xf32> -> vector<8x256xf32>
    %28 = arith.truncf %27 : vector<8x256xf32> to vector<8x256xbf16>
    %c8 = arith.constant 8 : index
    %c0_10 = arith.constant 0 : index
    %29 = vector.load %arg13[%c8, %c0_10] : memref<128x256xbf16, #tpu.memory_space<vmem>>, vector<8x256xbf16>
    tpu.vector_store %arg13[%c8, %c0_10], %28 {strides = array<i32>} : memref<128x256xbf16, #tpu.memory_space<vmem>>, vector<8x256xbf16>,
    %30 = vector.extract_strided_slice %0 {offsets = [0, 32], sizes = [8, 32], strides = [1, 1]} : vector<8x144xf32> to vector<8x32xf32>
    %31 = vector.extract_strided_slice %1 {offsets = [0, 32], sizes = [8, 32], strides = [1, 1]} : vector<8x144xf32> to vector<8x32xf32>
    %32 = vector.extract_strided_slice %2 {offsets = [0, 32], sizes = [8, 32], strides = [1, 1]} : vector<8x144xf32> to vector<8x32xf32>
    %33 = vector.extract_strided_slice %3 {offsets = [0, 32], sizes = [8, 32], strides = [1, 1]} : vector<8x144xf32> to vector<8x32xf32>
    %34 = vector.extract_strided_slice %4 {offsets = [0, 32], sizes = [8, 32], strides = [1, 1]} : vector<8x144xf32> to vector<8x32xf32>
    %35 = vector.extract_strided_slice %5 {offsets = [0, 32], sizes = [8, 32], strides = [1, 1]} : vector<8x144xf32> to vector<8x32xf32>
    %36 = vector.extract_strided_slice %6 {offsets = [0, 32], sizes = [8, 32], strides = [1, 1]} : vector<8x144xf32> to vector<8x32xf32>
    %37 = vector.extract_strided_slice %7 {offsets = [0, 32], sizes = [8, 32], strides = [1, 1]} : vector<8x144xf32> to vector<8x32xf32>
    %38 = tpu.concatenate %30, %31, %32, %33, %34, %35, %36, %37 in 1 : vector<8x32xf32>, vector<8x32xf32>, vector<8x32xf32>, vector<8x32xf32>, vector<8x32xf32>, vector<8x32xf32>, vector<8x32xf32>, vector<8x32xf32> -> vector<8x256xf32>
    %39 = arith.truncf %38 : vector<8x256xf32> to vector<8x256xbf16>
    %c16 = arith.constant 16 : index
    %c0_11 = arith.constant 0 : index
    %40 = vector.load %arg13[%c16, %c0_11] : memref<128x256xbf16, #tpu.memory_space<vmem>>, vector<8x256xbf16>
    tpu.vector_store %arg13[%c16, %c0_11], %39 {strides = array<i32>} : memref<128x256xbf16, #tpu.memory_space<vmem>>, vector<8x256xbf16>,
    %41 = vector.extract_strided_slice %0 {offsets = [0, 48], sizes = [8, 32], strides = [1, 1]} : vector<8x144xf32> to vector<8x32xf32>
    %42 = vector.extract_strided_slice %1 {offsets = [0, 48], sizes = [8, 32], strides = [1, 1]} : vector<8x144xf32> to vector<8x32xf32>
    %43 = vector.extract_strided_slice %2 {offsets = [0, 48], sizes = [8, 32], strides = [1, 1]} : vector<8x144xf32> to vector<8x32xf32>
    %44 = vector.extract_strided_slice %3 {offsets = [0, 48], sizes = [8, 32], strides = [1, 1]} : vector<8x144xf32> to vector<8x32xf32>
    %45 = vector.extract_strided_slice %4 {offsets = [0, 48], sizes = [8, 32], strides = [1, 1]} : vector<8x144xf32> to vector<8x32xf32>
    %46 = vector.extract_strided_slice %5 {offsets = [0, 48], sizes = [8, 32], strides = [1, 1]} : vector<8x144xf32> to vector<8x32xf32>
    %47 = vector.extract_strided_slice %6 {offsets = [0, 48], sizes = [8, 32], strides = [1, 1]} : vector<8x144xf32> to vector<8x32xf32>
    %48 = vector.extract_strided_slice %7 {offsets = [0, 48], sizes = [8, 32], strides = [1, 1]} : vector<8x144xf32> to vector<8x32xf32>
    %49 = tpu.concatenate %41, %42, %43, %44, %45, %46, %47, %48 in 1 : vector<8x32xf32>, vector<8x32xf32>, vector<8x32xf32>, vector<8x32xf32>, vector<8x32xf32>, vector<8x32xf32>, vector<8x32xf32>, vector<8x32xf32> -> vector<8x256xf32>
    %50 = arith.truncf %49 : vector<8x256xf32> to vector<8x256xbf16>
    %c24 = arith.constant 24 : index
    %c0_12 = arith.constant 0 : index
    %51 = vector.load %arg13[%c24, %c0_12] : memref<128x256xbf16, #tpu.memory_space<vmem>>, vector<8x256xbf16>
    tpu.vector_store %arg13[%c24, %c0_12], %50 {strides = array<i32>} : memref<128x256xbf16, #tpu.memory_space<vmem>>, vector<8x256xbf16>,
    %52 = vector.extract_strided_slice %0 {offsets = [0, 64], sizes = [8, 32], strides = [1, 1]} : vector<8x144xf32> to vector<8x32xf32>
    %53 = vector.extract_strided_slice %1 {offsets = [0, 64], sizes = [8, 32], strides = [1, 1]} : vector<8x144xf32> to vector<8x32xf32>
    %54 = vector.extract_strided_slice %2 {offsets = [0, 64], sizes = [8, 32], strides = [1, 1]} : vector<8x144xf32> to vector<8x32xf32>
    %55 = vector.extract_strided_slice %3 {offsets = [0, 64], sizes = [8, 32], strides = [1, 1]} : vector<8x144xf32> to vector<8x32xf32>
    %56 = vector.extract_strided_slice %4 {offsets = [0, 64], sizes = [8, 32], strides = [1, 1]} : vector<8x144xf32> to vector<8x32xf32>
    %57 = vector.extract_strided_slice %5 {offsets = [0, 64], sizes = [8, 32], strides = [1, 1]} : vector<8x144xf32> to vector<8x32xf32>
    %58 = vector.extract_strided_slice %6 {offsets = [0, 64], sizes = [8, 32], strides = [1, 1]} : vector<8x144xf32> to vector<8x32xf32>
    %59 = vector.extract_strided_slice %7 {offsets = [0, 64], sizes = [8, 32], strides = [1, 1]} : vector<8x144xf32> to vector<8x32xf32>
    %60 = tpu.concatenate %52, %53, %54, %55, %56, %57, %58, %59 in 1 : vector<8x32xf32>, vector<8x32xf32>, vector<8x32xf32>, vector<8x32xf32>, vector<8x32xf32>, vector<8x32xf32>, vector<8x32xf32>, vector<8x32xf32> -> vector<8x256xf32>
    %61 = arith.truncf %60 : vector<8x256xf32> to vector<8x256xbf16>
    %c32 = arith.constant 32 : index
    %c0_13 = arith.constant 0 : index
    %62 = vector.load %arg13[%c32, %c0_13] : memref<128x256xbf16, #tpu.memory_space<vmem>>, vector<8x256xbf16>
    tpu.vector_store %arg13[%c32, %c0_13], %61 {strides = array<i32>} : memref<128x256xbf16, #tpu.memory_space<vmem>>, vector<8x256xbf16>,
    %63 = vector.extract_strided_slice %0 {offsets = [0, 80], sizes = [8, 32], strides = [1, 1]} : vector<8x144xf32> to vector<8x32xf32>
    %64 = vector.extract_strided_slice %1 {offsets = [0, 80], sizes = [8, 32], strides = [1, 1]} : vector<8x144xf32> to vector<8x32xf32>
    %65 = vector.extract_strided_slice %2 {offsets = [0, 80], sizes = [8, 32], strides = [1, 1]} : vector<8x144xf32> to vector<8x32xf32>
    %66 = vector.extract_strided_slice %3 {offsets = [0, 80], sizes = [8, 32], strides = [1, 1]} : vector<8x144xf32> to vector<8x32xf32>
    %67 = vector.extract_strided_slice %4 {offsets = [0, 80], sizes = [8, 32], strides = [1, 1]} : vector<8x144xf32> to vector<8x32xf32>
    %68 = vector.extract_strided_slice %5 {offsets = [0, 80], sizes = [8, 32], strides = [1, 1]} : vector<8x144xf32> to vector<8x32xf32>
    %69 = vector.extract_strided_slice %6 {offsets = [0, 80], sizes = [8, 32], strides = [1, 1]} : vector<8x144xf32> to vector<8x32xf32>
    %70 = vector.extract_strided_slice %7 {offsets = [0, 80], sizes = [8, 32], strides = [1, 1]} : vector<8x144xf32> to vector<8x32xf32>
    %71 = tpu.concatenate %63, %64, %65, %66, %67, %68, %69, %70 in 1 : vector<8x32xf32>, vector<8x32xf32>, vector<8x32xf32>, vector<8x32xf32>, vector<8x32xf32>, vector<8x32xf32>, vector<8x32xf32>, vector<8x32xf32> -> vector<8x256xf32>
    %72 = arith.truncf %71 : vector<8x256xf32> to vector<8x256xbf16>
    %c40 = arith.constant 40 : index
    %c0_14 = arith.constant 0 : index
    %73 = vector.load %arg13[%c40, %c0_14] : memref<128x256xbf16, #tpu.memory_space<vmem>>, vector<8x256xbf16>
    tpu.vector_store %arg13[%c40, %c0_14], %72 {strides = array<i32>} : memref<128x256xbf16, #tpu.memory_space<vmem>>, vector<8x256xbf16>,
    %74 = vector.extract_strided_slice %0 {offsets = [0, 96], sizes = [8, 32], strides = [1, 1]} : vector<8x144xf32> to vector<8x32xf32>
    %75 = vector.extract_strided_slice %1 {offsets = [0, 96], sizes = [8, 32], strides = [1, 1]} : vector<8x144xf32> to vector<8x32xf32>
    %76 = vector.extract_strided_slice %2 {offsets = [0, 96], sizes = [8, 32], strides = [1, 1]} : vector<8x144xf32> to vector<8x32xf32>
    %77 = vector.extract_strided_slice %3 {offsets = [0, 96], sizes = [8, 32], strides = [1, 1]} : vector<8x144xf32> to vector<8x32xf32>
    %78 = vector.extract_strided_slice %4 {offsets = [0, 96], sizes = [8, 32], strides = [1, 1]} : vector<8x144xf32> to vector<8x32xf32>
    %79 = vector.extract_strided_slice %5 {offsets = [0, 96], sizes = [8, 32], strides = [1, 1]} : vector<8x144xf32> to vector<8x32xf32>
    %80 = vector.extract_strided_slice %6 {offsets = [0, 96], sizes = [8, 32], strides = [1, 1]} : vector<8x144xf32> to vector<8x32xf32>
    %81 = vector.extract_strided_slice %7 {offsets = [0, 96], sizes = [8, 32], strides = [1, 1]} : vector<8x144xf32> to vector<8x32xf32>
    %82 = tpu.concatenate %74, %75, %76, %77, %78, %79, %80, %81 in 1 : vector<8x32xf32>, vector<8x32xf32>, vector<8x32xf32>, vector<8x32xf32>, vector<8x32xf32>, vector<8x32xf32>, vector<8x32xf32>, vector<8x32xf32> -> vector<8x256xf32>
    %83 = arith.truncf %82 : vector<8x256xf32> to vector<8x256xbf16>
    %c48 = arith.constant 48 : index
    %c0_15 = arith.constant 0 : index
    %84 = vector.load %arg13[%c48, %c0_15] : memref<128x256xbf16, #tpu.memory_space<vmem>>, vector<8x256xbf16>
    tpu.vector_store %arg13[%c48, %c0_15], %83 {strides = array<i32>} : memref<128x256xbf16, #tpu.memory_space<vmem>>, vector<8x256xbf16>,
    %85 = vector.extract_strided_slice %0 {offsets = [0, 112], sizes = [8, 32], strides = [1, 1]} : vector<8x144xf32> to vector<8x32xf32>
    %86 = vector.extract_strided_slice %1 {offsets = [0, 112], sizes = [8, 32], strides = [1, 1]} : vector<8x144xf32> to vector<8x32xf32>
    %87 = vector.extract_strided_slice %2 {offsets = [0, 112], sizes = [8, 32], strides = [1, 1]} : vector<8x144xf32> to vector<8x32xf32>
    %88 = vector.extract_strided_slice %3 {offsets = [0, 112], sizes = [8, 32], strides = [1, 1]} : vector<8x144xf32> to vector<8x32xf32>
    %89 = vector.extract_strided_slice %4 {offsets = [0, 112], sizes = [8, 32], strides = [1, 1]} : vector<8x144xf32> to vector<8x32xf32>
    %90 = vector.extract_strided_slice %5 {offsets = [0, 112], sizes = [8, 32], strides = [1, 1]} : vector<8x144xf32> to vector<8x32xf32>
    %91 = vector.extract_strided_slice %6 {offsets = [0, 112], sizes = [8, 32], strides = [1, 1]} : vector<8x144xf32> to vector<8x32xf32>
    %92 = vector.extract_strided_slice %7 {offsets = [0, 112], sizes = [8, 32], strides = [1, 1]} : vector<8x144xf32> to vector<8x32xf32>
    %93 = tpu.concatenate %85, %86, %87, %88, %89, %90, %91, %92 in 1 : vector<8x32xf32>, vector<8x32xf32>, vector<8x32xf32>, vector<8x32xf32>, vector<8x32xf32>, vector<8x32xf32>, vector<8x32xf32>, vector<8x32xf32> -> vector<8x256xf32>
    %94 = arith.truncf %93 : vector<8x256xf32> to vector<8x256xbf16>
    %c56 = arith.constant 56 : index
    %c0_16 = arith.constant 0 : index
    %95 = vector.load %arg13[%c56, %c0_16] : memref<128x256xbf16, #tpu.memory_space<vmem>>, vector<8x256xbf16>
    tpu.vector_store %arg13[%c56, %c0_16], %94 {strides = array<i32>} : memref<128x256xbf16, #tpu.memory_space<vmem>>, vector<8x256xbf16>,
    %c36 = arith.constant 36 : index
    %c0_17 = arith.constant 0 : index
    %96 = vector.load %arg1[%c36, %c0_17] : memref<72x144xf32, #tpu.memory_space<vmem>>, vector<8x144xf32>
    %c45 = arith.constant 45 : index
    %c0_18 = arith.constant 0 : index
    %97 = vector.load %arg1[%c45, %c0_18] : memref<72x144xf32, #tpu.memory_space<vmem>>, vector<8x144xf32>
    %c54 = arith.constant 54 : index
    %c0_19 = arith.constant 0 : index
    %98 = vector.load %arg1[%c54, %c0_19] : memref<72x144xf32, #tpu.memory_space<vmem>>, vector<8x144xf32>
    %c63 = arith.constant 63 : index
    %c0_20 = arith.constant 0 : index
    %99 = vector.load %arg1[%c63, %c0_20] : memref<72x144xf32, #tpu.memory_space<vmem>>, vector<8x144xf32>
    %c37 = arith.constant 37 : index
    %c0_21 = arith.constant 0 : index
    %100 = vector.load %arg1[%c37, %c0_21] : memref<72x144xf32, #tpu.memory_space<vmem>>, vector<8x144xf32>
    %c46 = arith.constant 46 : index
    %c0_22 = arith.constant 0 : index
    %101 = vector.load %arg1[%c46, %c0_22] : memref<72x144xf32, #tpu.memory_space<vmem>>, vector<8x144xf32>
    %c55 = arith.constant 55 : index
    %c0_23 = arith.constant 0 : index
    %102 = vector.load %arg1[%c55, %c0_23] : memref<72x144xf32, #tpu.memory_space<vmem>>, vector<8x144xf32>
    %c64 = arith.constant 64 : index
    %c0_24 = arith.constant 0 : index
    %103 = vector.load %arg1[%c64, %c0_24] : memref<72x144xf32, #tpu.memory_space<vmem>>, vector<8x144xf32>
    %104 = vector.extract_strided_slice %96 {offsets = [0, 0], sizes = [8, 32], strides = [1, 1]} : vector<8x144xf32> to vector<8x32xf32>
    %105 = vector.extract_strided_slice %97 {offsets = [0, 0], sizes = [8, 32], strides = [1, 1]} : vector<8x144xf32> to vector<8x32xf32>
    %106 = vector.extract_strided_slice %98 {offsets = [0, 0], sizes = [8, 32], strides = [1, 1]} : vector<8x144xf32> to vector<8x32xf32>
    %107 = vector.extract_strided_slice %99 {offsets = [0, 0], sizes = [8, 32], strides = [1, 1]} : vector<8x144xf32> to vector<8x32xf32>
    %108 = vector.extract_strided_slice %100 {offsets = [0, 0], sizes = [8, 32], strides = [1, 1]} : vector<8x144xf32> to vector<8x32xf32>
    %109 = vector.extract_strided_slice %101 {offsets = [0, 0], sizes = [8, 32], strides = [1, 1]} : vector<8x144xf32> to vector<8x32xf32>
    %110 = vector.extract_strided_slice %102 {offsets = [0, 0], sizes = [8, 32], strides = [1, 1]} : vector<8x144xf32> to vector<8x32xf32>
    %111 = vector.extract_strided_slice %103 {offsets = [0, 0], sizes = [8, 32], strides = [1, 1]} : vector<8x144xf32> to vector<8x32xf32>
    %112 = tpu.concatenate %104, %105, %106, %107, %108, %109, %110, %111 in 1 : vector<8x32xf32>, vector<8x32xf32>, vector<8x32xf32>, vector<8x32xf32>, vector<8x32xf32>, vector<8x32xf32>, vector<8x32xf32>, vector<8x32xf32> -> vector<8x256xf32>
    %113 = arith.truncf %112 : vector<8x256xf32> to vector<8x256xbf16>
    %c64_25 = arith.constant 64 : index
    %c0_26 = arith.constant 0 : index
    %114 = vector.load %arg13[%c64_25, %c0_26] : memref<128x256xbf16, #tpu.memory_space<vmem>>, vector<8x256xbf16>
    tpu.vector_store %arg13[%c64_25, %c0_26], %113 {strides = array<i32>} : memref<128x256xbf16, #tpu.memory_space<vmem>>, vector<8x256xbf16>,
    %115 = vector.extract_strided_slice %96 {offsets = [0, 16], sizes = [8, 32], strides = [1, 1]} : vector<8x144xf32> to vector<8x32xf32>
    %116 = vector.extract_strided_slice %97 {offsets = [0, 16], sizes = [8, 32], strides = [1, 1]} : vector<8x144xf32> to vector<8x32xf32>
    %117 = vector.extract_strided_slice %98 {offsets = [0, 16], sizes = [8, 32], strides = [1, 1]} : vector<8x144xf32> to vector<8x32xf32>
    %118 = vector.extract_strided_slice %99 {offsets = [0, 16], sizes = [8, 32], strides = [1, 1]} : vector<8x144xf32> to vector<8x32xf32>
    %119 = vector.extract_strided_slice %100 {offsets = [0, 16], sizes = [8, 32], strides = [1, 1]} : vector<8x144xf32> to vector<8x32xf32>
    %120 = vector.extract_strided_slice %101 {offsets = [0, 16], sizes = [8, 32], strides = [1, 1]} : vector<8x144xf32> to vector<8x32xf32>
    %121 = vector.extract_strided_slice %102 {offsets = [0, 16], sizes = [8, 32], strides = [1, 1]} : vector<8x144xf32> to vector<8x32xf32>
    %122 = vector.extract_strided_slice %103 {offsets = [0, 16], sizes = [8, 32], strides = [1, 1]} : vector<8x144xf32> to vector<8x32xf32>
    %123 = tpu.concatenate %115, %116, %117, %118, %119, %120, %121, %122 in 1 : vector<8x32xf32>, vector<8x32xf32>, vector<8x32xf32>, vector<8x32xf32>, vector<8x32xf32>, vector<8x32xf32>, vector<8x32xf32>, vector<8x32xf32> -> vector<8x256xf32>
    %124 = arith.truncf %123 : vector<8x256xf32> to vector<8x256xbf16>
    %c72 = arith.constant 72 : index
    %c0_27 = arith.constant 0 : index
    %125 = vector.load %arg13[%c72, %c0_27] : memref<128x256xbf16, #tpu.memory_space<vmem>>, vector<8x256xbf16>
    tpu.vector_store %arg13[%c72, %c0_27], %124 {strides = array<i32>} : memref<128x256xbf16, #tpu.memory_space<vmem>>, vector<8x256xbf16>,
    %126 = vector.extract_strided_slice %96 {offsets = [0, 32], sizes = [8, 32], strides = [1, 1]} : vector<8x144xf32> to vector<8x32xf32>
    %127 = vector.extract_strided_slice %97 {offsets = [0, 32], sizes = [8, 32], strides = [1, 1]} : vector<8x144xf32> to vector<8x32xf32>
    %128 = vector.extract_strided_slice %98 {offsets = [0, 32], sizes = [8, 32], strides = [1, 1]} : vector<8x144xf32> to vector<8x32xf32>
    %129 = vector.extract_strided_slice %99 {offsets = [0, 32], sizes = [8, 32], strides = [1, 1]} : vector<8x144xf32> to vector<8x32xf32>
    %130 = vector.extract_strided_slice %100 {offsets = [0, 32], sizes = [8, 32], strides = [1, 1]} : vector<8x144xf32> to vector<8x32xf32>
    %131 = vector.extract_strided_slice %101 {offsets = [0, 32], sizes = [8, 32], strides = [1, 1]} : vector<8x144xf32> to vector<8x32xf32>
    %132 = vector.extract_strided_slice %102 {offsets = [0, 32], sizes = [8, 32], strides = [1, 1]} : vector<8x144xf32> to vector<8x32xf32>
    %133 = vector.extract_strided_slice %103 {offsets = [0, 32], sizes = [8, 32], strides = [1, 1]} : vector<8x144xf32> to vector<8x32xf32>
    %134 = tpu.concatenate %126, %127, %128, %129, %130, %131, %132, %133 in 1 : vector<8x32xf32>, vector<8x32xf32>, vector<8x32xf32>, vector<8x32xf32>, vector<8x32xf32>, vector<8x32xf32>, vector<8x32xf32>, vector<8x32xf32> -> vector<8x256xf32>
    %135 = arith.truncf %134 : vector<8x256xf32> to vector<8x256xbf16>
    %c80 = arith.constant 80 : index
    %c0_28 = arith.constant 0 : index
    %136 = vector.load %arg13[%c80, %c0_28] : memref<128x256xbf16, #tpu.memory_space<vmem>>, vector<8x256xbf16>
    tpu.vector_store %arg13[%c80, %c0_28], %135 {strides = array<i32>} : memref<128x256xbf16, #tpu.memory_space<vmem>>, vector<8x256xbf16>,
    %137 = vector.extract_strided_slice %96 {offsets = [0, 48], sizes = [8, 32], strides = [1, 1]} : vector<8x144xf32> to vector<8x32xf32>
    %138 = vector.extract_strided_slice %97 {offsets = [0, 48], sizes = [8, 32], strides = [1, 1]} : vector<8x144xf32> to vector<8x32xf32>
    %139 = vector.extract_strided_slice %98 {offsets = [0, 48], sizes = [8, 32], strides = [1, 1]} : vector<8x144xf32> to vector<8x32xf32>
    %140 = vector.extract_strided_slice %99 {offsets = [0, 48], sizes = [8, 32], strides = [1, 1]} : vector<8x144xf32> to vector<8x32xf32>
    %141 = vector.extract_strided_slice %100 {offsets = [0, 48], sizes = [8, 32], strides = [1, 1]} : vector<8x144xf32> to vector<8x32xf32>
    %142 = vector.extract_strided_slice %101 {offsets = [0, 48], sizes = [8, 32], strides = [1, 1]} : vector<8x144xf32> to vector<8x32xf32>
    %143 = vector.extract_strided_slice %102 {offsets = [0, 48], sizes = [8, 32], strides = [1, 1]} : vector<8x144xf32> to vector<8x32xf32>
    %144 = vector.extract_strided_slice %103 {offsets = [0, 48], sizes = [8, 32], strides = [1, 1]} : vector<8x144xf32> to vector<8x32xf32>
    %145 = tpu.concatenate %137, %138, %139, %140, %141, %142, %143, %144 in 1 : vector<8x32xf32>, vector<8x32xf32>, vector<8x32xf32>, vector<8x32xf32>, vector<8x32xf32>, vector<8x32xf32>, vector<8x32xf32>, vector<8x32xf32> -> vector<8x256xf32>
    %146 = arith.truncf %145 : vector<8x256xf32> to vector<8x256xbf16>
    %c88 = arith.constant 88 : index
    %c0_29 = arith.constant 0 : index
    %147 = vector.load %arg13[%c88, %c0_29] : memref<128x256xbf16, #tpu.memory_space<vmem>>, vector<8x256xbf16>
    tpu.vector_store %arg13[%c88, %c0_29], %146 {strides = array<i32>} : memref<128x256xbf16, #tpu.memory_space<vmem>>, vector<8x256xbf16>,
    %148 = vector.extract_strided_slice %96 {offsets = [0, 64], sizes = [8, 32], strides = [1, 1]} : vector<8x144xf32> to vector<8x32xf32>
    %149 = vector.extract_strided_slice %97 {offsets = [0, 64], sizes = [8, 32], strides = [1, 1]} : vector<8x144xf32> to vector<8x32xf32>
    %150 = vector.extract_strided_slice %98 {offsets = [0, 64], sizes = [8, 32], strides = [1, 1]} : vector<8x144xf32> to vector<8x32xf32>
    %151 = vector.extract_strided_slice %99 {offsets = [0, 64], sizes = [8, 32], strides = [1, 1]} : vector<8x144xf32> to vector<8x32xf32>
    %152 = vector.extract_strided_slice %100 {offsets = [0, 64], sizes = [8, 32], strides = [1, 1]} : vector<8x144xf32> to vector<8x32xf32>
    %153 = vector.extract_strided_slice %101 {offsets = [0, 64], sizes = [8, 32], strides = [1, 1]} : vector<8x144xf32> to vector<8x32xf32>
    %154 = vector.extract_strided_slice %102 {offsets = [0, 64], sizes = [8, 32], strides = [1, 1]} : vector<8x144xf32> to vector<8x32xf32>
    %155 = vector.extract_strided_slice %103 {offsets = [0, 64], sizes = [8, 32], strides = [1, 1]} : vector<8x144xf32> to vector<8x32xf32>
    %156 = tpu.concatenate %148, %149, %150, %151, %152, %153, %154, %155 in 1 : vector<8x32xf32>, vector<8x32xf32>, vector<8x32xf32>, vector<8x32xf32>, vector<8x32xf32>, vector<8x32xf32>, vector<8x32xf32>, vector<8x32xf32> -> vector<8x256xf32>
    %157 = arith.truncf %156 : vector<8x256xf32> to vector<8x256xbf16>
    %c96 = arith.constant 96 : index
    %c0_30 = arith.constant 0 : index
    %158 = vector.load %arg13[%c96, %c0_30] : memref<128x256xbf16, #tpu.memory_space<vmem>>, vector<8x256xbf16>
    tpu.vector_store %arg13[%c96, %c0_30], %157 {strides = array<i32>} : memref<128x256xbf16, #tpu.memory_space<vmem>>, vector<8x256xbf16>,
    %159 = vector.extract_strided_slice %96 {offsets = [0, 80], sizes = [8, 32], strides = [1, 1]} : vector<8x144xf32> to vector<8x32xf32>
    %160 = vector.extract_strided_slice %97 {offsets = [0, 80], sizes = [8, 32], strides = [1, 1]} : vector<8x144xf32> to vector<8x32xf32>
    %161 = vector.extract_strided_slice %98 {offsets = [0, 80], sizes = [8, 32], strides = [1, 1]} : vector<8x144xf32> to vector<8x32xf32>
    %162 = vector.extract_strided_slice %99 {offsets = [0, 80], sizes = [8, 32], strides = [1, 1]} : vector<8x144xf32> to vector<8x32xf32>
    %163 = vector.extract_strided_slice %100 {offsets = [0, 80], sizes = [8, 32], strides = [1, 1]} : vector<8x144xf32> to vector<8x32xf32>
    %164 = vector.extract_strided_slice %101 {offsets = [0, 80], sizes = [8, 32], strides = [1, 1]} : vector<8x144xf32> to vector<8x32xf32>
    %165 = vector.extract_strided_slice %102 {offsets = [0, 80], sizes = [8, 32], strides = [1, 1]} : vector<8x144xf32> to vector<8x32xf32>
    %166 = vector.extract_strided_slice %103 {offsets = [0, 80], sizes = [8, 32], strides = [1, 1]} : vector<8x144xf32> to vector<8x32xf32>
    %167 = tpu.concatenate %159, %160, %161, %162, %163, %164, %165, %166 in 1 : vector<8x32xf32>, vector<8x32xf32>, vector<8x32xf32>, vector<8x32xf32>, vector<8x32xf32>, vector<8x32xf32>, vector<8x32xf32>, vector<8x32xf32> -> vector<8x256xf32>
    %168 = arith.truncf %167 : vector<8x256xf32> to vector<8x256xbf16>
    %c104 = arith.constant 104 : index
    %c0_31 = arith.constant 0 : index
    %169 = vector.load %arg13[%c104, %c0_31] : memref<128x256xbf16, #tpu.memory_space<vmem>>, vector<8x256xbf16>
    tpu.vector_store %arg13[%c104, %c0_31], %168 {strides = array<i32>} : memref<128x256xbf16, #tpu.memory_space<vmem>>, vector<8x256xbf16>,
    %170 = vector.extract_strided_slice %96 {offsets = [0, 96], sizes = [8, 32], strides = [1, 1]} : vector<8x144xf32> to vector<8x32xf32>
    %171 = vector.extract_strided_slice %97 {offsets = [0, 96], sizes = [8, 32], strides = [1, 1]} : vector<8x144xf32> to vector<8x32xf32>
    %172 = vector.extract_strided_slice %98 {offsets = [0, 96], sizes = [8, 32], strides = [1, 1]} : vector<8x144xf32> to vector<8x32xf32>
    %173 = vector.extract_strided_slice %99 {offsets = [0, 96], sizes = [8, 32], strides = [1, 1]} : vector<8x144xf32> to vector<8x32xf32>
    %174 = vector.extract_strided_slice %100 {offsets = [0, 96], sizes = [8, 32], strides = [1, 1]} : vector<8x144xf32> to vector<8x32xf32>
    %175 = vector.extract_strided_slice %101 {offsets = [0, 96], sizes = [8, 32], strides = [1, 1]} : vector<8x144xf32> to vector<8x32xf32>
    %176 = vector.extract_strided_slice %102 {offsets = [0, 96], sizes = [8, 32], strides = [1, 1]} : vector<8x144xf32> to vector<8x32xf32>
    %177 = vector.extract_strided_slice %103 {offsets = [0, 96], sizes = [8, 32], strides = [1, 1]} : vector<8x144xf32> to vector<8x32xf32>
    %178 = tpu.concatenate %170, %171, %172, %173, %174, %175, %176, %177 in 1 : vector<8x32xf32>, vector<8x32xf32>, vector<8x32xf32>, vector<8x32xf32>, vector<8x32xf32>, vector<8x32xf32>, vector<8x32xf32>, vector<8x32xf32> -> vector<8x256xf32>
    %179 = arith.truncf %178 : vector<8x256xf32> to vector<8x256xbf16>
    %c112 = arith.constant 112 : index
    %c0_32 = arith.constant 0 : index
    %180 = vector.load %arg13[%c112, %c0_32] : memref<128x256xbf16, #tpu.memory_space<vmem>>, vector<8x256xbf16>
    tpu.vector_store %arg13[%c112, %c0_32], %179 {strides = array<i32>} : memref<128x256xbf16, #tpu.memory_space<vmem>>, vector<8x256xbf16>,
    %181 = vector.extract_strided_slice %96 {offsets = [0, 112], sizes = [8, 32], strides = [1, 1]} : vector<8x144xf32> to vector<8x32xf32>
    %182 = vector.extract_strided_slice %97 {offsets = [0, 112], sizes = [8, 32], strides = [1, 1]} : vector<8x144xf32> to vector<8x32xf32>
    %183 = vector.extract_strided_slice %98 {offsets = [0, 112], sizes = [8, 32], strides = [1, 1]} : vector<8x144xf32> to vector<8x32xf32>
    %184 = vector.extract_strided_slice %99 {offsets = [0, 112], sizes = [8, 32], strides = [1, 1]} : vector<8x144xf32> to vector<8x32xf32>
    %185 = vector.extract_strided_slice %100 {offsets = [0, 112], sizes = [8, 32], strides = [1, 1]} : vector<8x144xf32> to vector<8x32xf32>
    %186 = vector.extract_strided_slice %101 {offsets = [0, 112], sizes = [8, 32], strides = [1, 1]} : vector<8x144xf32> to vector<8x32xf32>
    %187 = vector.extract_strided_slice %102 {offsets = [0, 112], sizes = [8, 32], strides = [1, 1]} : vector<8x144xf32> to vector<8x32xf32>
    %188 = vector.extract_strided_slice %103 {offsets = [0, 112], sizes = [8, 32], strides = [1, 1]} : vector<8x144xf32> to vector<8x32xf32>
    %189 = tpu.concatenate %181, %182, %183, %184, %185, %186, %187, %188 in 1 : vector<8x32xf32>, vector<8x32xf32>, vector<8x32xf32>, vector<8x32xf32>, vector<8x32xf32>, vector<8x32xf32>, vector<8x32xf32>, vector<8x32xf32> -> vector<8x256xf32>
    %190 = arith.truncf %189 : vector<8x256xf32> to vector<8x256xbf16>
    %c120 = arith.constant 120 : index
    %c0_33 = arith.constant 0 : index
    %191 = vector.load %arg13[%c120, %c0_33] : memref<128x256xbf16, #tpu.memory_space<vmem>>, vector<8x256xbf16>
    tpu.vector_store %arg13[%c120, %c0_33], %190 {strides = array<i32>} : memref<128x256xbf16, #tpu.memory_space<vmem>>, vector<8x256xbf16>,
    %c0_34 = arith.constant 0 : index
    %c0_35 = arith.constant 0 : index
    %192 = vector.load %arg13[%c0_34, %c0_35] : memref<128x256xbf16, #tpu.memory_space<vmem>>, vector<128x256xbf16>
    %c0_36 = arith.constant 0 : index
    %c0_37 = arith.constant 0 : index
    %193 = vector.load %arg2[%c0_36, %c0_37] : memref<256x32xbf16, #tpu.memory_space<vmem>>, vector<256x32xbf16>
    %cst = arith.constant dense<0.000000e+00> : vector<128x32xf32>
    %194 = tpu.matmul %192, %193, %cst {dimension_numbers = #tpu.dot_dimension_numbers<[1], [0], [0], [1], [0, 0, 1, 1], [], []>} : vector<128x256xbf16>, vector<256x32xbf16>, vector<128x32xf32> -> vector<128x32xf32>
    %c0_38 = arith.constant 0 : index
    %c0_39 = arith.constant 0 : index
    %195 = vector.load %arg3[%c0_38, %c0_39] : memref<1x32xf32, #tpu.memory_space<vmem>>, vector<1x32xf32>
    %196 = vector.broadcast %195 : vector<1x32xf32> to vector<128x32xf32>
    %197 = arith.addf %194, %196 : vector<128x32xf32>
    %cst_40 = arith.constant 0.000000e+00 : f32
    %198 = vector.broadcast %cst_40 : f32 to vector<128x32xf32>
    %199 = arith.maximumf %197, %198 : vector<128x32xf32>
    %c0_41 = arith.constant 0 : index
    %c0_42 = arith.constant 0 : index
    %200 = vector.load %arg14[%c0_41, %c0_42] : memref<128x32xf32, #tpu.memory_space<vmem>>, vector<128x32xf32>
    tpu.vector_store %arg14[%c0_41, %c0_42], %199 {strides = array<i32>} : memref<128x32xf32, #tpu.memory_space<vmem>>, vector<128x32xf32>,
    %c0_43 = arith.constant 0 : index
    %c0_44 = arith.constant 0 : index
    %201 = tpu.strided_load %arg14[%c0_43, %c0_44] {strides = array<i32: 2, 1>} : memref<128x32xf32, #tpu.memory_space<vmem>>, vector<3x32xf32>
    %c1_45 = arith.constant 1 : index
    %c0_46 = arith.constant 0 : index
    %202 = tpu.strided_load %arg14[%c1_45, %c0_46] {strides = array<i32: 2, 1>} : memref<128x32xf32, #tpu.memory_space<vmem>>, vector<3x32xf32>
    %c2 = arith.constant 2 : index
    %c0_47 = arith.constant 0 : index
    %203 = tpu.strided_load %arg14[%c2, %c0_47] {strides = array<i32: 2, 1>} : memref<128x32xf32, #tpu.memory_space<vmem>>, vector<3x32xf32>
    %c3 = arith.constant 3 : index
    %c0_48 = arith.constant 0 : index
    %204 = tpu.strided_load %arg14[%c3, %c0_48] {strides = array<i32: 2, 1>} : memref<128x32xf32, #tpu.memory_space<vmem>>, vector<3x32xf32>
    %c8_49 = arith.constant 8 : index
    %c0_50 = arith.constant 0 : index
    %205 = tpu.strided_load %arg14[%c8_49, %c0_50] {strides = array<i32: 2, 1>} : memref<128x32xf32, #tpu.memory_space<vmem>>, vector<3x32xf32>
    %c9_51 = arith.constant 9 : index
    %c0_52 = arith.constant 0 : index
    %206 = tpu.strided_load %arg14[%c9_51, %c0_52] {strides = array<i32: 2, 1>} : memref<128x32xf32, #tpu.memory_space<vmem>>, vector<3x32xf32>
    %c10_53 = arith.constant 10 : index
    %c0_54 = arith.constant 0 : index
    %207 = tpu.strided_load %arg14[%c10_53, %c0_54] {strides = array<i32: 2, 1>} : memref<128x32xf32, #tpu.memory_space<vmem>>, vector<3x32xf32>
    %c11 = arith.constant 11 : index
    %c0_55 = arith.constant 0 : index
    %208 = tpu.strided_load %arg14[%c11, %c0_55] {strides = array<i32: 2, 1>} : memref<128x32xf32, #tpu.memory_space<vmem>>, vector<3x32xf32>
    %c16_56 = arith.constant 16 : index
    %c0_57 = arith.constant 0 : index
    %209 = tpu.strided_load %arg14[%c16_56, %c0_57] {strides = array<i32: 2, 1>} : memref<128x32xf32, #tpu.memory_space<vmem>>, vector<3x32xf32>
    %c17 = arith.constant 17 : index
    %c0_58 = arith.constant 0 : index
    %210 = tpu.strided_load %arg14[%c17, %c0_58] {strides = array<i32: 2, 1>} : memref<128x32xf32, #tpu.memory_space<vmem>>, vector<3x32xf32>
    %c18_59 = arith.constant 18 : index
    %c0_60 = arith.constant 0 : index
    %211 = tpu.strided_load %arg14[%c18_59, %c0_60] {strides = array<i32: 2, 1>} : memref<128x32xf32, #tpu.memory_space<vmem>>, vector<3x32xf32>
    %c19_61 = arith.constant 19 : index
    %c0_62 = arith.constant 0 : index
    %212 = tpu.strided_load %arg14[%c19_61, %c0_62] {strides = array<i32: 2, 1>} : memref<128x32xf32, #tpu.memory_space<vmem>>, vector<3x32xf32>
    %c24_63 = arith.constant 24 : index
    %c0_64 = arith.constant 0 : index
    %213 = tpu.strided_load %arg14[%c24_63, %c0_64] {strides = array<i32: 2, 1>} : memref<128x32xf32, #tpu.memory_space<vmem>>, vector<3x32xf32>
    %c25 = arith.constant 25 : index
    %c0_65 = arith.constant 0 : index
    %214 = tpu.strided_load %arg14[%c25, %c0_65] {strides = array<i32: 2, 1>} : memref<128x32xf32, #tpu.memory_space<vmem>>, vector<3x32xf32>
    %c26 = arith.constant 26 : index
    %c0_66 = arith.constant 0 : index
    %215 = tpu.strided_load %arg14[%c26, %c0_66] {strides = array<i32: 2, 1>} : memref<128x32xf32, #tpu.memory_space<vmem>>, vector<3x32xf32>
    %c27_67 = arith.constant 27 : index
    %c0_68 = arith.constant 0 : index
    %216 = tpu.strided_load %arg14[%c27_67, %c0_68] {strides = array<i32: 2, 1>} : memref<128x32xf32, #tpu.memory_space<vmem>>, vector<3x32xf32>
    %217 = tpu.concatenate %201, %202, %203, %204, %205, %206, %207, %208, %209, %210, %211, %212, %213, %214, %215, %216 in 1 : vector<3x32xf32>, vector<3x32xf32>, vector<3x32xf32>, vector<3x32xf32>, vector<3x32xf32>, vector<3x32xf32>, vector<3x32xf32>, vector<3x32xf32>, vector<3x32xf32>, vector<3x32xf32>, vector<3x32xf32>, vector<3x32xf32>, vector<3x32xf32>, vector<3x32xf32>, vector<3x32xf32>, vector<3x32xf32> -> vector<3x512xf32>
    %c0_69 = arith.constant 0 : index
    %c0_70 = arith.constant 0 : index
    %218 = vector.load %arg15[%c0_69, %c0_70] : memref<18x512xf32, #tpu.memory_space<vmem>>, vector<3x512xf32>
    tpu.vector_store %arg15[%c0_69, %c0_70], %217 {strides = array<i32>} : memref<18x512xf32, #tpu.memory_space<vmem>>, vector<3x512xf32>,
    %c16_71 = arith.constant 16 : index
    %c0_72 = arith.constant 0 : index
    %219 = tpu.strided_load %arg14[%c16_71, %c0_72] {strides = array<i32: 2, 1>} : memref<128x32xf32, #tpu.memory_space<vmem>>, vector<3x32xf32>
    %c17_73 = arith.constant 17 : index
    %c0_74 = arith.constant 0 : index
    %220 = tpu.strided_load %arg14[%c17_73, %c0_74] {strides = array<i32: 2, 1>} : memref<128x32xf32, #tpu.memory_space<vmem>>, vector<3x32xf32>
    %c18_75 = arith.constant 18 : index
    %c0_76 = arith.constant 0 : index
    %221 = tpu.strided_load %arg14[%c18_75, %c0_76] {strides = array<i32: 2, 1>} : memref<128x32xf32, #tpu.memory_space<vmem>>, vector<3x32xf32>
    %c19_77 = arith.constant 19 : index
    %c0_78 = arith.constant 0 : index
    %222 = tpu.strided_load %arg14[%c19_77, %c0_78] {strides = array<i32: 2, 1>} : memref<128x32xf32, #tpu.memory_space<vmem>>, vector<3x32xf32>
    %c24_79 = arith.constant 24 : index
    %c0_80 = arith.constant 0 : index
    %223 = tpu.strided_load %arg14[%c24_79, %c0_80] {strides = array<i32: 2, 1>} : memref<128x32xf32, #tpu.memory_space<vmem>>, vector<3x32xf32>
    %c25_81 = arith.constant 25 : index
    %c0_82 = arith.constant 0 : index
    %224 = tpu.strided_load %arg14[%c25_81, %c0_82] {strides = array<i32: 2, 1>} : memref<128x32xf32, #tpu.memory_space<vmem>>, vector<3x32xf32>
    %c26_83 = arith.constant 26 : index
    %c0_84 = arith.constant 0 : index
    %225 = tpu.strided_load %arg14[%c26_83, %c0_84] {strides = array<i32: 2, 1>} : memref<128x32xf32, #tpu.memory_space<vmem>>, vector<3x32xf32>
    %c27_85 = arith.constant 27 : index
    %c0_86 = arith.constant 0 : index
    %226 = tpu.strided_load %arg14[%c27_85, %c0_86] {strides = array<i32: 2, 1>} : memref<128x32xf32, #tpu.memory_space<vmem>>, vector<3x32xf32>
    %c32_87 = arith.constant 32 : index
    %c0_88 = arith.constant 0 : index
    %227 = tpu.strided_load %arg14[%c32_87, %c0_88] {strides = array<i32: 2, 1>} : memref<128x32xf32, #tpu.memory_space<vmem>>, vector<3x32xf32>
    %c33 = arith.constant 33 : index
    %c0_89 = arith.constant 0 : index
    %228 = tpu.strided_load %arg14[%c33, %c0_89] {strides = array<i32: 2, 1>} : memref<128x32xf32, #tpu.memory_space<vmem>>, vector<3x32xf32>
    %c34 = arith.constant 34 : index
    %c0_90 = arith.constant 0 : index
    %229 = tpu.strided_load %arg14[%c34, %c0_90] {strides = array<i32: 2, 1>} : memref<128x32xf32, #tpu.memory_space<vmem>>, vector<3x32xf32>
    %c35 = arith.constant 35 : index
    %c0_91 = arith.constant 0 : index
    %230 = tpu.strided_load %arg14[%c35, %c0_91] {strides = array<i32: 2, 1>} : memref<128x32xf32, #tpu.memory_space<vmem>>, vector<3x32xf32>
    %c40_92 = arith.constant 40 : index
    %c0_93 = arith.constant 0 : index
    %231 = tpu.strided_load %arg14[%c40_92, %c0_93] {strides = array<i32: 2, 1>} : memref<128x32xf32, #tpu.memory_space<vmem>>, vector<3x32xf32>
    %c41 = arith.constant 41 : index
    %c0_94 = arith.constant 0 : index
    %232 = tpu.strided_load %arg14[%c41, %c0_94] {strides = array<i32: 2, 1>} : memref<128x32xf32, #tpu.memory_space<vmem>>, vector<3x32xf32>
    %c42 = arith.constant 42 : index
    %c0_95 = arith.constant 0 : index
    %233 = tpu.strided_load %arg14[%c42, %c0_95] {strides = array<i32: 2, 1>} : memref<128x32xf32, #tpu.memory_space<vmem>>, vector<3x32xf32>
    %c43 = arith.constant 43 : index
    %c0_96 = arith.constant 0 : index
    %234 = tpu.strided_load %arg14[%c43, %c0_96] {strides = array<i32: 2, 1>} : memref<128x32xf32, #tpu.memory_space<vmem>>, vector<3x32xf32>
    %235 = tpu.concatenate %219, %220, %221, %222, %223, %224, %225, %226, %227, %228, %229, %230, %231, %232, %233, %234 in 1 : vector<3x32xf32>, vector<3x32xf32>, vector<3x32xf32>, vector<3x32xf32>, vector<3x32xf32>, vector<3x32xf32>, vector<3x32xf32>, vector<3x32xf32>, vector<3x32xf32>, vector<3x32xf32>, vector<3x32xf32>, vector<3x32xf32>, vector<3x32xf32>, vector<3x32xf32>, vector<3x32xf32>, vector<3x32xf32> -> vector<3x512xf32>
    %c3_97 = arith.constant 3 : index
    %c0_98 = arith.constant 0 : index
    %236 = vector.load %arg15[%c3_97, %c0_98] : memref<18x512xf32, #tpu.memory_space<vmem>>, vector<3x512xf32>
    tpu.vector_store %arg15[%c3_97, %c0_98], %235 {strides = array<i32>} : memref<18x512xf32, #tpu.memory_space<vmem>>, vector<3x512xf32>,
    %c32_99 = arith.constant 32 : index
    %c0_100 = arith.constant 0 : index
    %237 = tpu.strided_load %arg14[%c32_99, %c0_100] {strides = array<i32: 2, 1>} : memref<128x32xf32, #tpu.memory_space<vmem>>, vector<3x32xf32>
    %c33_101 = arith.constant 33 : index
    %c0_102 = arith.constant 0 : index
    %238 = tpu.strided_load %arg14[%c33_101, %c0_102] {strides = array<i32: 2, 1>} : memref<128x32xf32, #tpu.memory_space<vmem>>, vector<3x32xf32>
    %c34_103 = arith.constant 34 : index
    %c0_104 = arith.constant 0 : index
    %239 = tpu.strided_load %arg14[%c34_103, %c0_104] {strides = array<i32: 2, 1>} : memref<128x32xf32, #tpu.memory_space<vmem>>, vector<3x32xf32>
    %c35_105 = arith.constant 35 : index
    %c0_106 = arith.constant 0 : index
    %240 = tpu.strided_load %arg14[%c35_105, %c0_106] {strides = array<i32: 2, 1>} : memref<128x32xf32, #tpu.memory_space<vmem>>, vector<3x32xf32>
    %c40_107 = arith.constant 40 : index
    %c0_108 = arith.constant 0 : index
    %241 = tpu.strided_load %arg14[%c40_107, %c0_108] {strides = array<i32: 2, 1>} : memref<128x32xf32, #tpu.memory_space<vmem>>, vector<3x32xf32>
    %c41_109 = arith.constant 41 : index
    %c0_110 = arith.constant 0 : index
    %242 = tpu.strided_load %arg14[%c41_109, %c0_110] {strides = array<i32: 2, 1>} : memref<128x32xf32, #tpu.memory_space<vmem>>, vector<3x32xf32>
    %c42_111 = arith.constant 42 : index
    %c0_112 = arith.constant 0 : index
    %243 = tpu.strided_load %arg14[%c42_111, %c0_112] {strides = array<i32: 2, 1>} : memref<128x32xf32, #tpu.memory_space<vmem>>, vector<3x32xf32>
    %c43_113 = arith.constant 43 : index
    %c0_114 = arith.constant 0 : index
    %244 = tpu.strided_load %arg14[%c43_113, %c0_114] {strides = array<i32: 2, 1>} : memref<128x32xf32, #tpu.memory_space<vmem>>, vector<3x32xf32>
    %c48_115 = arith.constant 48 : index
    %c0_116 = arith.constant 0 : index
    %245 = tpu.strided_load %arg14[%c48_115, %c0_116] {strides = array<i32: 2, 1>} : memref<128x32xf32, #tpu.memory_space<vmem>>, vector<3x32xf32>
    %c49 = arith.constant 49 : index
    %c0_117 = arith.constant 0 : index
    %246 = tpu.strided_load %arg14[%c49, %c0_117] {strides = array<i32: 2, 1>} : memref<128x32xf32, #tpu.memory_space<vmem>>, vector<3x32xf32>
    %c50 = arith.constant 50 : index
    %c0_118 = arith.constant 0 : index
    %247 = tpu.strided_load %arg14[%c50, %c0_118] {strides = array<i32: 2, 1>} : memref<128x32xf32, #tpu.memory_space<vmem>>, vector<3x32xf32>
    %c51 = arith.constant 51 : index
    %c0_119 = arith.constant 0 : index
    %248 = tpu.strided_load %arg14[%c51, %c0_119] {strides = array<i32: 2, 1>} : memref<128x32xf32, #tpu.memory_space<vmem>>, vector<3x32xf32>
    %c56_120 = arith.constant 56 : index
    %c0_121 = arith.constant 0 : index
    %249 = tpu.strided_load %arg14[%c56_120, %c0_121] {strides = array<i32: 2, 1>} : memref<128x32xf32, #tpu.memory_space<vmem>>, vector<3x32xf32>
    %c57 = arith.constant 57 : index
    %c0_122 = arith.constant 0 : index
    %250 = tpu.strided_load %arg14[%c57, %c0_122] {strides = array<i32: 2, 1>} : memref<128x32xf32, #tpu.memory_space<vmem>>, vector<3x32xf32>
    %c58 = arith.constant 58 : index
    %c0_123 = arith.constant 0 : index
    %251 = tpu.strided_load %arg14[%c58, %c0_123] {strides = array<i32: 2, 1>} : memref<128x32xf32, #tpu.memory_space<vmem>>, vector<3x32xf32>
    %c59 = arith.constant 59 : index
    %c0_124 = arith.constant 0 : index
    %252 = tpu.strided_load %arg14[%c59, %c0_124] {strides = array<i32: 2, 1>} : memref<128x32xf32, #tpu.memory_space<vmem>>, vector<3x32xf32>
    %253 = tpu.concatenate %237, %238, %239, %240, %241, %242, %243, %244, %245, %246, %247, %248, %249, %250, %251, %252 in 1 : vector<3x32xf32>, vector<3x32xf32>, vector<3x32xf32>, vector<3x32xf32>, vector<3x32xf32>, vector<3x32xf32>, vector<3x32xf32>, vector<3x32xf32>, vector<3x32xf32>, vector<3x32xf32>, vector<3x32xf32>, vector<3x32xf32>, vector<3x32xf32>, vector<3x32xf32>, vector<3x32xf32>, vector<3x32xf32> -> vector<3x512xf32>
    %c6 = arith.constant 6 : index
    %c0_125 = arith.constant 0 : index
    %254 = vector.load %arg15[%c6, %c0_125] : memref<18x512xf32, #tpu.memory_space<vmem>>, vector<3x512xf32>
    tpu.vector_store %arg15[%c6, %c0_125], %253 {strides = array<i32>} : memref<18x512xf32, #tpu.memory_space<vmem>>, vector<3x512xf32>,
    %c64_126 = arith.constant 64 : index
    %c0_127 = arith.constant 0 : index
    %255 = tpu.strided_load %arg14[%c64_126, %c0_127] {strides = array<i32: 2, 1>} : memref<128x32xf32, #tpu.memory_space<vmem>>, vector<3x32xf32>
    %c65 = arith.constant 65 : index
    %c0_128 = arith.constant 0 : index
    %256 = tpu.strided_load %arg14[%c65, %c0_128] {strides = array<i32: 2, 1>} : memref<128x32xf32, #tpu.memory_space<vmem>>, vector<3x32xf32>
    %c66 = arith.constant 66 : index
    %c0_129 = arith.constant 0 : index
    %257 = tpu.strided_load %arg14[%c66, %c0_129] {strides = array<i32: 2, 1>} : memref<128x32xf32, #tpu.memory_space<vmem>>, vector<3x32xf32>
    %c67 = arith.constant 67 : index
    %c0_130 = arith.constant 0 : index
    %258 = tpu.strided_load %arg14[%c67, %c0_130] {strides = array<i32: 2, 1>} : memref<128x32xf32, #tpu.memory_space<vmem>>, vector<3x32xf32>
    %c72_131 = arith.constant 72 : index
    %c0_132 = arith.constant 0 : index
    %259 = tpu.strided_load %arg14[%c72_131, %c0_132] {strides = array<i32: 2, 1>} : memref<128x32xf32, #tpu.memory_space<vmem>>, vector<3x32xf32>
    %c73 = arith.constant 73 : index
    %c0_133 = arith.constant 0 : index
    %260 = tpu.strided_load %arg14[%c73, %c0_133] {strides = array<i32: 2, 1>} : memref<128x32xf32, #tpu.memory_space<vmem>>, vector<3x32xf32>
    %c74 = arith.constant 74 : index
    %c0_134 = arith.constant 0 : index
    %261 = tpu.strided_load %arg14[%c74, %c0_134] {strides = array<i32: 2, 1>} : memref<128x32xf32, #tpu.memory_space<vmem>>, vector<3x32xf32>
    %c75 = arith.constant 75 : index
    %c0_135 = arith.constant 0 : index
    %262 = tpu.strided_load %arg14[%c75, %c0_135] {strides = array<i32: 2, 1>} : memref<128x32xf32, #tpu.memory_space<vmem>>, vector<3x32xf32>
    %c80_136 = arith.constant 80 : index
    %c0_137 = arith.constant 0 : index
    %263 = tpu.strided_load %arg14[%c80_136, %c0_137] {strides = array<i32: 2, 1>} : memref<128x32xf32, #tpu.memory_space<vmem>>, vector<3x32xf32>
    %c81 = arith.constant 81 : index
    %c0_138 = arith.constant 0 : index
    %264 = tpu.strided_load %arg14[%c81, %c0_138] {strides = array<i32: 2, 1>} : memref<128x32xf32, #tpu.memory_space<vmem>>, vector<3x32xf32>
    %c82 = arith.constant 82 : index
    %c0_139 = arith.constant 0 : index
    %265 = tpu.strided_load %arg14[%c82, %c0_139] {strides = array<i32: 2, 1>} : memref<128x32xf32, #tpu.memory_space<vmem>>, vector<3x32xf32>
    %c83 = arith.constant 83 : index
    %c0_140 = arith.constant 0 : index
    %266 = tpu.strided_load %arg14[%c83, %c0_140] {strides = array<i32: 2, 1>} : memref<128x32xf32, #tpu.memory_space<vmem>>, vector<3x32xf32>
    %c88_141 = arith.constant 88 : index
    %c0_142 = arith.constant 0 : index
    %267 = tpu.strided_load %arg14[%c88_141, %c0_142] {strides = array<i32: 2, 1>} : memref<128x32xf32, #tpu.memory_space<vmem>>, vector<3x32xf32>
    %c89 = arith.constant 89 : index
    %c0_143 = arith.constant 0 : index
    %268 = tpu.strided_load %arg14[%c89, %c0_143] {strides = array<i32: 2, 1>} : memref<128x32xf32, #tpu.memory_space<vmem>>, vector<3x32xf32>
    %c90 = arith.constant 90 : index
    %c0_144 = arith.constant 0 : index
    %269 = tpu.strided_load %arg14[%c90, %c0_144] {strides = array<i32: 2, 1>} : memref<128x32xf32, #tpu.memory_space<vmem>>, vector<3x32xf32>
    %c91 = arith.constant 91 : index
    %c0_145 = arith.constant 0 : index
    %270 = tpu.strided_load %arg14[%c91, %c0_145] {strides = array<i32: 2, 1>} : memref<128x32xf32, #tpu.memory_space<vmem>>, vector<3x32xf32>
    %271 = tpu.concatenate %255, %256, %257, %258, %259, %260, %261, %262, %263, %264, %265, %266, %267, %268, %269, %270 in 1 : vector<3x32xf32>, vector<3x32xf32>, vector<3x32xf32>, vector<3x32xf32>, vector<3x32xf32>, vector<3x32xf32>, vector<3x32xf32>, vector<3x32xf32>, vector<3x32xf32>, vector<3x32xf32>, vector<3x32xf32>, vector<3x32xf32>, vector<3x32xf32>, vector<3x32xf32>, vector<3x32xf32>, vector<3x32xf32> -> vector<3x512xf32>
    %c9_146 = arith.constant 9 : index
    %c0_147 = arith.constant 0 : index
    %272 = vector.load %arg15[%c9_146, %c0_147] : memref<18x512xf32, #tpu.memory_space<vmem>>, vector<3x512xf32>
    tpu.vector_store %arg15[%c9_146, %c0_147], %271 {strides = array<i32>} : memref<18x512xf32, #tpu.memory_space<vmem>>, vector<3x512xf32>,
    %c80_148 = arith.constant 80 : index
    %c0_149 = arith.constant 0 : index
    %273 = tpu.strided_load %arg14[%c80_148, %c0_149] {strides = array<i32: 2, 1>} : memref<128x32xf32, #tpu.memory_space<vmem>>, vector<3x32xf32>
    %c81_150 = arith.constant 81 : index
    %c0_151 = arith.constant 0 : index
    %274 = tpu.strided_load %arg14[%c81_150, %c0_151] {strides = array<i32: 2, 1>} : memref<128x32xf32, #tpu.memory_space<vmem>>, vector<3x32xf32>
    %c82_152 = arith.constant 82 : index
    %c0_153 = arith.constant 0 : index
    %275 = tpu.strided_load %arg14[%c82_152, %c0_153] {strides = array<i32: 2, 1>} : memref<128x32xf32, #tpu.memory_space<vmem>>, vector<3x32xf32>
    %c83_154 = arith.constant 83 : index
    %c0_155 = arith.constant 0 : index
    %276 = tpu.strided_load %arg14[%c83_154, %c0_155] {strides = array<i32: 2, 1>} : memref<128x32xf32, #tpu.memory_space<vmem>>, vector<3x32xf32>
    %c88_156 = arith.constant 88 : index
    %c0_157 = arith.constant 0 : index
    %277 = tpu.strided_load %arg14[%c88_156, %c0_157] {strides = array<i32: 2, 1>} : memref<128x32xf32, #tpu.memory_space<vmem>>, vector<3x32xf32>
    %c89_158 = arith.constant 89 : index
    %c0_159 = arith.constant 0 : index
    %278 = tpu.strided_load %arg14[%c89_158, %c0_159] {strides = array<i32: 2, 1>} : memref<128x32xf32, #tpu.memory_space<vmem>>, vector<3x32xf32>
    %c90_160 = arith.constant 90 : index
    %c0_161 = arith.constant 0 : index
    %279 = tpu.strided_load %arg14[%c90_160, %c0_161] {strides = array<i32: 2, 1>} : memref<128x32xf32, #tpu.memory_space<vmem>>, vector<3x32xf32>
    %c91_162 = arith.constant 91 : index
    %c0_163 = arith.constant 0 : index
    %280 = tpu.strided_load %arg14[%c91_162, %c0_163] {strides = array<i32: 2, 1>} : memref<128x32xf32, #tpu.memory_space<vmem>>, vector<3x32xf32>
    %c96_164 = arith.constant 96 : index
    %c0_165 = arith.constant 0 : index
    %281 = tpu.strided_load %arg14[%c96_164, %c0_165] {strides = array<i32: 2, 1>} : memref<128x32xf32, #tpu.memory_space<vmem>>, vector<3x32xf32>
    %c97 = arith.constant 97 : index
    %c0_166 = arith.constant 0 : index
    %282 = tpu.strided_load %arg14[%c97, %c0_166] {strides = array<i32: 2, 1>} : memref<128x32xf32, #tpu.memory_space<vmem>>, vector<3x32xf32>
    %c98 = arith.constant 98 : index
    %c0_167 = arith.constant 0 : index
    %283 = tpu.strided_load %arg14[%c98, %c0_167] {strides = array<i32: 2, 1>} : memref<128x32xf32, #tpu.memory_space<vmem>>, vector<3x32xf32>
    %c99 = arith.constant 99 : index
    %c0_168 = arith.constant 0 : index
    %284 = tpu.strided_load %arg14[%c99, %c0_168] {strides = array<i32: 2, 1>} : memref<128x32xf32, #tpu.memory_space<vmem>>, vector<3x32xf32>
    %c104_169 = arith.constant 104 : index
    %c0_170 = arith.constant 0 : index
    %285 = tpu.strided_load %arg14[%c104_169, %c0_170] {strides = array<i32: 2, 1>} : memref<128x32xf32, #tpu.memory_space<vmem>>, vector<3x32xf32>
    %c105 = arith.constant 105 : index
    %c0_171 = arith.constant 0 : index
    %286 = tpu.strided_load %arg14[%c105, %c0_171] {strides = array<i32: 2, 1>} : memref<128x32xf32, #tpu.memory_space<vmem>>, vector<3x32xf32>
    %c106 = arith.constant 106 : index
    %c0_172 = arith.constant 0 : index
    %287 = tpu.strided_load %arg14[%c106, %c0_172] {strides = array<i32: 2, 1>} : memref<128x32xf32, #tpu.memory_space<vmem>>, vector<3x32xf32>
    %c107 = arith.constant 107 : index
    %c0_173 = arith.constant 0 : index
    %288 = tpu.strided_load %arg14[%c107, %c0_173] {strides = array<i32: 2, 1>} : memref<128x32xf32, #tpu.memory_space<vmem>>, vector<3x32xf32>
    %289 = tpu.concatenate %273, %274, %275, %276, %277, %278, %279, %280, %281, %282, %283, %284, %285, %286, %287, %288 in 1 : vector<3x32xf32>, vector<3x32xf32>, vector<3x32xf32>, vector<3x32xf32>, vector<3x32xf32>, vector<3x32xf32>, vector<3x32xf32>, vector<3x32xf32>, vector<3x32xf32>, vector<3x32xf32>, vector<3x32xf32>, vector<3x32xf32>, vector<3x32xf32>, vector<3x32xf32>, vector<3x32xf32>, vector<3x32xf32> -> vector<3x512xf32>
    %c12 = arith.constant 12 : index
    %c0_174 = arith.constant 0 : index
    %290 = vector.load %arg15[%c12, %c0_174] : memref<18x512xf32, #tpu.memory_space<vmem>>, vector<3x512xf32>
    tpu.vector_store %arg15[%c12, %c0_174], %289 {strides = array<i32>} : memref<18x512xf32, #tpu.memory_space<vmem>>, vector<3x512xf32>,
    %c96_175 = arith.constant 96 : index
    %c0_176 = arith.constant 0 : index
    %291 = tpu.strided_load %arg14[%c96_175, %c0_176] {strides = array<i32: 2, 1>} : memref<128x32xf32, #tpu.memory_space<vmem>>, vector<3x32xf32>
    %c97_177 = arith.constant 97 : index
    %c0_178 = arith.constant 0 : index
    %292 = tpu.strided_load %arg14[%c97_177, %c0_178] {strides = array<i32: 2, 1>} : memref<128x32xf32, #tpu.memory_space<vmem>>, vector<3x32xf32>
    %c98_179 = arith.constant 98 : index
    %c0_180 = arith.constant 0 : index
    %293 = tpu.strided_load %arg14[%c98_179, %c0_180] {strides = array<i32: 2, 1>} : memref<128x32xf32, #tpu.memory_space<vmem>>, vector<3x32xf32>
    %c99_181 = arith.constant 99 : index
    %c0_182 = arith.constant 0 : index
    %294 = tpu.strided_load %arg14[%c99_181, %c0_182] {strides = array<i32: 2, 1>} : memref<128x32xf32, #tpu.memory_space<vmem>>, vector<3x32xf32>
    %c104_183 = arith.constant 104 : index
    %c0_184 = arith.constant 0 : index
    %295 = tpu.strided_load %arg14[%c104_183, %c0_184] {strides = array<i32: 2, 1>} : memref<128x32xf32, #tpu.memory_space<vmem>>, vector<3x32xf32>
    %c105_185 = arith.constant 105 : index
    %c0_186 = arith.constant 0 : index
    %296 = tpu.strided_load %arg14[%c105_185, %c0_186] {strides = array<i32: 2, 1>} : memref<128x32xf32, #tpu.memory_space<vmem>>, vector<3x32xf32>
    %c106_187 = arith.constant 106 : index
    %c0_188 = arith.constant 0 : index
    %297 = tpu.strided_load %arg14[%c106_187, %c0_188] {strides = array<i32: 2, 1>} : memref<128x32xf32, #tpu.memory_space<vmem>>, vector<3x32xf32>
    %c107_189 = arith.constant 107 : index
    %c0_190 = arith.constant 0 : index
    %298 = tpu.strided_load %arg14[%c107_189, %c0_190] {strides = array<i32: 2, 1>} : memref<128x32xf32, #tpu.memory_space<vmem>>, vector<3x32xf32>
    %c112_191 = arith.constant 112 : index
    %c0_192 = arith.constant 0 : index
    %299 = tpu.strided_load %arg14[%c112_191, %c0_192] {strides = array<i32: 2, 1>} : memref<128x32xf32, #tpu.memory_space<vmem>>, vector<3x32xf32>
    %c113 = arith.constant 113 : index
    %c0_193 = arith.constant 0 : index
    %300 = tpu.strided_load %arg14[%c113, %c0_193] {strides = array<i32: 2, 1>} : memref<128x32xf32, #tpu.memory_space<vmem>>, vector<3x32xf32>
    %c114 = arith.constant 114 : index
    %c0_194 = arith.constant 0 : index
    %301 = tpu.strided_load %arg14[%c114, %c0_194] {strides = array<i32: 2, 1>} : memref<128x32xf32, #tpu.memory_space<vmem>>, vector<3x32xf32>
    %c115 = arith.constant 115 : index
    %c0_195 = arith.constant 0 : index
    %302 = tpu.strided_load %arg14[%c115, %c0_195] {strides = array<i32: 2, 1>} : memref<128x32xf32, #tpu.memory_space<vmem>>, vector<3x32xf32>
    %c120_196 = arith.constant 120 : index
    %c0_197 = arith.constant 0 : index
    %303 = tpu.strided_load %arg14[%c120_196, %c0_197] {strides = array<i32: 2, 1>} : memref<128x32xf32, #tpu.memory_space<vmem>>, vector<3x32xf32>
    %c121 = arith.constant 121 : index
    %c0_198 = arith.constant 0 : index
    %304 = tpu.strided_load %arg14[%c121, %c0_198] {strides = array<i32: 2, 1>} : memref<128x32xf32, #tpu.memory_space<vmem>>, vector<3x32xf32>
    %c122 = arith.constant 122 : index
    %c0_199 = arith.constant 0 : index
    %305 = tpu.strided_load %arg14[%c122, %c0_199] {strides = array<i32: 2, 1>} : memref<128x32xf32, #tpu.memory_space<vmem>>, vector<3x32xf32>
    %c123 = arith.constant 123 : index
    %c0_200 = arith.constant 0 : index
    %306 = tpu.strided_load %arg14[%c123, %c0_200] {strides = array<i32: 2, 1>} : memref<128x32xf32, #tpu.memory_space<vmem>>, vector<3x32xf32>
    %307 = tpu.concatenate %291, %292, %293, %294, %295, %296, %297, %298, %299, %300, %301, %302, %303, %304, %305, %306 in 1 : vector<3x32xf32>, vector<3x32xf32>, vector<3x32xf32>, vector<3x32xf32>, vector<3x32xf32>, vector<3x32xf32>, vector<3x32xf32>, vector<3x32xf32>, vector<3x32xf32>, vector<3x32xf32>, vector<3x32xf32>, vector<3x32xf32>, vector<3x32xf32>, vector<3x32xf32>, vector<3x32xf32>, vector<3x32xf32> -> vector<3x512xf32>
    %c15 = arith.constant 15 : index
    %c0_201 = arith.constant 0 : index
    %308 = vector.load %arg15[%c15, %c0_201] : memref<18x512xf32, #tpu.memory_space<vmem>>, vector<3x512xf32>
    tpu.vector_store %arg15[%c15, %c0_201], %307 {strides = array<i32>} : memref<18x512xf32, #tpu.memory_space<vmem>>, vector<3x512xf32>,
    %c0_202 = arith.constant 0 : index
    %c0_203 = arith.constant 0 : index
    %309 = vector.load %arg15[%c0_202, %c0_203] : memref<18x512xf32, #tpu.memory_space<vmem>>, vector<18x512xf32>
    %310 = arith.truncf %309 : vector<18x512xf32> to vector<18x512xbf16>
    %c0_204 = arith.constant 0 : index
    %c0_205 = arith.constant 0 : index
    %311 = vector.load %arg4[%c0_204, %c0_205] : memref<512x64xbf16, #tpu.memory_space<vmem>>, vector<512x64xbf16>
    %cst_206 = arith.constant dense<0.000000e+00> : vector<18x64xf32>
    %312 = tpu.matmul %310, %311, %cst_206 {dimension_numbers = #tpu.dot_dimension_numbers<[1], [0], [0], [1], [0, 0, 1, 1], [], []>} : vector<18x512xbf16>, vector<512x64xbf16>, vector<18x64xf32> -> vector<18x64xf32>
    %c0_207 = arith.constant 0 : index
    %c0_208 = arith.constant 0 : index
    %313 = vector.load %arg5[%c0_207, %c0_208] : memref<1x64xf32, #tpu.memory_space<vmem>>, vector<1x64xf32>
    %314 = vector.broadcast %313 : vector<1x64xf32> to vector<18x64xf32>
    %315 = arith.addf %312, %314 : vector<18x64xf32>
    %cst_209 = arith.constant 0.000000e+00 : f32
    %316 = vector.broadcast %cst_209 : f32 to vector<18x64xf32>
    %317 = arith.maximumf %315, %316 : vector<18x64xf32>
    %c0_210 = arith.constant 0 : index
    %c0_211 = arith.constant 0 : index
    %318 = vector.load %arg16[%c0_210, %c0_211] : memref<18x64xf32, #tpu.memory_space<vmem>>, vector<18x64xf32>
    tpu.vector_store %arg16[%c0_210, %c0_211], %317 {strides = array<i32>} : memref<18x64xf32, #tpu.memory_space<vmem>>, vector<18x64xf32>,
    %c0_212 = arith.constant 0 : index
    %c0_213 = arith.constant 0 : index
    %319 = vector.load %arg16[%c0_212, %c0_213] : memref<18x64xf32, #tpu.memory_space<vmem>>, vector<1x64xf32>
    %c1_214 = arith.constant 1 : index
    %c0_215 = arith.constant 0 : index
    %320 = vector.load %arg16[%c1_214, %c0_215] : memref<18x64xf32, #tpu.memory_space<vmem>>, vector<1x64xf32>
    %c2_216 = arith.constant 2 : index
    %c0_217 = arith.constant 0 : index
    %321 = vector.load %arg16[%c2_216, %c0_217] : memref<18x64xf32, #tpu.memory_space<vmem>>, vector<1x64xf32>
    %c3_218 = arith.constant 3 : index
    %c0_219 = arith.constant 0 : index
    %322 = vector.load %arg16[%c3_218, %c0_219] : memref<18x64xf32, #tpu.memory_space<vmem>>, vector<1x64xf32>
    %c4 = arith.constant 4 : index
    %c0_220 = arith.constant 0 : index
    %323 = vector.load %arg16[%c4, %c0_220] : memref<18x64xf32, #tpu.memory_space<vmem>>, vector<1x64xf32>
    %c5 = arith.constant 5 : index
    %c0_221 = arith.constant 0 : index
    %324 = vector.load %arg16[%c5, %c0_221] : memref<18x64xf32, #tpu.memory_space<vmem>>, vector<1x64xf32>
    %c6_222 = arith.constant 6 : index
    %c0_223 = arith.constant 0 : index
    %325 = vector.load %arg16[%c6_222, %c0_223] : memref<18x64xf32, #tpu.memory_space<vmem>>, vector<1x64xf32>
    %c7 = arith.constant 7 : index
    %c0_224 = arith.constant 0 : index
    %326 = vector.load %arg16[%c7, %c0_224] : memref<18x64xf32, #tpu.memory_space<vmem>>, vector<1x64xf32>
    %c8_225 = arith.constant 8 : index
    %c0_226 = arith.constant 0 : index
    %327 = vector.load %arg16[%c8_225, %c0_226] : memref<18x64xf32, #tpu.memory_space<vmem>>, vector<1x64xf32>
    %328 = tpu.concatenate %319, %320, %321, %322, %323, %324, %325, %326, %327 in 1 : vector<1x64xf32>, vector<1x64xf32>, vector<1x64xf32>, vector<1x64xf32>, vector<1x64xf32>, vector<1x64xf32>, vector<1x64xf32>, vector<1x64xf32>, vector<1x64xf32> -> vector<1x576xf32>
    %c0_227 = arith.constant 0 : index
    %c0_228 = arith.constant 0 : index
    %329 = vector.load %arg17[%c0_227, %c0_228] : memref<2x576xf32, #tpu.memory_space<vmem>>, vector<1x576xf32>
    tpu.vector_store %arg17[%c0_227, %c0_228], %328 {strides = array<i32>} : memref<2x576xf32, #tpu.memory_space<vmem>>, vector<1x576xf32>,
    %c9_229 = arith.constant 9 : index
    %c0_230 = arith.constant 0 : index
    %330 = vector.load %arg16[%c9_229, %c0_230] : memref<18x64xf32, #tpu.memory_space<vmem>>, vector<1x64xf32>
    %c10_231 = arith.constant 10 : index
    %c0_232 = arith.constant 0 : index
    %331 = vector.load %arg16[%c10_231, %c0_232] : memref<18x64xf32, #tpu.memory_space<vmem>>, vector<1x64xf32>
    %c11_233 = arith.constant 11 : index
    %c0_234 = arith.constant 0 : index
    %332 = vector.load %arg16[%c11_233, %c0_234] : memref<18x64xf32, #tpu.memory_space<vmem>>, vector<1x64xf32>
    %c12_235 = arith.constant 12 : index
    %c0_236 = arith.constant 0 : index
    %333 = vector.load %arg16[%c12_235, %c0_236] : memref<18x64xf32, #tpu.memory_space<vmem>>, vector<1x64xf32>
    %c13 = arith.constant 13 : index
    %c0_237 = arith.constant 0 : index
    %334 = vector.load %arg16[%c13, %c0_237] : memref<18x64xf32, #tpu.memory_space<vmem>>, vector<1x64xf32>
    %c14 = arith.constant 14 : index
    %c0_238 = arith.constant 0 : index
    %335 = vector.load %arg16[%c14, %c0_238] : memref<18x64xf32, #tpu.memory_space<vmem>>, vector<1x64xf32>
    %c15_239 = arith.constant 15 : index
    %c0_240 = arith.constant 0 : index
    %336 = vector.load %arg16[%c15_239, %c0_240] : memref<18x64xf32, #tpu.memory_space<vmem>>, vector<1x64xf32>
    %c16_241 = arith.constant 16 : index
    %c0_242 = arith.constant 0 : index
    %337 = vector.load %arg16[%c16_241, %c0_242] : memref<18x64xf32, #tpu.memory_space<vmem>>, vector<1x64xf32>
    %c17_243 = arith.constant 17 : index
    %c0_244 = arith.constant 0 : index
    %338 = vector.load %arg16[%c17_243, %c0_244] : memref<18x64xf32, #tpu.memory_space<vmem>>, vector<1x64xf32>
    %339 = tpu.concatenate %330, %331, %332, %333, %334, %335, %336, %337, %338 in 1 : vector<1x64xf32>, vector<1x64xf32>, vector<1x64xf32>, vector<1x64xf32>, vector<1x64xf32>, vector<1x64xf32>, vector<1x64xf32>, vector<1x64xf32>, vector<1x64xf32> -> vector<1x576xf32>
    %c1_245 = arith.constant 1 : index
    %c0_246 = arith.constant 0 : index
    %340 = vector.load %arg17[%c1_245, %c0_246] : memref<2x576xf32, #tpu.memory_space<vmem>>, vector<1x576xf32>
    tpu.vector_store %arg17[%c1_245, %c0_246], %339 {strides = array<i32>} : memref<2x576xf32, #tpu.memory_space<vmem>>, vector<1x576xf32>,
    %c0_247 = arith.constant 0 : index
    %c0_248 = arith.constant 0 : index
    %341 = vector.load %arg17[%c0_247, %c0_248] : memref<2x576xf32, #tpu.memory_space<vmem>>, vector<2x576xf32>
    %342 = arith.truncf %341 : vector<2x576xf32> to vector<2x576xbf16>
    %c0_249 = arith.constant 0 : index
    %c0_250 = arith.constant 0 : index
    %343 = vector.load %arg6[%c0_249, %c0_250] : memref<576x64xbf16, #tpu.memory_space<vmem>>, vector<576x64xbf16>
    %cst_251 = arith.constant dense<0.000000e+00> : vector<2x64xf32>
    %344 = tpu.matmul %342, %343, %cst_251 {dimension_numbers = #tpu.dot_dimension_numbers<[1], [0], [0], [1], [0, 0, 1, 1], [], []>} : vector<2x576xbf16>, vector<576x64xbf16>, vector<2x64xf32> -> vector<2x64xf32>
    %c0_252 = arith.constant 0 : index
    %c0_253 = arith.constant 0 : index
    %345 = vector.load %arg7[%c0_252, %c0_253] : memref<1x64xf32, #tpu.memory_space<vmem>>, vector<1x64xf32>
    %346 = vector.broadcast %345 : vector<1x64xf32> to vector<2x64xf32>
    %347 = arith.addf %344, %346 : vector<2x64xf32>
    %cst_254 = arith.constant 0.000000e+00 : f32
    %348 = vector.broadcast %cst_254 : f32 to vector<2x64xf32>
    %349 = arith.maximumf %347, %348 : vector<2x64xf32>
    %c0_255 = arith.constant 0 : index
    %c0_256 = arith.constant 0 : index
    %350 = vector.load %arg18[%c0_255, %c0_256] : memref<2x64xf32, #tpu.memory_space<vmem>>, vector<2x64xf32>
    tpu.vector_store %arg18[%c0_255, %c0_256], %349 {strides = array<i32>} : memref<2x64xf32, #tpu.memory_space<vmem>>, vector<2x64xf32>,
    %c0_257 = arith.constant 0 : index
    %c0_258 = arith.constant 0 : index
    %351 = vector.load %arg18[%c0_257, %c0_258] : memref<2x64xf32, #tpu.memory_space<vmem>>, vector<2x64xf32>
    %352 = arith.truncf %351 : vector<2x64xf32> to vector<2x64xbf16>
    %c0_259 = arith.constant 0 : index
    %c0_260 = arith.constant 0 : index
    %353 = vector.load %arg8[%c0_259, %c0_260] : memref<64x512xbf16, #tpu.memory_space<vmem>>, vector<64x512xbf16>
    %cst_261 = arith.constant dense<0.000000e+00> : vector<2x512xf32>
    %354 = tpu.matmul %352, %353, %cst_261 {dimension_numbers = #tpu.dot_dimension_numbers<[1], [0], [0], [1], [0, 0, 1, 1], [], []>} : vector<2x64xbf16>, vector<64x512xbf16>, vector<2x512xf32> -> vector<2x512xf32>
    %c0_262 = arith.constant 0 : index
    %c0_263 = arith.constant 0 : index
    %355 = vector.load %arg9[%c0_262, %c0_263] : memref<1x512xf32, #tpu.memory_space<vmem>>, vector<1x512xf32>
    %356 = vector.broadcast %355 : vector<1x512xf32> to vector<2x512xf32>
    %357 = arith.addf %354, %356 : vector<2x512xf32>
    %cst_264 = arith.constant 0.000000e+00 : f32
    %358 = vector.broadcast %cst_264 : f32 to vector<2x512xf32>
    %359 = arith.maximumf %357, %358 : vector<2x512xf32>
    %360 = arith.truncf %359 : vector<2x512xf32> to vector<2x512xbf16>
    %c0_265 = arith.constant 0 : index
    %c0_266 = arith.constant 0 : index
    %361 = vector.load %arg10[%c0_265, %c0_266] : memref<512x128xbf16, #tpu.memory_space<vmem>>, vector<512x128xbf16>
    %cst_267 = arith.constant dense<0.000000e+00> : vector<2x128xf32>
    %362 = tpu.matmul %360, %361, %cst_267 {dimension_numbers = #tpu.dot_dimension_numbers<[1], [0], [0], [1], [0, 0, 1, 1], [], []>} : vector<2x512xbf16>, vector<512x128xbf16>, vector<2x128xf32> -> vector<2x128xf32>
    %c0_268 = arith.constant 0 : index
    %c0_269 = arith.constant 0 : index
    %363 = vector.load %arg11[%c0_268, %c0_269] : memref<1x128xf32, #tpu.memory_space<vmem>>, vector<1x128xf32>
    %364 = vector.broadcast %363 : vector<1x128xf32> to vector<2x128xf32>
    %365 = arith.addf %362, %364 : vector<2x128xf32>
    %c0_270 = arith.constant 0 : index
    %c0_271 = arith.constant 0 : index
    %366 = vector.load %arg12[%c0_270, %c0_271] : memref<2x128xf32, #tpu.memory_space<vmem>>, vector<2x128xf32>
    tpu.vector_store %arg12[%c0_270, %c0_271], %365 {strides = array<i32>} : memref<2x128xf32, #tpu.memory_space<vmem>>, vector<2x128xf32>,
    return
  }
  func.func @transform_0(%arg0: i32) -> (i32, i32) {
    %c0_i32 = arith.constant 0 : i32
    %c0_i32_0 = arith.constant 0 : i32
    return %arg0, %c0_i32 : i32, i32
  }
  func.func @transform_1(%arg0: i32) -> (i32, i32) {
    %c0_i32 = arith.constant 0 : i32
    %c0_i32_0 = arith.constant 0 : i32
    %c0_i32_1 = arith.constant 0 : i32
    return %c0_i32, %c0_i32_0 : i32, i32
  }
  func.func @transform_2(%arg0: i32) -> (i32, i32) {
    %c0_i32 = arith.constant 0 : i32
    %c0_i32_0 = arith.constant 0 : i32
    %c0_i32_1 = arith.constant 0 : i32
    return %c0_i32, %c0_i32_0 : i32, i32
  }
  func.func @transform_3(%arg0: i32) -> (i32, i32) {
    %c0_i32 = arith.constant 0 : i32
    %c0_i32_0 = arith.constant 0 : i32
    %c0_i32_1 = arith.constant 0 : i32
    return %c0_i32, %c0_i32_0 : i32, i32
  }
  func.func @transform_4(%arg0: i32) -> (i32, i32) {
    %c0_i32 = arith.constant 0 : i32
    %c0_i32_0 = arith.constant 0 : i32
    %c0_i32_1 = arith.constant 0 : i32
    return %c0_i32, %c0_i32_0 : i32, i32
  }
  func.func @transform_5(%arg0: i32) -> (i32, i32) {
    %c0_i32 = arith.constant 0 : i32
    %c0_i32_0 = arith.constant 0 : i32
    %c0_i32_1 = arith.constant 0 : i32
    return %c0_i32, %c0_i32_0 : i32, i32
  }
  func.func @transform_6(%arg0: i32) -> (i32, i32) {
    %c0_i32 = arith.constant 0 : i32
    %c0_i32_0 = arith.constant 0 : i32
    %c0_i32_1 = arith.constant 0 : i32
    return %c0_i32, %c0_i32_0 : i32, i32
  }
  func.func @transform_7(%arg0: i32) -> (i32, i32) {
    %c0_i32 = arith.constant 0 : i32
    %c0_i32_0 = arith.constant 0 : i32
    %c0_i32_1 = arith.constant 0 : i32
    return %c0_i32, %c0_i32_0 : i32, i32
  }
  func.func @transform_8(%arg0: i32) -> (i32, i32) {
    %c0_i32 = arith.constant 0 : i32
    %c0_i32_0 = arith.constant 0 : i32
    %c0_i32_1 = arith.constant 0 : i32
    return %c0_i32, %c0_i32_0 : i32, i32
  }
  func.func @transform_9(%arg0: i32) -> (i32, i32) {
    %c0_i32 = arith.constant 0 : i32
    %c0_i32_0 = arith.constant 0 : i32
    %c0_i32_1 = arith.constant 0 : i32
    return %c0_i32, %c0_i32_0 : i32, i32
  }
  func.func @transform_10(%arg0: i32) -> (i32, i32) {
    %c0_i32 = arith.constant 0 : i32
    %c0_i32_0 = arith.constant 0 : i32
    %c0_i32_1 = arith.constant 0 : i32
    return %c0_i32, %c0_i32_0 : i32, i32
  }
  func.func @transform_11(%arg0: i32) -> (i32, i32) {
    %c0_i32 = arith.constant 0 : i32
    %c0_i32_0 = arith.constant 0 : i32
    return %arg0, %c0_i32 : i32, i32
  }
}

</mosaic_0001>

<llo_original>
// kernel: soft_q_forward.1
$region0: #{soft_q_forward.1}
  #allocation0 [shape = 'u32[]', space=smem, size = 0x4, offset = 0x4, fixed_abs, tag = 'smem constant byte address 0x4 - core index']
  #allocation1 [shape = 'u32[72,128]{1,0:T(1,128)}', space=vmem, size = 0x9000, scoped, tag = 'internal scratch']
  #allocation2 [shape = 'bf16[128,256]{1,0:T(8,128)(2,1)}', space=vmem, size = 0x10000, scoped, tag = 'scratch operand']
  #allocation3 [shape = 'f32[128,32]{1,0:T(8,128)}', space=vmem, size = 0x10000, scoped, tag = 'scratch operand']
  #allocation4 [shape = 'f32[18,512]{1,0:T(8,128)}', space=vmem, size = 0xc000, scoped, tag = 'scratch operand']
  #allocation5 [shape = 'f32[18,64]{1,0:T(8,128)}', space=vmem, size = 0x3000, scoped, tag = 'scratch operand']
  #allocation6 [shape = 'f32[2,576]{1,0:T(2,128)}', space=vmem, size = 0x1400, scoped, tag = 'scratch operand']
  #allocation7 [shape = 'f32[2,64]{1,0:T(2,128)}', space=vmem, size = 0x400, scoped, tag = 'scratch operand']
  %s0 = inlined_call_operand.vmem [shape: f32[72,144], index: 0, kind: input, shape index: {}]
  %s1 = inlined_call_operand.vmem [shape: bf16[256,32], index: 1, kind: input, shape index: {}]
  %s2 = inlined_call_operand.vmem [shape: f32[1,32], index: 2, kind: input, shape index: {}]
  %s3 = inlined_call_operand.vmem [shape: bf16[512,64], index: 3, kind: input, shape index: {}]
  %s4 = inlined_call_operand.vmem [shape: f32[1,64], index: 4, kind: input, shape index: {}]
  %s5 = inlined_call_operand.vmem [shape: bf16[576,64], index: 5, kind: input, shape index: {}]
  %s6 = inlined_call_operand.vmem [shape: f32[1,64], index: 6, kind: input, shape index: {}]
  %s7 = inlined_call_operand.vmem [shape: bf16[64,512], index: 7, kind: input, shape index: {}]
  %s8 = inlined_call_operand.vmem [shape: f32[1,512], index: 8, kind: input, shape index: {}]
  %s9 = inlined_call_operand.vmem [shape: bf16[512,128], index: 9, kind: input, shape index: {}]
  %s10 = inlined_call_operand.vmem [shape: f32[1,128], index: 10, kind: input, shape index: {}]
  %s11 = inlined_call_operand.hbm [shape: f32[2,128], index: 11, kind: output, shape index: {}]
  %s12 = sld [smem:[#allocation0]]
  $region54: #{soft_q_forward.1} parent=0
    _
  %s14 = ssub.s32 1, %s12
  %s15 = scalar_select 0, %s14, %s12
  $region1: #{soft_q_forward.1} parent=0
    #allocation8 [shape = 'u8[1024]{0}', space=vmem, size = 0x400, scoped, tag = 'output window, operand 0, single buffered']
    #allocation9 [shape = 's32[1]{0}', space=sflag, size = 0x4, scoped, tag = 'scoped memory for soft_q_forward.1']
    %16 = vsyncpa [#allocation9], 0
    // Predicated region
    $region2: #{soft_q_forward.1} parent=1 // pred_check
      _
    $region3: #{soft_q_forward.1} parent=1 // pred_check_branch
      %18 = sbr.rel (0) target = $region5
    $region4: #{soft_q_forward.1} parent=1 // pred_region
      _
    $region5: #{soft_q_forward.1} parent=1 // pred_fallthru
      _
    // Predicated region
    $region6: #{soft_q_forward.1} parent=1 // pred_check
      _
    $region7: #{soft_q_forward.1} parent=1 // pred_check_branch
      %20 = sbr.rel (0) target = $region9
    $region8: #{soft_q_forward.1} parent=1 // pred_region
      _
    $region9: #{soft_q_forward.1} parent=1 // pred_fallthru
      _
    // Predicated region
    $region10: #{soft_q_forward.1} parent=1 // pred_check
      _
    $region11: #{soft_q_forward.1} parent=1 // pred_check_branch
      %22 = sbr.rel (0) target = $region13
    $region12: #{soft_q_forward.1} parent=1 // pred_region
      _
    $region13: #{soft_q_forward.1} parent=1 // pred_fallthru
      _
    // Predicated region
    $region14: #{soft_q_forward.1} parent=1 // pred_check
      _
    $region15: #{soft_q_forward.1} parent=1 // pred_check_branch
      %24 = sbr.rel (0) target = $region17
    $region16: #{soft_q_forward.1} parent=1 // pred_region
      _
    $region17: #{soft_q_forward.1} parent=1 // pred_fallthru
      _
    // Predicated region
    $region18: #{soft_q_forward.1} parent=1 // pred_check
      _
    $region19: #{soft_q_forward.1} parent=1 // pred_check_branch
      %26 = sbr.rel (0) target = $region21
    $region20: #{soft_q_forward.1} parent=1 // pred_region
      _
    $region21: #{soft_q_forward.1} parent=1 // pred_fallthru
      _
    // Predicated region
    $region22: #{soft_q_forward.1} parent=1 // pred_check
      _
    $region23: #{soft_q_forward.1} parent=1 // pred_check_branch
      %28 = sbr.rel (0) target = $region25
    $region24: #{soft_q_forward.1} parent=1 // pred_region
      _
    $region25: #{soft_q_forward.1} parent=1 // pred_fallthru
      _
    // Predicated region
    $region26: #{soft_q_forward.1} parent=1 // pred_check
      _
    $region27: #{soft_q_forward.1} parent=1 // pred_check_branch
      %30 = sbr.rel (0) target = $region29
    $region28: #{soft_q_forward.1} parent=1 // pred_region
      _
    $region29: #{soft_q_forward.1} parent=1 // pred_fallthru
      _
    // Predicated region
    $region30: #{soft_q_forward.1} parent=1 // pred_check
      _
    $region31: #{soft_q_forward.1} parent=1 // pred_check_branch
      %32 = sbr.rel (0) target = $region33
    $region32: #{soft_q_forward.1} parent=1 // pred_region
      _
    $region33: #{soft_q_forward.1} parent=1 // pred_fallthru
      _
    // Predicated region
    $region34: #{soft_q_forward.1} parent=1 // pred_check
      _
    $region35: #{soft_q_forward.1} parent=1 // pred_check_branch
      %34 = sbr.rel (0) target = $region37
    $region36: #{soft_q_forward.1} parent=1 // pred_region
      _
    $region37: #{soft_q_forward.1} parent=1 // pred_fallthru
      _
    // Predicated region
    $region38: #{soft_q_forward.1} parent=1 // pred_check
      _
    $region39: #{soft_q_forward.1} parent=1 // pred_check_branch
      %36 = sbr.rel (0) target = $region41
    $region40: #{soft_q_forward.1} parent=1 // pred_region
      _
    $region41: #{soft_q_forward.1} parent=1 // pred_fallthru
      _
    // Predicated region
    $region42: #{soft_q_forward.1} parent=1 // pred_check
      _
    $region43: #{soft_q_forward.1} parent=1 // pred_check_branch
      %38 = sbr.rel (0) target = $region45
    $region44: #{soft_q_forward.1} parent=1 // pred_region
      _
    $region45: #{soft_q_forward.1} parent=1 // pred_fallthru
      _
    %v40 = vld [vmem:[%s0] sm:$0xff]
    %v41 = vld [vmem:[%s0 + $0x8] sm:$0xff]
    %v42 = vld [vmem:[%s0 + $0x10] sm:$0xfe]
    %v43 = vld [vmem:[%s0 + $0x18] sm:$0xfe]
    %v44 = vld [vmem:[%s0 + $0x20] sm:$0x1]
    %v45 = vld [vmem:[%s0 + $0x28] sm:$0x1]
    %v46 = vld [vmem:[%s0 + $0x20] sm:$0xfc]
    %v47 = vld [vmem:[%s0 + $0x28] sm:$0xfc]
    %v48 = vld [vmem:[%s0 + $0x30] sm:$0x3]
    %v49 = vld [vmem:[%s0 + $0x38] sm:$0x3]
    %v50 = vld [vmem:[%s0 + $0x30] sm:$0xf8]
    %v51 = vld [vmem:[%s0 + $0x38] sm:$0xf8]
    %v52 = vld [vmem:[%s0 + $0x40] sm:$0x7]
    %v53 = vld [vmem:[%s0 + $0x48] sm:$0x7]
    %v54 = vld [vmem:[%s0] sm:$0xfe]
    %v55 = vld [vmem:[%s0 + $0x8] sm:$0xfe]
    %v56 = vld [vmem:[%s0 + $0x10] sm:$0x1]
    %v57 = vld [vmem:[%s0 + $0x18] sm:$0x1]
    %v58 = vld [vmem:[%s0 + $0x10] sm:$0xfc]
    %v59 = vld [vmem:[%s0 + $0x18] sm:$0xfc]
    %v60 = vld [vmem:[%s0 + $0x20] sm:$0x3]
    %v61 = vld [vmem:[%s0 + $0x28] sm:$0x3]
    %v62 = vld [vmem:[%s0 + $0x20] sm:$0xf8]
    %v63 = vld [vmem:[%s0 + $0x28] sm:$0xf8]
    %v64 = vld [vmem:[%s0 + $0x30] sm:$0x7]
    %v65 = vld [vmem:[%s0 + $0x38] sm:$0x7]
    %v66 = vld [vmem:[%s0 + $0x30] sm:$0xf0]
    %v67 = vld [vmem:[%s0 + $0x38] sm:$0xf0]
    %v68 = vld [vmem:[%s0 + $0x40] sm:$0xf]
    %v69 = vld [vmem:[%s0 + $0x48] sm:$0xf]
    %vm72 = vcmask 1046528
    %v73 = vrot.slane %v42, 1
    %v74 = vrot.slane %v44, 1
    %v75 = vsel %vm72, %v73, %v74
    %76 = vrot.lane.b32.xlu0 %v75, 32
    %v77 = vpop.permute.xlu0 %76
    %vm81 = vcmask 1045504
    %v82 = vrot.slane %v46, 2
    %v83 = vrot.slane %v48, 2
    %v84 = vsel %vm81, %v82, %v83
    %85 = vrot.lane.b32.xlu0 %v84, 64
    %v86 = vpop.permute.xlu0 %85
    %vm90 = vcmask 1044480
    %v91 = vrot.slane %v50, 3
    %v92 = vrot.slane %v52, 3
    %v93 = vsel %vm90, %v91, %v92
    %94 = vrot.lane.b32.xlu0 %v93, 96
    %v95 = vpop.permute.xlu0 %94
    %v99 = vrot.slane %v54, 1
    %v100 = vrot.slane %v56, 1
    %v101 = vsel %vm72, %v99, %v100
    %v105 = vrot.slane %v58, 2
    %v106 = vrot.slane %v60, 2
    %v107 = vsel %vm81, %v105, %v106
    %108 = vrot.lane.b32.xlu0 %v107, 32
    %v109 = vpop.permute.xlu0 %108
    %v113 = vrot.slane %v62, 3
    %v114 = vrot.slane %v64, 3
    %v115 = vsel %vm90, %v113, %v114
    %116 = vrot.lane.b32.xlu0 %v115, 64
    %v117 = vpop.permute.xlu0 %116
    %vm121 = vcmask 1043456
    %v122 = vrot.slane %v66, 4
    %v123 = vrot.slane %v68, 4
    %v124 = vsel %vm121, %v122, %v123
    %125 = vrot.lane.b32.xlu0 %v124, 96
    %v126 = vpop.permute.xlu0 %125
    %vm128 = vcmask 261120
    %v129 = vsel %vm128, %v40, %v77
    %vm130 = vcmask 523264
    %v131 = vsel %vm130, %v129, %v86
    %vm132 = vcmask 785408
    %v133 = vsel %vm132, %v131, %v95
    %v134 = vsel %vm128, %v101, %v109
    %v135 = vsel %vm130, %v134, %v117
    %v136 = vsel %vm132, %v135, %v126
    %v137 = vpack.c.bf16 %v136, %v133
    %138 = vst [vmem:[#allocation2] sm:$0xff] %v137
    %140 = vrot.lane.b32.xlu0 %v40, 112
    %v141 = vpop.permute.xlu0 %140
    %143 = vrot.lane.b32.xlu0 %v75, 16
    %v144 = vpop.permute.xlu0 %143
    %146 = vrot.lane.b32.xlu0 %v84, 48
    %v147 = vpop.permute.xlu0 %146
    %149 = vrot.lane.b32.xlu0 %v93, 80
    %v150 = vpop.permute.xlu0 %149
    %152 = vrot.lane.b32.xlu0 %v101, 112
    %v153 = vpop.permute.xlu0 %152
    %155 = vrot.lane.b32.xlu0 %v107, 16
    %v156 = vpop.permute.xlu0 %155
    %158 = vrot.lane.b32.xlu0 %v115, 48
    %v159 = vpop.permute.xlu0 %158
    %161 = vrot.lane.b32.xlu0 %v124, 80
    %v162 = vpop.permute.xlu0 %161
    %v164 = vsel %vm128, %v141, %v144
    %v165 = vsel %vm130, %v164, %v147
    %v166 = vsel %vm132, %v165, %v150
    %v167 = vsel %vm128, %v153, %v156
    %v168 = vsel %vm130, %v167, %v159
    %v169 = vsel %vm132, %v168, %v162
    %v170 = vpack.c.bf16 %v169, %v166
    %171 = vst [vmem:[#allocation2 + $0x8] sm:$0xff] %v170
    %172 = vrot.lane.b32.xlu0 %v40, 96
    %v173 = vpop.permute.xlu0 %172
    %176 = vrot.lane.b32.xlu0 %v84, 32
    %v177 = vpop.permute.xlu0 %176
    %179 = vrot.lane.b32.xlu0 %v93, 64
    %v180 = vpop.permute.xlu0 %179
    %182 = vrot.lane.b32.xlu0 %v101, 96
    %v183 = vpop.permute.xlu0 %182
    %186 = vrot.lane.b32.xlu0 %v115, 32
    %v187 = vpop.permute.xlu0 %186
    %189 = vrot.lane.b32.xlu0 %v124, 64
    %v190 = vpop.permute.xlu0 %189
    %v192 = vsel %vm128, %v173, %v75
    %v193 = vsel %vm130, %v192, %v177
    %v194 = vsel %vm132, %v193, %v180
    %v195 = vsel %vm128, %v183, %v107
    %v196 = vsel %vm130, %v195, %v187
    %v197 = vsel %vm132, %v196, %v190
    %v198 = vpack.c.bf16 %v197, %v194
    %199 = vst [vmem:[#allocation2 + $0x10] sm:$0xff] %v198
    %200 = vrot.lane.b32.xlu0 %v40, 80
    %v201 = vpop.permute.xlu0 %200
    %203 = vrot.lane.b32.xlu0 %v75, 112
    %v204 = vpop.permute.xlu0 %203
    %206 = vrot.lane.b32.xlu0 %v84, 16
    %v207 = vpop.permute.xlu0 %206
    %209 = vrot.lane.b32.xlu0 %v93, 48
    %v210 = vpop.permute.xlu0 %209
    %212 = vrot.lane.b32.xlu0 %v101, 80
    %v213 = vpop.permute.xlu0 %212
    %215 = vrot.lane.b32.xlu0 %v107, 112
    %v216 = vpop.permute.xlu0 %215
    %218 = vrot.lane.b32.xlu0 %v115, 16
    %v219 = vpop.permute.xlu0 %218
    %221 = vrot.lane.b32.xlu0 %v124, 48
    %v222 = vpop.permute.xlu0 %221
    %v224 = vsel %vm128, %v201, %v204
    %v225 = vsel %vm130, %v224, %v207
    %v226 = vsel %vm132, %v225, %v210
    %v227 = vsel %vm128, %v213, %v216
    %v228 = vsel %vm130, %v227, %v219
    %v229 = vsel %vm132, %v228, %v222
    %v230 = vpack.c.bf16 %v229, %v226
    %231 = vst [vmem:[#allocation2 + $0x18] sm:$0xff] %v230
    %232 = vrot.lane.b32.xlu0 %v40, 64
    %v233 = vpop.permute.xlu0 %232
    %235 = vrot.lane.b32.xlu0 %v75, 96
    %v236 = vpop.permute.xlu0 %235
    %239 = vrot.lane.b32.xlu0 %v93, 32
    %v240 = vpop.permute.xlu0 %239
    %242 = vrot.lane.b32.xlu0 %v101, 64
    %v243 = vpop.permute.xlu0 %242
    %245 = vrot.lane.b32.xlu0 %v107, 96
    %v246 = vpop.permute.xlu0 %245
    %249 = vrot.lane.b32.xlu0 %v124, 32
    %v250 = vpop.permute.xlu0 %249
    %v252 = vsel %vm128, %v233, %v236
    %v253 = vsel %vm130, %v252, %v84
    %v254 = vsel %vm132, %v253, %v240
    %v255 = vsel %vm128, %v243, %v246
    %v256 = vsel %vm130, %v255, %v115
    %v257 = vsel %vm132, %v256, %v250
    %v258 = vpack.c.bf16 %v257, %v254
    %259 = vst [vmem:[#allocation2 + $0x20] sm:$0xff] %v258
    %260 = vrot.lane.b32.xlu0 %v40, 48
    %v261 = vpop.permute.xlu0 %260
    %263 = vrot.lane.b32.xlu0 %v75, 80
    %v264 = vpop.permute.xlu0 %263
    %266 = vrot.lane.b32.xlu0 %v84, 112
    %v267 = vpop.permute.xlu0 %266
    %269 = vrot.lane.b32.xlu0 %v93, 16
    %v270 = vpop.permute.xlu0 %269
    %272 = vrot.lane.b32.xlu0 %v101, 48
    %v273 = vpop.permute.xlu0 %272
    %275 = vrot.lane.b32.xlu0 %v107, 80
    %v276 = vpop.permute.xlu0 %275
    %278 = vrot.lane.b32.xlu0 %v115, 112
    %v279 = vpop.permute.xlu0 %278
    %281 = vrot.lane.b32.xlu0 %v124, 16
    %v282 = vpop.permute.xlu0 %281
    %v284 = vsel %vm128, %v261, %v264
    %v285 = vsel %vm130, %v284, %v267
    %v286 = vsel %vm132, %v285, %v270
    %v287 = vsel %vm128, %v273, %v276
    %v288 = vsel %vm130, %v287, %v279
    %v289 = vsel %vm132, %v288, %v282
    %v290 = vpack.c.bf16 %v289, %v286
    %291 = vst [vmem:[#allocation2 + $0x28] sm:$0xff] %v290
    %292 = vrot.lane.b32.xlu0 %v40, 32
    %v293 = vpop.permute.xlu0 %292
    %295 = vrot.lane.b32.xlu0 %v75, 64
    %v296 = vpop.permute.xlu0 %295
    %298 = vrot.lane.b32.xlu0 %v84, 96
    %v299 = vpop.permute.xlu0 %298
    %302 = vrot.lane.b32.xlu0 %v101, 32
    %v303 = vpop.permute.xlu0 %302
    %305 = vrot.lane.b32.xlu0 %v107, 64
    %v306 = vpop.permute.xlu0 %305
    %308 = vrot.lane.b32.xlu0 %v115, 96
    %v309 = vpop.permute.xlu0 %308
    %v312 = vsel %vm128, %v293, %v296
    %v313 = vsel %vm130, %v312, %v299
    %v314 = vsel %vm132, %v313, %v93
    %v315 = vsel %vm128, %v303, %v306
    %v316 = vsel %vm130, %v315, %v309
    %v317 = vsel %vm132, %v316, %v124
    %v318 = vpack.c.bf16 %v317, %v314
    %319 = vst [vmem:[#allocation2 + $0x30] sm:$0xff] %v318
    %321 = vrot.lane.b32.xlu0 %v40, 16
    %v322 = vpop.permute.xlu0 %321
    %323 = vrot.lane.b32.xlu0 %v41, 16
    %v324 = vpop.permute.xlu0 %323
    %vm325 = vcmask 130048
    %v326 = vsel %vm325, %v322, %v324
    %v330 = vrot.slane %v43, 1
    %v331 = vrot.slane %v45, 1
    %v332 = vsel %vm72, %v330, %v331
    %333 = vrot.lane.b32.xlu0 %v75, 48
    %v334 = vpop.permute.xlu0 %333
    %335 = vrot.lane.b32.xlu0 %v332, 48
    %v336 = vpop.permute.xlu0 %335
    %vm337 = vcmask 392192
    %v338 = vsel %vm337, %v334, %v336
    %v342 = vrot.slane %v47, 2
    %v343 = vrot.slane %v49, 2
    %v344 = vsel %vm81, %v342, %v343
    %345 = vrot.lane.b32.xlu0 %v84, 80
    %v346 = vpop.permute.xlu0 %345
    %347 = vrot.lane.b32.xlu0 %v344, 80
    %v348 = vpop.permute.xlu0 %347
    %vm349 = vcmask 654336
    %v350 = vsel %vm349, %v346, %v348
    %v354 = vrot.slane %v51, 3
    %v355 = vrot.slane %v53, 3
    %v356 = vsel %vm90, %v354, %v355
    %357 = vrot.lane.b32.xlu0 %v93, 112
    %v358 = vpop.permute.xlu0 %357
    %359 = vrot.lane.b32.xlu0 %v356, 112
    %v360 = vpop.permute.xlu0 %359
    %vm361 = vcmask 916480
    %v362 = vsel %vm361, %v358, %v360
    %v366 = vrot.slane %v55, 1
    %v367 = vrot.slane %v57, 1
    %v368 = vsel %vm72, %v366, %v367
    %369 = vrot.lane.b32.xlu0 %v101, 16
    %v370 = vpop.permute.xlu0 %369
    %371 = vrot.lane.b32.xlu0 %v368, 16
    %v372 = vpop.permute.xlu0 %371
    %v373 = vsel %vm325, %v370, %v372
    %v377 = vrot.slane %v59, 2
    %v378 = vrot.slane %v61, 2
    %v379 = vsel %vm81, %v377, %v378
    %380 = vrot.lane.b32.xlu0 %v107, 48
    %v381 = vpop.permute.xlu0 %380
    %382 = vrot.lane.b32.xlu0 %v379, 48
    %v383 = vpop.permute.xlu0 %382
    %v384 = vsel %vm337, %v381, %v383
    %v388 = vrot.slane %v63, 3
    %v389 = vrot.slane %v65, 3
    %v390 = vsel %vm90, %v388, %v389
    %391 = vrot.lane.b32.xlu0 %v115, 80
    %v392 = vpop.permute.xlu0 %391
    %393 = vrot.lane.b32.xlu0 %v390, 80
    %v394 = vpop.permute.xlu0 %393
    %v395 = vsel %vm349, %v392, %v394
    %v399 = vrot.slane %v67, 4
    %v400 = vrot.slane %v69, 4
    %v401 = vsel %vm121, %v399, %v400
    %402 = vrot.lane.b32.xlu0 %v124, 112
    %v403 = vpop.permute.xlu0 %402
    %404 = vrot.lane.b32.xlu0 %v401, 112
    %v405 = vpop.permute.xlu0 %404
    %v406 = vsel %vm361, %v403, %v405
    %v408 = vsel %vm128, %v326, %v338
    %v409 = vsel %vm130, %v408, %v350
    %v410 = vsel %vm132, %v409, %v362
    %v411 = vsel %vm128, %v373, %v384
    %v412 = vsel %vm130, %v411, %v395
    %v413 = vsel %vm132, %v412, %v406
    %v414 = vpack.c.bf16 %v413, %v410
    %415 = vst [vmem:[#allocation2 + $0x38] sm:$0xff] %v414
    %v416 = vld [vmem:[%s0 + $0x40] sm:$0xf0]
    %v417 = vld [vmem:[%s0 + $0x48] sm:$0xf0]
    %v418 = vld [vmem:[%s0 + $0x50] sm:$0xf]
    %v419 = vld [vmem:[%s0 + $0x58] sm:$0xf]
    %v420 = vld [vmem:[%s0 + $0x50] sm:$0xe0]
    %v421 = vld [vmem:[%s0 + $0x58] sm:$0xe0]
    %v422 = vld [vmem:[%s0 + $0x60] sm:$0x1f]
    %v423 = vld [vmem:[%s0 + $0x68] sm:$0x1f]
    %v424 = vld [vmem:[%s0 + $0x60] sm:$0xc0]
    %v425 = vld [vmem:[%s0 + $0x68] sm:$0xc0]
    %v426 = vld [vmem:[%s0 + $0x70] sm:$0x3f]
    %v427 = vld [vmem:[%s0 + $0x78] sm:$0x3f]
    %v428 = vld [vmem:[%s0 + $0x70] sm:$0x80]
    %v429 = vld [vmem:[%s0 + $0x78] sm:$0x80]
    %v430 = vld [vmem:[%s0 + $0x80] sm:$0x7f]
    %v431 = vld [vmem:[%s0 + $0x88] sm:$0x7f]
    %v432 = vld [vmem:[%s0 + $0x40] sm:$0xe0]
    %v433 = vld [vmem:[%s0 + $0x48] sm:$0xe0]
    %v434 = vld [vmem:[%s0 + $0x50] sm:$0x1f]
    %v435 = vld [vmem:[%s0 + $0x58] sm:$0x1f]
    %v436 = vld [vmem:[%s0 + $0x50] sm:$0xc0]
    %v437 = vld [vmem:[%s0 + $0x58] sm:$0xc0]
    %v438 = vld [vmem:[%s0 + $0x60] sm:$0x3f]
    %v439 = vld [vmem:[%s0 + $0x68] sm:$0x3f]
    %v440 = vld [vmem:[%s0 + $0x60] sm:$0x80]
    %v441 = vld [vmem:[%s0 + $0x68] sm:$0x80]
    %v442 = vld [vmem:[%s0 + $0x70] sm:$0x7f]
    %v443 = vld [vmem:[%s0 + $0x78] sm:$0x7f]
    %v444 = vld [vmem:[%s0 + $0x80] sm:$0xff]
    %v445 = vld [vmem:[%s0 + $0x88] sm:$0xff]
    %v448 = vrot.slane %v420, 1
    %v449 = vrot.slane %v422, 1
    %v450 = vsel %vm72, %v448, %v449
    %451 = vrot.lane.b32.xlu0 %v450, 32
    %v452 = vpop.permute.xlu0 %451
    %453 = vrot.lane.b32.xlu0 %v449, 32
    %v454 = vpop.permute.xlu0 %453
    %v459 = vrot.slane %v424, 2
    %v460 = vrot.slane %v426, 2
    %v461 = vsel %vm81, %v459, %v460
    %462 = vrot.lane.b32.xlu0 %v461, 64
    %v463 = vpop.permute.xlu0 %462
    %464 = vrot.lane.b32.xlu0 %v460, 64
    %v465 = vpop.permute.xlu0 %464
    %v470 = vrot.slane %v428, 3
    %v471 = vrot.slane %v430, 3
    %v472 = vsel %vm90, %v470, %v471
    %473 = vrot.lane.b32.xlu0 %v472, 96
    %v474 = vpop.permute.xlu0 %473
    %475 = vrot.lane.b32.xlu0 %v471, 96
    %v476 = vpop.permute.xlu0 %475
    %v481 = vrot.slane %v432, 1
    %v482 = vrot.slane %v434, 1
    %v483 = vsel %vm72, %v481, %v482
    %v488 = vrot.slane %v436, 2
    %v489 = vrot.slane %v438, 2
    %v490 = vsel %vm81, %v488, %v489
    %491 = vrot.lane.b32.xlu0 %v490, 32
    %v492 = vpop.permute.xlu0 %491
    %493 = vrot.lane.b32.xlu0 %v489, 32
    %v494 = vpop.permute.xlu0 %493
    %v499 = vrot.slane %v440, 3
    %v500 = vrot.slane %v442, 3
    %v501 = vsel %vm90, %v499, %v500
    %502 = vrot.lane.b32.xlu0 %v501, 64
    %v503 = vpop.permute.xlu0 %502
    %504 = vrot.lane.b32.xlu0 %v500, 64
    %v505 = vpop.permute.xlu0 %504
    %v509 = vrot.slane %v444, 4
    %510 = vrot.lane.b32.xlu0 %v509, 96
    %v511 = vpop.permute.xlu0 %510
    %v513 = vsel %vm128, %v416, %v452
    %v514 = vsel %vm128, %v418, %v454
    %v515 = vsel %vm130, %v513, %v463
    %v516 = vsel %vm130, %v514, %v465
    %v517 = vsel %vm132, %v515, %v474
    %v518 = vsel %vm132, %v516, %v476
    %v519 = vsel %vm128, %v483, %v492
    %v520 = vsel %vm128, %v482, %v494
    %v521 = vsel %vm130, %v519, %v503
    %v522 = vsel %vm130, %v520, %v505
    %v523 = vsel %vm132, %v521, %v511
    %v524 = vsel %vm132, %v522, %v511
    %v525 = vpack.c.bf16 %v523, %v517
    %v526 = vpack.c.bf16 %v524, %v518
    %vm529 = vcmask 1041408
    %vm530 = vcmask 1045508
    %vm531 = vmor %vm529, %vm530
    %v532 = vrot.slane %v525, 6
    %v533 = vrot.slane %v532, 4
    %v534 = vrot.slane %v526, 6
    %v535 = vsel %vm531, %v533, %v534
    %537 = vst [vmem:[#allocation2 + $0x40] sm:$0xff] %v535
    %540 = vrot.lane.b32.xlu0 %v416, 112
    %v541 = vpop.permute.xlu0 %540
    %542 = vrot.lane.b32.xlu0 %v418, 112
    %v543 = vpop.permute.xlu0 %542
    %546 = vrot.lane.b32.xlu0 %v450, 16
    %v547 = vpop.permute.xlu0 %546
    %548 = vrot.lane.b32.xlu0 %v449, 16
    %v549 = vpop.permute.xlu0 %548
    %552 = vrot.lane.b32.xlu0 %v461, 48
    %v553 = vpop.permute.xlu0 %552
    %554 = vrot.lane.b32.xlu0 %v460, 48
    %v555 = vpop.permute.xlu0 %554
    %558 = vrot.lane.b32.xlu0 %v472, 80
    %v559 = vpop.permute.xlu0 %558
    %560 = vrot.lane.b32.xlu0 %v471, 80
    %v561 = vpop.permute.xlu0 %560
    %564 = vrot.lane.b32.xlu0 %v483, 112
    %v565 = vpop.permute.xlu0 %564
    %566 = vrot.lane.b32.xlu0 %v482, 112
    %v567 = vpop.permute.xlu0 %566
    %570 = vrot.lane.b32.xlu0 %v490, 16
    %v571 = vpop.permute.xlu0 %570
    %572 = vrot.lane.b32.xlu0 %v489, 16
    %v573 = vpop.permute.xlu0 %572
    %576 = vrot.lane.b32.xlu0 %v501, 48
    %v577 = vpop.permute.xlu0 %576
    %578 = vrot.lane.b32.xlu0 %v500, 48
    %v579 = vpop.permute.xlu0 %578
    %582 = vrot.lane.b32.xlu0 %v509, 80
    %v583 = vpop.permute.xlu0 %582
    %v585 = vsel %vm128, %v541, %v547
    %v586 = vsel %vm128, %v543, %v549
    %v587 = vsel %vm130, %v585, %v553
    %v588 = vsel %vm130, %v586, %v555
    %v589 = vsel %vm132, %v587, %v559
    %v590 = vsel %vm132, %v588, %v561
    %v591 = vsel %vm128, %v565, %v571
    %v592 = vsel %vm128, %v567, %v573
    %v593 = vsel %vm130, %v591, %v577
    %v594 = vsel %vm130, %v592, %v579
    %v595 = vsel %vm132, %v593, %v583
    %v596 = vsel %vm132, %v594, %v583
    %v597 = vpack.c.bf16 %v595, %v589
    %v598 = vpack.c.bf16 %v596, %v590
    %v601 = vrot.slane %v597, 6
    %v602 = vrot.slane %v601, 4
    %v603 = vrot.slane %v598, 6
    %v604 = vsel %vm531, %v602, %v603
    %606 = vst [vmem:[#allocation2 + $0x48] sm:$0xff] %v604
    %607 = vrot.lane.b32.xlu0 %v416, 96
    %v608 = vpop.permute.xlu0 %607
    %609 = vrot.lane.b32.xlu0 %v418, 96
    %v610 = vpop.permute.xlu0 %609
    %615 = vrot.lane.b32.xlu0 %v461, 32
    %v616 = vpop.permute.xlu0 %615
    %617 = vrot.lane.b32.xlu0 %v460, 32
    %v618 = vpop.permute.xlu0 %617
    %621 = vrot.lane.b32.xlu0 %v472, 64
    %v622 = vpop.permute.xlu0 %621
    %623 = vrot.lane.b32.xlu0 %v471, 64
    %v624 = vpop.permute.xlu0 %623
    %627 = vrot.lane.b32.xlu0 %v483, 96
    %v628 = vpop.permute.xlu0 %627
    %629 = vrot.lane.b32.xlu0 %v482, 96
    %v630 = vpop.permute.xlu0 %629
    %635 = vrot.lane.b32.xlu0 %v501, 32
    %v636 = vpop.permute.xlu0 %635
    %637 = vrot.lane.b32.xlu0 %v500, 32
    %v638 = vpop.permute.xlu0 %637
    %641 = vrot.lane.b32.xlu0 %v509, 64
    %v642 = vpop.permute.xlu0 %641
    %v644 = vsel %vm128, %v608, %v450
    %v645 = vsel %vm128, %v610, %v449
    %v646 = vsel %vm130, %v644, %v616
    %v647 = vsel %vm130, %v645, %v618
    %v648 = vsel %vm132, %v646, %v622
    %v649 = vsel %vm132, %v647, %v624
    %v650 = vsel %vm128, %v628, %v490
    %v651 = vsel %vm128, %v630, %v489
    %v652 = vsel %vm130, %v650, %v636
    %v653 = vsel %vm130, %v651, %v638
    %v654 = vsel %vm132, %v652, %v642
    %v655 = vsel %vm132, %v653, %v642
    %v656 = vpack.c.bf16 %v654, %v648
    %v657 = vpack.c.bf16 %v655, %v649
    %v660 = vrot.slane %v656, 6
    %v661 = vrot.slane %v660, 4
    %v662 = vrot.slane %v657, 6
    %v663 = vsel %vm531, %v661, %v662
    %665 = vst [vmem:[#allocation2 + $0x50] sm:$0xff] %v663
    %666 = vrot.lane.b32.xlu0 %v416, 80
    %v667 = vpop.permute.xlu0 %666
    %668 = vrot.lane.b32.xlu0 %v418, 80
    %v669 = vpop.permute.xlu0 %668
    %672 = vrot.lane.b32.xlu0 %v450, 112
    %v673 = vpop.permute.xlu0 %672
    %674 = vrot.lane.b32.xlu0 %v449, 112
    %v675 = vpop.permute.xlu0 %674
    %678 = vrot.lane.b32.xlu0 %v461, 16
    %v679 = vpop.permute.xlu0 %678
    %680 = vrot.lane.b32.xlu0 %v460, 16
    %v681 = vpop.permute.xlu0 %680
    %684 = vrot.lane.b32.xlu0 %v472, 48
    %v685 = vpop.permute.xlu0 %684
    %686 = vrot.lane.b32.xlu0 %v471, 48
    %v687 = vpop.permute.xlu0 %686
    %690 = vrot.lane.b32.xlu0 %v483, 80
    %v691 = vpop.permute.xlu0 %690
    %692 = vrot.lane.b32.xlu0 %v482, 80
    %v693 = vpop.permute.xlu0 %692
    %696 = vrot.lane.b32.xlu0 %v490, 112
    %v697 = vpop.permute.xlu0 %696
    %698 = vrot.lane.b32.xlu0 %v489, 112
    %v699 = vpop.permute.xlu0 %698
    %702 = vrot.lane.b32.xlu0 %v501, 16
    %v703 = vpop.permute.xlu0 %702
    %704 = vrot.lane.b32.xlu0 %v500, 16
    %v705 = vpop.permute.xlu0 %704
    %708 = vrot.lane.b32.xlu0 %v509, 48
    %v709 = vpop.permute.xlu0 %708
    %v711 = vsel %vm128, %v667, %v673
    %v712 = vsel %vm128, %v669, %v675
    %v713 = vsel %vm130, %v711, %v679
    %v714 = vsel %vm130, %v712, %v681
    %v715 = vsel %vm132, %v713, %v685
    %v716 = vsel %vm132, %v714, %v687
    %v717 = vsel %vm128, %v691, %v697
    %v718 = vsel %vm128, %v693, %v699
    %v719 = vsel %vm130, %v717, %v703
    %v720 = vsel %vm130, %v718, %v705
    %v721 = vsel %vm132, %v719, %v709
    %v722 = vsel %vm132, %v720, %v709
    %v723 = vpack.c.bf16 %v721, %v715
    %v724 = vpack.c.bf16 %v722, %v716
    %v727 = vrot.slane %v723, 6
    %v728 = vrot.slane %v727, 4
    %v729 = vrot.slane %v724, 6
    %v730 = vsel %vm531, %v728, %v729
    %732 = vst [vmem:[#allocation2 + $0x58] sm:$0xff] %v730
    %733 = vrot.lane.b32.xlu0 %v416, 64
    %v734 = vpop.permute.xlu0 %733
    %735 = vrot.lane.b32.xlu0 %v418, 64
    %v736 = vpop.permute.xlu0 %735
    %739 = vrot.lane.b32.xlu0 %v450, 96
    %v740 = vpop.permute.xlu0 %739
    %741 = vrot.lane.b32.xlu0 %v449, 96
    %v742 = vpop.permute.xlu0 %741
    %747 = vrot.lane.b32.xlu0 %v472, 32
    %v748 = vpop.permute.xlu0 %747
    %749 = vrot.lane.b32.xlu0 %v471, 32
    %v750 = vpop.permute.xlu0 %749
    %753 = vrot.lane.b32.xlu0 %v483, 64
    %v754 = vpop.permute.xlu0 %753
    %755 = vrot.lane.b32.xlu0 %v482, 64
    %v756 = vpop.permute.xlu0 %755
    %759 = vrot.lane.b32.xlu0 %v490, 96
    %v760 = vpop.permute.xlu0 %759
    %761 = vrot.lane.b32.xlu0 %v489, 96
    %v762 = vpop.permute.xlu0 %761
    %767 = vrot.lane.b32.xlu0 %v509, 32
    %v768 = vpop.permute.xlu0 %767
    %v770 = vsel %vm128, %v734, %v740
    %v771 = vsel %vm128, %v736, %v742
    %v772 = vsel %vm130, %v770, %v461
    %v773 = vsel %vm130, %v771, %v460
    %v774 = vsel %vm132, %v772, %v748
    %v775 = vsel %vm132, %v773, %v750
    %v776 = vsel %vm128, %v754, %v760
    %v777 = vsel %vm128, %v756, %v762
    %v778 = vsel %vm130, %v776, %v501
    %v779 = vsel %vm130, %v777, %v500
    %v780 = vsel %vm132, %v778, %v768
    %v781 = vsel %vm132, %v779, %v768
    %v782 = vpack.c.bf16 %v780, %v774
    %v783 = vpack.c.bf16 %v781, %v775
    %v786 = vrot.slane %v782, 6
    %v787 = vrot.slane %v786, 4
    %v788 = vrot.slane %v783, 6
    %v789 = vsel %vm531, %v787, %v788
    %791 = vst [vmem:[#allocation2 + $0x60] sm:$0xff] %v789
    %792 = vrot.lane.b32.xlu0 %v416, 48
    %v793 = vpop.permute.xlu0 %792
    %794 = vrot.lane.b32.xlu0 %v418, 48
    %v795 = vpop.permute.xlu0 %794
    %798 = vrot.lane.b32.xlu0 %v450, 80
    %v799 = vpop.permute.xlu0 %798
    %800 = vrot.lane.b32.xlu0 %v449, 80
    %v801 = vpop.permute.xlu0 %800
    %804 = vrot.lane.b32.xlu0 %v461, 112
    %v805 = vpop.permute.xlu0 %804
    %806 = vrot.lane.b32.xlu0 %v460, 112
    %v807 = vpop.permute.xlu0 %806
    %810 = vrot.lane.b32.xlu0 %v472, 16
    %v811 = vpop.permute.xlu0 %810
    %812 = vrot.lane.b32.xlu0 %v471, 16
    %v813 = vpop.permute.xlu0 %812
    %816 = vrot.lane.b32.xlu0 %v483, 48
    %v817 = vpop.permute.xlu0 %816
    %818 = vrot.lane.b32.xlu0 %v482, 48
    %v819 = vpop.permute.xlu0 %818
    %822 = vrot.lane.b32.xlu0 %v490, 80
    %v823 = vpop.permute.xlu0 %822
    %824 = vrot.lane.b32.xlu0 %v489, 80
    %v825 = vpop.permute.xlu0 %824
    %828 = vrot.lane.b32.xlu0 %v501, 112
    %v829 = vpop.permute.xlu0 %828
    %830 = vrot.lane.b32.xlu0 %v500, 112
    %v831 = vpop.permute.xlu0 %830
    %834 = vrot.lane.b32.xlu0 %v509, 16
    %v835 = vpop.permute.xlu0 %834
    %v837 = vsel %vm128, %v793, %v799
    %v838 = vsel %vm128, %v795, %v801
    %v839 = vsel %vm130, %v837, %v805
    %v840 = vsel %vm130, %v838, %v807
    %v841 = vsel %vm132, %v839, %v811
    %v842 = vsel %vm132, %v840, %v813
    %v843 = vsel %vm128, %v817, %v823
    %v844 = vsel %vm128, %v819, %v825
    %v845 = vsel %vm130, %v843, %v829
    %v846 = vsel %vm130, %v844, %v831
    %v847 = vsel %vm132, %v845, %v835
    %v848 = vsel %vm132, %v846, %v835
    %v849 = vpack.c.bf16 %v847, %v841
    %v850 = vpack.c.bf16 %v848, %v842
    %v853 = vrot.slane %v849, 6
    %v854 = vrot.slane %v853, 4
    %v855 = vrot.slane %v850, 6
    %v856 = vsel %vm531, %v854, %v855
    %858 = vst [vmem:[#allocation2 + $0x68] sm:$0xff] %v856
    %859 = vrot.lane.b32.xlu0 %v416, 32
    %v860 = vpop.permute.xlu0 %859
    %861 = vrot.lane.b32.xlu0 %v418, 32
    %v862 = vpop.permute.xlu0 %861
    %865 = vrot.lane.b32.xlu0 %v450, 64
    %v866 = vpop.permute.xlu0 %865
    %867 = vrot.lane.b32.xlu0 %v449, 64
    %v868 = vpop.permute.xlu0 %867
    %871 = vrot.lane.b32.xlu0 %v461, 96
    %v872 = vpop.permute.xlu0 %871
    %873 = vrot.lane.b32.xlu0 %v460, 96
    %v874 = vpop.permute.xlu0 %873
    %879 = vrot.lane.b32.xlu0 %v483, 32
    %v880 = vpop.permute.xlu0 %879
    %881 = vrot.lane.b32.xlu0 %v482, 32
    %v882 = vpop.permute.xlu0 %881
    %885 = vrot.lane.b32.xlu0 %v490, 64
    %v886 = vpop.permute.xlu0 %885
    %887 = vrot.lane.b32.xlu0 %v489, 64
    %v888 = vpop.permute.xlu0 %887
    %891 = vrot.lane.b32.xlu0 %v501, 96
    %v892 = vpop.permute.xlu0 %891
    %893 = vrot.lane.b32.xlu0 %v500, 96
    %v894 = vpop.permute.xlu0 %893
    %v898 = vsel %vm128, %v860, %v866
    %v899 = vsel %vm128, %v862, %v868
    %v900 = vsel %vm130, %v898, %v872
    %v901 = vsel %vm130, %v899, %v874
    %v902 = vsel %vm132, %v900, %v472
    %v903 = vsel %vm132, %v901, %v471
    %v904 = vsel %vm128, %v880, %v886
    %v905 = vsel %vm128, %v882, %v888
    %v906 = vsel %vm130, %v904, %v892
    %v907 = vsel %vm130, %v905, %v894
    %v908 = vsel %vm132, %v906, %v509
    %v909 = vsel %vm132, %v907, %v509
    %v910 = vpack.c.bf16 %v908, %v902
    %v911 = vpack.c.bf16 %v909, %v903
    %v914 = vrot.slane %v910, 6
    %v915 = vrot.slane %v914, 4
    %v916 = vrot.slane %v911, 6
    %v917 = vsel %vm531, %v915, %v916
    %919 = vst [vmem:[#allocation2 + $0x70] sm:$0xff] %v917
    %922 = vrot.lane.b32.xlu0 %v416, 16
    %v923 = vpop.permute.xlu0 %922
    %924 = vrot.lane.b32.xlu0 %v417, 16
    %v925 = vpop.permute.xlu0 %924
    %926 = vrot.lane.b32.xlu0 %v418, 16
    %v927 = vpop.permute.xlu0 %926
    %928 = vrot.lane.b32.xlu0 %v419, 16
    %v929 = vpop.permute.xlu0 %928
    %v930 = vsel %vm325, %v923, %v925
    %v931 = vsel %vm325, %v927, %v929
    %v936 = vrot.slane %v421, 1
    %v937 = vrot.slane %v423, 1
    %v938 = vsel %vm72, %v936, %v937
    %939 = vrot.lane.b32.xlu0 %v450, 48
    %v940 = vpop.permute.xlu0 %939
    %941 = vrot.lane.b32.xlu0 %v938, 48
    %v942 = vpop.permute.xlu0 %941
    %943 = vrot.lane.b32.xlu0 %v449, 48
    %v944 = vpop.permute.xlu0 %943
    %945 = vrot.lane.b32.xlu0 %v937, 48
    %v946 = vpop.permute.xlu0 %945
    %v947 = vsel %vm337, %v940, %v942
    %v948 = vsel %vm337, %v944, %v946
    %v953 = vrot.slane %v425, 2
    %v954 = vrot.slane %v427, 2
    %v955 = vsel %vm81, %v953, %v954
    %956 = vrot.lane.b32.xlu0 %v461, 80
    %v957 = vpop.permute.xlu0 %956
    %958 = vrot.lane.b32.xlu0 %v955, 80
    %v959 = vpop.permute.xlu0 %958
    %960 = vrot.lane.b32.xlu0 %v460, 80
    %v961 = vpop.permute.xlu0 %960
    %962 = vrot.lane.b32.xlu0 %v954, 80
    %v963 = vpop.permute.xlu0 %962
    %v964 = vsel %vm349, %v957, %v959
    %v965 = vsel %vm349, %v961, %v963
    %v970 = vrot.slane %v429, 3
    %v971 = vrot.slane %v431, 3
    %v972 = vsel %vm90, %v970, %v971
    %973 = vrot.lane.b32.xlu0 %v472, 112
    %v974 = vpop.permute.xlu0 %973
    %975 = vrot.lane.b32.xlu0 %v972, 112
    %v976 = vpop.permute.xlu0 %975
    %977 = vrot.lane.b32.xlu0 %v471, 112
    %v978 = vpop.permute.xlu0 %977
    %979 = vrot.lane.b32.xlu0 %v971, 112
    %v980 = vpop.permute.xlu0 %979
    %v981 = vsel %vm361, %v974, %v976
    %v982 = vsel %vm361, %v978, %v980
    %v987 = vrot.slane %v433, 1
    %v988 = vrot.slane %v435, 1
    %v989 = vsel %vm72, %v987, %v988
    %990 = vrot.lane.b32.xlu0 %v483, 16
    %v991 = vpop.permute.xlu0 %990
    %992 = vrot.lane.b32.xlu0 %v989, 16
    %v993 = vpop.permute.xlu0 %992
    %994 = vrot.lane.b32.xlu0 %v482, 16
    %v995 = vpop.permute.xlu0 %994
    %996 = vrot.lane.b32.xlu0 %v988, 16
    %v997 = vpop.permute.xlu0 %996
    %v998 = vsel %vm325, %v991, %v993
    %v999 = vsel %vm325, %v995, %v997
    %v1004 = vrot.slane %v437, 2
    %v1005 = vrot.slane %v439, 2
    %v1006 = vsel %vm81, %v1004, %v1005
    %1007 = vrot.lane.b32.xlu0 %v490, 48
    %v1008 = vpop.permute.xlu0 %1007
    %1009 = vrot.lane.b32.xlu0 %v1006, 48
    %v1010 = vpop.permute.xlu0 %1009
    %1011 = vrot.lane.b32.xlu0 %v489, 48
    %v1012 = vpop.permute.xlu0 %1011
    %1013 = vrot.lane.b32.xlu0 %v1005, 48
    %v1014 = vpop.permute.xlu0 %1013
    %v1015 = vsel %vm337, %v1008, %v1010
    %v1016 = vsel %vm337, %v1012, %v1014
    %v1021 = vrot.slane %v441, 3
    %v1022 = vrot.slane %v443, 3
    %v1023 = vsel %vm90, %v1021, %v1022
    %1024 = vrot.lane.b32.xlu0 %v501, 80
    %v1025 = vpop.permute.xlu0 %1024
    %1026 = vrot.lane.b32.xlu0 %v1023, 80
    %v1027 = vpop.permute.xlu0 %1026
    %1028 = vrot.lane.b32.xlu0 %v500, 80
    %v1029 = vpop.permute.xlu0 %1028
    %1030 = vrot.lane.b32.xlu0 %v1022, 80
    %v1031 = vpop.permute.xlu0 %1030
    %v1032 = vsel %vm349, %v1025, %v1027
    %v1033 = vsel %vm349, %v1029, %v1031
    %v1037 = vrot.slane %v445, 4
    %1038 = vrot.lane.b32.xlu0 %v509, 112
    %v1039 = vpop.permute.xlu0 %1038
    %1040 = vrot.lane.b32.xlu0 %v1037, 112
    %v1041 = vpop.permute.xlu0 %1040
    %v1042 = vsel %vm361, %v1039, %v1041
    %v1044 = vsel %vm128, %v930, %v947
    %v1045 = vsel %vm128, %v931, %v948
    %v1046 = vsel %vm130, %v1044, %v964
    %v1047 = vsel %vm130, %v1045, %v965
    %v1048 = vsel %vm132, %v1046, %v981
    %v1049 = vsel %vm132, %v1047, %v982
    %v1050 = vsel %vm128, %v998, %v1015
    %v1051 = vsel %vm128, %v999, %v1016
    %v1052 = vsel %vm130, %v1050, %v1032
    %v1053 = vsel %vm130, %v1051, %v1033
    %v1054 = vsel %vm132, %v1052, %v1042
    %v1055 = vsel %vm132, %v1053, %v1042
    %v1056 = vpack.c.bf16 %v1054, %v1048
    %v1057 = vpack.c.bf16 %v1055, %v1049
    %v1060 = vrot.slane %v1056, 6
    %v1061 = vrot.slane %v1060, 4
    %v1062 = vrot.slane %v1057, 6
    %v1063 = vsel %vm531, %v1061, %v1062
    %1065 = vst [vmem:[#allocation2 + $0x78] sm:$0xff] %v1063
    %v1066 = vld [vmem:[#allocation2] sm:$0xff]
    %v1067 = vld [vmem:[#allocation2 + $0x8] sm:$0xff]
    %v1068 = vld [vmem:[#allocation2 + $0x10] sm:$0xff]
    %v1069 = vld [vmem:[#allocation2 + $0x18] sm:$0xff]
    %v1070 = vld [vmem:[#allocation2 + $0x20] sm:$0xff]
    %v1071 = vld [vmem:[#allocation2 + $0x28] sm:$0xff]
    %v1072 = vld [vmem:[#allocation2 + $0x30] sm:$0xff]
    %v1073 = vld [vmem:[#allocation2 + $0x38] sm:$0xff]
    %v1074 = vld [vmem:[#allocation2 + $0x40] sm:$0xff]
    %v1075 = vld [vmem:[#allocation2 + $0x48] sm:$0xff]
    %v1076 = vld [vmem:[#allocation2 + $0x50] sm:$0xff]
    %v1077 = vld [vmem:[#allocation2 + $0x58] sm:$0xff]
    %v1078 = vld [vmem:[#allocation2 + $0x60] sm:$0xff]
    %v1079 = vld [vmem:[#allocation2 + $0x68] sm:$0xff]
    %v1080 = vld [vmem:[#allocation2 + $0x70] sm:$0xff]
    %v1081 = vld [vmem:[#allocation2 + $0x78] sm:$0xff]
    %v1082 = vld [vmem:[%s1] sm:$0xf]
    %v1083 = vld [vmem:[%s1 + $0x4] sm:$0xf]
    %v1084 = vld [vmem:[%s1 + $0x8] sm:$0xf]
    %v1085 = vld [vmem:[%s1 + $0xc] sm:$0xf]
    %v1086 = vld [vmem:[%s1 + $0x10] sm:$0xf]
    %v1087 = vld [vmem:[%s1 + $0x14] sm:$0xf]
    %v1088 = vld [vmem:[%s1 + $0x18] sm:$0xf]
    %v1089 = vld [vmem:[%s1 + $0x1c] sm:$0xf]
    %v1090 = vld [vmem:[%s1 + $0x20] sm:$0xf]
    %v1091 = vld [vmem:[%s1 + $0x24] sm:$0xf]
    %v1092 = vld [vmem:[%s1 + $0x28] sm:$0xf]
    %v1093 = vld [vmem:[%s1 + $0x2c] sm:$0xf]
    %v1094 = vld [vmem:[%s1 + $0x30] sm:$0xf]
    %v1095 = vld [vmem:[%s1 + $0x34] sm:$0xf]
    %v1096 = vld [vmem:[%s1 + $0x38] sm:$0xf]
    %v1097 = vld [vmem:[%s1 + $0x3c] sm:$0xf]
    %v1098 = vld [vmem:[%s1 + $0x40] sm:$0xf]
    %v1099 = vld [vmem:[%s1 + $0x44] sm:$0xf]
    %v1100 = vld [vmem:[%s1 + $0x48] sm:$0xf]
    %v1101 = vld [vmem:[%s1 + $0x4c] sm:$0xf]
    %v1102 = vld [vmem:[%s1 + $0x50] sm:$0xf]
    %v1103 = vld [vmem:[%s1 + $0x54] sm:$0xf]
    %v1104 = vld [vmem:[%s1 + $0x58] sm:$0xf]
    %v1105 = vld [vmem:[%s1 + $0x5c] sm:$0xf]
    %v1106 = vld [vmem:[%s1 + $0x60] sm:$0xf]
    %v1107 = vld [vmem:[%s1 + $0x64] sm:$0xf]
    %v1108 = vld [vmem:[%s1 + $0x68] sm:$0xf]
    %v1109 = vld [vmem:[%s1 + $0x6c] sm:$0xf]
    %v1110 = vld [vmem:[%s1 + $0x70] sm:$0xf]
    %v1111 = vld [vmem:[%s1 + $0x74] sm:$0xf]
    %v1112 = vld [vmem:[%s1 + $0x78] sm:$0xf]
    %v1113 = vld [vmem:[%s1 + $0x7c] sm:$0xf]
    %v1114 = vld [vmem:[%s2] sm:$0x1]
    %v1116 = vperm.slane %v1114, 0
    %v1134 = vunpack.c.l.b16 %v1066
    %v1135 = vunpack.c.h.b16 %v1066
    %v1136 = vunpack.c.l.b16 %v1067
    %v1137 = vunpack.c.h.b16 %v1067
    %v1138 = vunpack.c.l.b16 %v1068
    %v1139 = vunpack.c.h.b16 %v1068
    %v1140 = vunpack.c.l.b16 %v1069
    %v1141 = vunpack.c.h.b16 %v1069
    %v1142 = vunpack.c.l.b16 %v1070
    %v1143 = vunpack.c.h.b16 %v1070
    %v1144 = vunpack.c.l.b16 %v1071
    %v1145 = vunpack.c.h.b16 %v1071
    %v1146 = vunpack.c.l.b16 %v1072
    %v1147 = vunpack.c.h.b16 %v1072
    %v1148 = vunpack.c.l.b16 %v1073
    %v1149 = vunpack.c.h.b16 %v1073
    %v1150 = vunpack.c.l.b16 %v1074
    %v1151 = vunpack.c.h.b16 %v1074
    %v1152 = vunpack.c.l.b16 %v1075
    %v1153 = vunpack.c.h.b16 %v1075
    %v1154 = vunpack.c.l.b16 %v1076
    %v1155 = vunpack.c.h.b16 %v1076
    %v1156 = vunpack.c.l.b16 %v1077
    %v1157 = vunpack.c.h.b16 %v1077
    %v1158 = vunpack.c.l.b16 %v1078
    %v1159 = vunpack.c.h.b16 %v1078
    %v1160 = vunpack.c.l.b16 %v1079
    %v1161 = vunpack.c.h.b16 %v1079
    %v1162 = vunpack.c.l.b16 %v1080
    %v1163 = vunpack.c.h.b16 %v1080
    %v1164 = vunpack.c.l.b16 %v1081
    %v1165 = vunpack.c.h.b16 %v1081
    %v1166 = vpack.c.b16 %v1136, %v1134
    %v1167 = vpack.c.b16 %v1137, %v1135
    %v1168 = vpack.c.b16 %v1140, %v1138
    %v1169 = vpack.c.b16 %v1141, %v1139
    %v1170 = vpack.c.b16 %v1144, %v1142
    %v1171 = vpack.c.b16 %v1145, %v1143
    %v1172 = vpack.c.b16 %v1148, %v1146
    %v1173 = vpack.c.b16 %v1149, %v1147
    %v1174 = vpack.c.b16 %v1152, %v1150
    %v1175 = vpack.c.b16 %v1153, %v1151
    %v1176 = vpack.c.b16 %v1156, %v1154
    %v1177 = vpack.c.b16 %v1157, %v1155
    %v1178 = vpack.c.b16 %v1160, %v1158
    %v1179 = vpack.c.b16 %v1161, %v1159
    %v1180 = vpack.c.b16 %v1164, %v1162
    %v1181 = vpack.c.b16 %v1165, %v1163
    %v1230 = vunpack.c.l.b16 %v1082
    %v1231 = vunpack.c.l.b16 %v1083
    %v1232 = vunpack.c.l.b16 %v1084
    %v1233 = vunpack.c.l.b16 %v1085
    %v1234 = vunpack.c.l.b16 %v1086
    %v1235 = vunpack.c.l.b16 %v1087
    %v1236 = vunpack.c.l.b16 %v1088
    %v1237 = vunpack.c.l.b16 %v1089
    %v1238 = vunpack.c.l.b16 %v1090
    %v1239 = vunpack.c.l.b16 %v1091
    %v1240 = vunpack.c.l.b16 %v1092
    %v1241 = vunpack.c.l.b16 %v1093
    %v1242 = vunpack.c.l.b16 %v1094
    %v1243 = vunpack.c.l.b16 %v1095
    %v1244 = vunpack.c.l.b16 %v1096
    %v1245 = vunpack.c.l.b16 %v1097
    %v1246 = vunpack.c.l.b16 %v1098
    %v1247 = vunpack.c.l.b16 %v1099
    %v1248 = vunpack.c.l.b16 %v1100
    %v1249 = vunpack.c.l.b16 %v1101
    %v1250 = vunpack.c.l.b16 %v1102
    %v1251 = vunpack.c.l.b16 %v1103
    %v1252 = vunpack.c.l.b16 %v1104
    %v1253 = vunpack.c.l.b16 %v1105
    %v1254 = vunpack.c.l.b16 %v1106
    %v1255 = vunpack.c.l.b16 %v1107
    %v1256 = vunpack.c.l.b16 %v1108
    %v1257 = vunpack.c.l.b16 %v1109
    %v1258 = vunpack.c.l.b16 %v1110
    %v1259 = vunpack.c.l.b16 %v1111
    %v1260 = vunpack.c.l.b16 %v1112
    %v1261 = vunpack.c.l.b16 %v1113
    %v1262 = vpack.c.b16 %v1231, %v1230
    %v1263 = vpack.c.b16 %v1233, %v1232
    %v1264 = vpack.c.b16 %v1235, %v1234
    %v1265 = vpack.c.b16 %v1237, %v1236
    %v1266 = vpack.c.b16 %v1239, %v1238
    %v1267 = vpack.c.b16 %v1241, %v1240
    %v1268 = vpack.c.b16 %v1243, %v1242
    %v1269 = vpack.c.b16 %v1245, %v1244
    %v1270 = vpack.c.b16 %v1247, %v1246
    %v1271 = vpack.c.b16 %v1249, %v1248
    %v1272 = vpack.c.b16 %v1251, %v1250
    %v1273 = vpack.c.b16 %v1253, %v1252
    %v1274 = vpack.c.b16 %v1255, %v1254
    %v1275 = vpack.c.b16 %v1257, %v1256
    %v1276 = vpack.c.b16 %v1259, %v1258
    %v1277 = vpack.c.b16 %v1261, %v1260
    %1294 = vmatpush.bf16.msra.mxu0 %v1269
    %1295 = vmatpush.bf16.msra.mxu0 %v1268
    %1296 = vmatpush.bf16.msra.mxu0 %v1267
    %1297 = vmatpush.bf16.msra.mxu0 %v1266
    %1298 = vmatpush.bf16.msra.mxu0 %v1265
    %1299 = vmatpush.bf16.msra.mxu0 %v1264
    %1300 = vmatpush.bf16.msra.mxu0 %v1263
    %1301 = vmatpush.bf16.msra.mxu0 %v1262
    %1302 = vmatmul.bf16.gmra.mxu0 %v1166
    %v1303 = vpop.f32.mrf.mxu0
    %v1304 = vadd.f32 %v1116, %v1303
    %v1305 = vpop.f32.mrf.mxu0
    %v1306 = vadd.f32 %v1116, %v1305
    %1307 = vmatmul.bf16.gmra.mxu0 %v1168
    %v1308 = vpop.f32.mrf.mxu0
    %v1309 = vadd.f32 %v1116, %v1308
    %v1310 = vpop.f32.mrf.mxu0
    %v1311 = vadd.f32 %v1116, %v1310
    %1312 = vmatmul.bf16.gmra.mxu0 %v1170
    %v1313 = vpop.f32.mrf.mxu0
    %v1314 = vadd.f32 %v1116, %v1313
    %v1315 = vpop.f32.mrf.mxu0
    %v1316 = vadd.f32 %v1116, %v1315
    %1317 = vmatmul.bf16.gmra.mxu0 %v1172
    %v1318 = vpop.f32.mrf.mxu0
    %v1319 = vadd.f32 %v1116, %v1318
    %v1320 = vpop.f32.mrf.mxu0
    %v1321 = vadd.f32 %v1116, %v1320
    %1322 = vmatmul.bf16.gmra.mxu0 %v1174
    %v1323 = vpop.f32.mrf.mxu0
    %v1324 = vadd.f32 %v1116, %v1323
    %v1325 = vpop.f32.mrf.mxu0
    %v1326 = vadd.f32 %v1116, %v1325
    %1327 = vmatmul.bf16.gmra.mxu0 %v1176
    %v1328 = vpop.f32.mrf.mxu0
    %v1329 = vadd.f32 %v1116, %v1328
    %v1330 = vpop.f32.mrf.mxu0
    %v1331 = vadd.f32 %v1116, %v1330
    %1332 = vmatmul.bf16.gmra.mxu0 %v1178
    %v1333 = vpop.f32.mrf.mxu0
    %v1334 = vadd.f32 %v1116, %v1333
    %v1335 = vpop.f32.mrf.mxu0
    %v1336 = vadd.f32 %v1116, %v1335
    %1337 = vmatmul.bf16.gmra.mxu0 %v1180
    %v1338 = vpop.f32.mrf.mxu0
    %v1339 = vadd.f32 %v1116, %v1338
    %v1340 = vpop.f32.mrf.mxu0
    %v1341 = vadd.f32 %v1116, %v1340
    %1342 = vdwg.mxu0
    %1343 = vmatpush.bf16.msra.mxu0 %v1277
    %1344 = vmatpush.bf16.msra.mxu0 %v1276
    %1345 = vmatpush.bf16.msra.mxu0 %v1275
    %1346 = vmatpush.bf16.msra.mxu0 %v1274
    %1347 = vmatpush.bf16.msra.mxu0 %v1273
    %1348 = vmatpush.bf16.msra.mxu0 %v1272
    %1349 = vmatpush.bf16.msra.mxu0 %v1271
    %1350 = vmatpush.bf16.msra.mxu0 %v1270
    %1351 = vmatmul.bf16.gmra.mxu0 %v1167
    %v1352 = vpop.f32.mrf.mxu0
    %v1353 = vadd.f32 %v1304, %v1352
    %v1354 = vpop.f32.mrf.mxu0
    %v1355 = vadd.f32 %v1306, %v1354
    %1356 = vmatmul.bf16.gmra.mxu0 %v1169
    %v1357 = vpop.f32.mrf.mxu0
    %v1358 = vadd.f32 %v1309, %v1357
    %v1359 = vpop.f32.mrf.mxu0
    %v1360 = vadd.f32 %v1311, %v1359
    %1361 = vmatmul.bf16.gmra.mxu0 %v1171
    %v1362 = vpop.f32.mrf.mxu0
    %v1363 = vadd.f32 %v1314, %v1362
    %v1364 = vpop.f32.mrf.mxu0
    %v1365 = vadd.f32 %v1316, %v1364
    %1366 = vmatmul.bf16.gmra.mxu0 %v1173
    %v1367 = vpop.f32.mrf.mxu0
    %v1368 = vadd.f32 %v1319, %v1367
    %v1369 = vpop.f32.mrf.mxu0
    %v1370 = vadd.f32 %v1321, %v1369
    %1371 = vmatmul.bf16.gmra.mxu0 %v1175
    %v1372 = vpop.f32.mrf.mxu0
    %v1373 = vadd.f32 %v1324, %v1372
    %v1374 = vpop.f32.mrf.mxu0
    %v1375 = vadd.f32 %v1326, %v1374
    %1376 = vmatmul.bf16.gmra.mxu0 %v1177
    %v1377 = vpop.f32.mrf.mxu0
    %v1378 = vadd.f32 %v1329, %v1377
    %v1379 = vpop.f32.mrf.mxu0
    %v1380 = vadd.f32 %v1331, %v1379
    %1381 = vmatmul.bf16.gmra.mxu0 %v1179
    %v1382 = vpop.f32.mrf.mxu0
    %v1383 = vadd.f32 %v1334, %v1382
    %v1384 = vpop.f32.mrf.mxu0
    %v1385 = vadd.f32 %v1336, %v1384
    %1386 = vmatmul.bf16.gmra.mxu0 %v1181
    %v1387 = vpop.f32.mrf.mxu0
    %v1388 = vadd.f32 %v1339, %v1387
    %v1389 = vpop.f32.mrf.mxu0
    %v1390 = vadd.f32 %v1341, %v1389
    %1391 = vdwg.mxu0
    %v1392 = vmax.f32 %v1353, 0.0
    %v1393 = vmax.f32 %v1355, 0.0
    %v1394 = vmax.f32 %v1358, 0.0
    %v1395 = vmax.f32 %v1360, 0.0
    %v1396 = vmax.f32 %v1363, 0.0
    %v1397 = vmax.f32 %v1365, 0.0
    %v1398 = vmax.f32 %v1368, 0.0
    %v1399 = vmax.f32 %v1370, 0.0
    %v1400 = vmax.f32 %v1373, 0.0
    %v1401 = vmax.f32 %v1375, 0.0
    %v1402 = vmax.f32 %v1378, 0.0
    %v1403 = vmax.f32 %v1380, 0.0
    %v1404 = vmax.f32 %v1383, 0.0
    %v1405 = vmax.f32 %v1385, 0.0
    %v1406 = vmax.f32 %v1388, 0.0
    %v1407 = vmax.f32 %v1390, 0.0
    %1408 = vst.msk [vmem:[#allocation3] sm:$0xff] %vm128, %v1392
    %1409 = vst.msk [vmem:[#allocation3 + $0x8] sm:$0xff] %vm128, %v1393
    %1410 = vst.msk [vmem:[#allocation3 + $0x10] sm:$0xff] %vm128, %v1394
    %1411 = vst.msk [vmem:[#allocation3 + $0x18] sm:$0xff] %vm128, %v1395
    %1412 = vst.msk [vmem:[#allocation3 + $0x20] sm:$0xff] %vm128, %v1396
    %1413 = vst.msk [vmem:[#allocation3 + $0x28] sm:$0xff] %vm128, %v1397
    %1414 = vst.msk [vmem:[#allocation3 + $0x30] sm:$0xff] %vm128, %v1398
    %1415 = vst.msk [vmem:[#allocation3 + $0x38] sm:$0xff] %vm128, %v1399
    %1416 = vst.msk [vmem:[#allocation3 + $0x40] sm:$0xff] %vm128, %v1400
    %1417 = vst.msk [vmem:[#allocation3 + $0x48] sm:$0xff] %vm128, %v1401
    %1418 = vst.msk [vmem:[#allocation3 + $0x50] sm:$0xff] %vm128, %v1402
    %1419 = vst.msk [vmem:[#allocation3 + $0x58] sm:$0xff] %vm128, %v1403
    %1420 = vst.msk [vmem:[#allocation3 + $0x60] sm:$0xff] %vm128, %v1404
    %1421 = vst.msk [vmem:[#allocation3 + $0x68] sm:$0xff] %vm128, %v1405
    %1422 = vst.msk [vmem:[#allocation3 + $0x70] sm:$0xff] %vm128, %v1406
    %1423 = vst.msk [vmem:[#allocation3 + $0x78] sm:$0xff] %vm128, %v1407
    %v1424 = vld [vmem:[#allocation3] ss:$2 sm:$0x7]
    %s1425 = scalar_lea.vmem [#allocation3], 1
    %v1426 = vld [vmem:[%s1425] ss:$2 sm:$0x7]
    %s1427 = scalar_lea.vmem [#allocation3], 2
    %v1428 = vld [vmem:[%s1427] ss:$2 sm:$0x7]
    %s1429 = scalar_lea.vmem [#allocation3], 3
    %v1430 = vld [vmem:[%s1429] ss:$2 sm:$0x7]
    %s1431 = scalar_lea.vmem [#allocation3], 8
    %v1432 = vld [vmem:[%s1431] ss:$2 sm:$0x7]
    %s1433 = scalar_lea.vmem [#allocation3], 9
    %v1434 = vld [vmem:[%s1433] ss:$2 sm:$0x7]
    %s1435 = scalar_lea.vmem [#allocation3], 10
    %v1436 = vld [vmem:[%s1435] ss:$2 sm:$0x7]
    %s1437 = scalar_lea.vmem [#allocation3], 11
    %v1438 = vld [vmem:[%s1437] ss:$2 sm:$0x7]
    %s1439 = scalar_lea.vmem [#allocation3], 16
    %v1440 = vld [vmem:[%s1439] ss:$2 sm:$0x7]
    %s1441 = scalar_lea.vmem [#allocation3], 17
    %v1442 = vld [vmem:[%s1441] ss:$2 sm:$0x7]
    %s1443 = scalar_lea.vmem [#allocation3], 18
    %v1444 = vld [vmem:[%s1443] ss:$2 sm:$0x7]
    %s1445 = scalar_lea.vmem [#allocation3], 19
    %v1446 = vld [vmem:[%s1445] ss:$2 sm:$0x7]
    %s1447 = scalar_lea.vmem [#allocation3], 24
    %v1448 = vld [vmem:[%s1447] ss:$2 sm:$0x7]
    %s1449 = scalar_lea.vmem [#allocation3], 25
    %v1450 = vld [vmem:[%s1449] ss:$2 sm:$0x7]
    %s1451 = scalar_lea.vmem [#allocation3], 26
    %v1452 = vld [vmem:[%s1451] ss:$2 sm:$0x7]
    %s1453 = scalar_lea.vmem [#allocation3], 27
    %v1454 = vld [vmem:[%s1453] ss:$2 sm:$0x7]
    %1456 = vrot.lane.b32.xlu0 %v1426, 32
    %v1457 = vpop.permute.xlu0 %1456
    %1460 = vrot.lane.b32.xlu0 %v1428, 64
    %v1461 = vpop.permute.xlu0 %1460
    %1464 = vrot.lane.b32.xlu0 %v1430, 96
    %v1465 = vpop.permute.xlu0 %1464
    %1468 = vrot.lane.b32.xlu0 %v1434, 32
    %v1469 = vpop.permute.xlu0 %1468
    %1472 = vrot.lane.b32.xlu0 %v1436, 64
    %v1473 = vpop.permute.xlu0 %1472
    %1476 = vrot.lane.b32.xlu0 %v1438, 96
    %v1477 = vpop.permute.xlu0 %1476
    %1480 = vrot.lane.b32.xlu0 %v1442, 32
    %v1481 = vpop.permute.xlu0 %1480
    %1484 = vrot.lane.b32.xlu0 %v1444, 64
    %v1485 = vpop.permute.xlu0 %1484
    %1488 = vrot.lane.b32.xlu0 %v1446, 96
    %v1489 = vpop.permute.xlu0 %1488
    %1492 = vrot.lane.b32.xlu0 %v1450, 32
    %v1493 = vpop.permute.xlu0 %1492
    %1496 = vrot.lane.b32.xlu0 %v1452, 64
    %v1497 = vpop.permute.xlu0 %1496
    %1500 = vrot.lane.b32.xlu0 %v1454, 96
    %v1501 = vpop.permute.xlu0 %1500
    %v1503 = vsel %vm128, %v1424, %v1457
    %v1504 = vsel %vm130, %v1503, %v1461
    %v1505 = vsel %vm132, %v1504, %v1465
    %v1506 = vsel %vm128, %v1432, %v1469
    %v1507 = vsel %vm130, %v1506, %v1473
    %v1508 = vsel %vm132, %v1507, %v1477
    %v1509 = vsel %vm128, %v1440, %v1481
    %v1510 = vsel %vm130, %v1509, %v1485
    %v1511 = vsel %vm132, %v1510, %v1489
    %v1512 = vsel %vm128, %v1448, %v1493
    %v1513 = vsel %vm130, %v1512, %v1497
    %v1514 = vsel %vm132, %v1513, %v1501
    %1515 = vst [vmem:[#allocation4] sm:$0x7] %v1505
    %1516 = vst [vmem:[#allocation4 + $0x8] sm:$0x7] %v1508
    %1517 = vst [vmem:[#allocation4 + $0x10] sm:$0x7] %v1511
    %1518 = vst [vmem:[#allocation4 + $0x18] sm:$0x7] %v1514
    %v1519 = vld [vmem:[%s1439] ss:$2 sm:$0x7]
    %v1520 = vld [vmem:[%s1441] ss:$2 sm:$0x7]
    %v1521 = vld [vmem:[%s1443] ss:$2 sm:$0x7]
    %v1522 = vld [vmem:[%s1445] ss:$2 sm:$0x7]
    %v1523 = vld [vmem:[%s1447] ss:$2 sm:$0x7]
    %v1524 = vld [vmem:[%s1449] ss:$2 sm:$0x7]
    %v1525 = vld [vmem:[%s1451] ss:$2 sm:$0x7]
    %v1526 = vld [vmem:[%s1453] ss:$2 sm:$0x7]
    %s1527 = scalar_lea.vmem [#allocation3], 32
    %v1528 = vld [vmem:[%s1527] ss:$2 sm:$0x7]
    %s1529 = scalar_lea.vmem [#allocation3], 33
    %v1530 = vld [vmem:[%s1529] ss:$2 sm:$0x7]
    %s1531 = scalar_lea.vmem [#allocation3], 34
    %v1532 = vld [vmem:[%s1531] ss:$2 sm:$0x7]
    %s1533 = scalar_lea.vmem [#allocation3], 35
    %v1534 = vld [vmem:[%s1533] ss:$2 sm:$0x7]
    %s1535 = scalar_lea.vmem [#allocation3], 40
    %v1536 = vld [vmem:[%s1535] ss:$2 sm:$0x7]
    %s1537 = scalar_lea.vmem [#allocation3], 41
    %v1538 = vld [vmem:[%s1537] ss:$2 sm:$0x7]
    %s1539 = scalar_lea.vmem [#allocation3], 42
    %v1540 = vld [vmem:[%s1539] ss:$2 sm:$0x7]
    %s1541 = scalar_lea.vmem [#allocation3], 43
    %v1542 = vld [vmem:[%s1541] ss:$2 sm:$0x7]
    %1544 = vrot.lane.b32.xlu0 %v1520, 32
    %v1545 = vpop.permute.xlu0 %1544
    %1548 = vrot.lane.b32.xlu0 %v1521, 64
    %v1549 = vpop.permute.xlu0 %1548
    %1552 = vrot.lane.b32.xlu0 %v1522, 96
    %v1553 = vpop.permute.xlu0 %1552
    %1556 = vrot.lane.b32.xlu0 %v1524, 32
    %v1557 = vpop.permute.xlu0 %1556
    %1560 = vrot.lane.b32.xlu0 %v1525, 64
    %v1561 = vpop.permute.xlu0 %1560
    %1564 = vrot.lane.b32.xlu0 %v1526, 96
    %v1565 = vpop.permute.xlu0 %1564
    %1568 = vrot.lane.b32.xlu0 %v1530, 32
    %v1569 = vpop.permute.xlu0 %1568
    %1572 = vrot.lane.b32.xlu0 %v1532, 64
    %v1573 = vpop.permute.xlu0 %1572
    %1576 = vrot.lane.b32.xlu0 %v1534, 96
    %v1577 = vpop.permute.xlu0 %1576
    %1580 = vrot.lane.b32.xlu0 %v1538, 32
    %v1581 = vpop.permute.xlu0 %1580
    %1584 = vrot.lane.b32.xlu0 %v1540, 64
    %v1585 = vpop.permute.xlu0 %1584
    %1588 = vrot.lane.b32.xlu0 %v1542, 96
    %v1589 = vpop.permute.xlu0 %1588
    %v1591 = vsel %vm128, %v1519, %v1545
    %v1592 = vsel %vm130, %v1591, %v1549
    %v1593 = vsel %vm132, %v1592, %v1553
    %v1594 = vsel %vm128, %v1523, %v1557
    %v1595 = vsel %vm130, %v1594, %v1561
    %v1596 = vsel %vm132, %v1595, %v1565
    %v1597 = vsel %vm128, %v1528, %v1569
    %v1598 = vsel %vm130, %v1597, %v1573
    %v1599 = vsel %vm132, %v1598, %v1577
    %v1600 = vsel %vm128, %v1536, %v1581
    %v1601 = vsel %vm130, %v1600, %v1585
    %v1602 = vsel %vm132, %v1601, %v1589
    %v1607 = vrot.slane %v1593, 5
    %v1608 = vrot.slane %v1596, 5
    %v1609 = vrot.slane %v1599, 5
    %v1610 = vrot.slane %v1602, 5
    %1615 = vst [vmem:[#allocation4] sm:$0x38] %v1607
    %1616 = vst [vmem:[#allocation4 + $0x8] sm:$0x38] %v1608
    %1617 = vst [vmem:[#allocation4 + $0x10] sm:$0x38] %v1609
    %1618 = vst [vmem:[#allocation4 + $0x18] sm:$0x38] %v1610
    %v1619 = vld [vmem:[%s1527] ss:$2 sm:$0x7]
    %v1620 = vld [vmem:[%s1529] ss:$2 sm:$0x7]
    %v1621 = vld [vmem:[%s1531] ss:$2 sm:$0x7]
    %v1622 = vld [vmem:[%s1533] ss:$2 sm:$0x7]
    %v1623 = vld [vmem:[%s1535] ss:$2 sm:$0x7]
    %v1624 = vld [vmem:[%s1537] ss:$2 sm:$0x7]
    %v1625 = vld [vmem:[%s1539] ss:$2 sm:$0x7]
    %v1626 = vld [vmem:[%s1541] ss:$2 sm:$0x7]
    %s1627 = scalar_lea.vmem [#allocation3], 48
    %v1628 = vld [vmem:[%s1627] ss:$2 sm:$0x7]
    %s1629 = scalar_lea.vmem [#allocation3], 49
    %v1630 = vld [vmem:[%s1629] ss:$2 sm:$0x7]
    %s1631 = scalar_lea.vmem [#allocation3], 50
    %v1632 = vld [vmem:[%s1631] ss:$2 sm:$0x7]
    %s1633 = scalar_lea.vmem [#allocation3], 51
    %v1634 = vld [vmem:[%s1633] ss:$2 sm:$0x7]
    %s1635 = scalar_lea.vmem [#allocation3], 56
    %v1636 = vld [vmem:[%s1635] ss:$2 sm:$0x7]
    %s1637 = scalar_lea.vmem [#allocation3], 57
    %v1638 = vld [vmem:[%s1637] ss:$2 sm:$0x7]
    %s1639 = scalar_lea.vmem [#allocation3], 58
    %v1640 = vld [vmem:[%s1639] ss:$2 sm:$0x7]
    %s1641 = scalar_lea.vmem [#allocation3], 59
    %v1642 = vld [vmem:[%s1641] ss:$2 sm:$0x7]
    %1644 = vrot.lane.b32.xlu0 %v1620, 32
    %v1645 = vpop.permute.xlu0 %1644
    %1648 = vrot.lane.b32.xlu0 %v1621, 64
    %v1649 = vpop.permute.xlu0 %1648
    %1652 = vrot.lane.b32.xlu0 %v1622, 96
    %v1653 = vpop.permute.xlu0 %1652
    %1656 = vrot.lane.b32.xlu0 %v1624, 32
    %v1657 = vpop.permute.xlu0 %1656
    %1660 = vrot.lane.b32.xlu0 %v1625, 64
    %v1661 = vpop.permute.xlu0 %1660
    %1664 = vrot.lane.b32.xlu0 %v1626, 96
    %v1665 = vpop.permute.xlu0 %1664
    %1668 = vrot.lane.b32.xlu0 %v1630, 32
    %v1669 = vpop.permute.xlu0 %1668
    %1672 = vrot.lane.b32.xlu0 %v1632, 64
    %v1673 = vpop.permute.xlu0 %1672
    %1676 = vrot.lane.b32.xlu0 %v1634, 96
    %v1677 = vpop.permute.xlu0 %1676
    %1680 = vrot.lane.b32.xlu0 %v1638, 32
    %v1681 = vpop.permute.xlu0 %1680
    %1684 = vrot.lane.b32.xlu0 %v1640, 64
    %v1685 = vpop.permute.xlu0 %1684
    %1688 = vrot.lane.b32.xlu0 %v1642, 96
    %v1689 = vpop.permute.xlu0 %1688
    %v1691 = vsel %vm128, %v1619, %v1645
    %v1692 = vsel %vm130, %v1691, %v1649
    %v1693 = vsel %vm132, %v1692, %v1653
    %v1694 = vsel %vm128, %v1623, %v1657
    %v1695 = vsel %vm130, %v1694, %v1661
    %v1696 = vsel %vm132, %v1695, %v1665
    %v1697 = vsel %vm128, %v1628, %v1669
    %v1698 = vsel %vm130, %v1697, %v1673
    %v1699 = vsel %vm132, %v1698, %v1677
    %v1700 = vsel %vm128, %v1636, %v1681
    %v1701 = vsel %vm130, %v1700, %v1685
    %v1702 = vsel %vm132, %v1701, %v1689
    %v1707 = vrot.slane %v1693, 2
    %v1708 = vrot.slane %v1696, 2
    %v1709 = vrot.slane %v1699, 2
    %v1710 = vrot.slane %v1702, 2
    %1715 = vst [vmem:[#allocation4] sm:$0xc0] %v1707
    %1716 = vst [vmem:[#allocation4 + $0x8] sm:$0xc0] %v1708
    %1717 = vst [vmem:[#allocation4 + $0x10] sm:$0xc0] %v1709
    %1718 = vst [vmem:[#allocation4 + $0x18] sm:$0xc0] %v1710
    %1719 = vst [vmem:[#allocation4 + $0x20] sm:$0x1] %v1707
    %1720 = vst [vmem:[#allocation4 + $0x28] sm:$0x1] %v1708
    %1721 = vst [vmem:[#allocation4 + $0x30] sm:$0x1] %v1709
    %1722 = vst [vmem:[#allocation4 + $0x38] sm:$0x1] %v1710
    %s1723 = scalar_lea.vmem [#allocation3], 64
    %v1724 = vld [vmem:[%s1723] ss:$2 sm:$0x7]
    %s1725 = scalar_lea.vmem [#allocation3], 65
    %v1726 = vld [vmem:[%s1725] ss:$2 sm:$0x7]
    %s1727 = scalar_lea.vmem [#allocation3], 66
    %v1728 = vld [vmem:[%s1727] ss:$2 sm:$0x7]
    %s1729 = scalar_lea.vmem [#allocation3], 67
    %v1730 = vld [vmem:[%s1729] ss:$2 sm:$0x7]
    %s1731 = scalar_lea.vmem [#allocation3], 72
    %v1732 = vld [vmem:[%s1731] ss:$2 sm:$0x7]
    %s1733 = scalar_lea.vmem [#allocation3], 73
    %v1734 = vld [vmem:[%s1733] ss:$2 sm:$0x7]
    %s1735 = scalar_lea.vmem [#allocation3], 74
    %v1736 = vld [vmem:[%s1735] ss:$2 sm:$0x7]
    %s1737 = scalar_lea.vmem [#allocation3], 75
    %v1738 = vld [vmem:[%s1737] ss:$2 sm:$0x7]
    %s1739 = scalar_lea.vmem [#allocation3], 80
    %v1740 = vld [vmem:[%s1739] ss:$2 sm:$0x7]
    %s1741 = scalar_lea.vmem [#allocation3], 81
    %v1742 = vld [vmem:[%s1741] ss:$2 sm:$0x7]
    %s1743 = scalar_lea.vmem [#allocation3], 82
    %v1744 = vld [vmem:[%s1743] ss:$2 sm:$0x7]
    %s1745 = scalar_lea.vmem [#allocation3], 83
    %v1746 = vld [vmem:[%s1745] ss:$2 sm:$0x7]
    %s1747 = scalar_lea.vmem [#allocation3], 88
    %v1748 = vld [vmem:[%s1747] ss:$2 sm:$0x7]
    %s1749 = scalar_lea.vmem [#allocation3], 89
    %v1750 = vld [vmem:[%s1749] ss:$2 sm:$0x7]
    %s1751 = scalar_lea.vmem [#allocation3], 90
    %v1752 = vld [vmem:[%s1751] ss:$2 sm:$0x7]
    %s1753 = scalar_lea.vmem [#allocation3], 91
    %v1754 = vld [vmem:[%s1753] ss:$2 sm:$0x7]
    %1756 = vrot.lane.b32.xlu0 %v1726, 32
    %v1757 = vpop.permute.xlu0 %1756
    %1760 = vrot.lane.b32.xlu0 %v1728, 64
    %v1761 = vpop.permute.xlu0 %1760
    %1764 = vrot.lane.b32.xlu0 %v1730, 96
    %v1765 = vpop.permute.xlu0 %1764
    %1768 = vrot.lane.b32.xlu0 %v1734, 32
    %v1769 = vpop.permute.xlu0 %1768
    %1772 = vrot.lane.b32.xlu0 %v1736, 64
    %v1773 = vpop.permute.xlu0 %1772
    %1776 = vrot.lane.b32.xlu0 %v1738, 96
    %v1777 = vpop.permute.xlu0 %1776
    %1780 = vrot.lane.b32.xlu0 %v1742, 32
    %v1781 = vpop.permute.xlu0 %1780
    %1784 = vrot.lane.b32.xlu0 %v1744, 64
    %v1785 = vpop.permute.xlu0 %1784
    %1788 = vrot.lane.b32.xlu0 %v1746, 96
    %v1789 = vpop.permute.xlu0 %1788
    %1792 = vrot.lane.b32.xlu0 %v1750, 32
    %v1793 = vpop.permute.xlu0 %1792
    %1796 = vrot.lane.b32.xlu0 %v1752, 64
    %v1797 = vpop.permute.xlu0 %1796
    %1800 = vrot.lane.b32.xlu0 %v1754, 96
    %v1801 = vpop.permute.xlu0 %1800
    %v1803 = vsel %vm128, %v1724, %v1757
    %v1804 = vsel %vm130, %v1803, %v1761
    %v1805 = vsel %vm132, %v1804, %v1765
    %v1806 = vsel %vm128, %v1732, %v1769
    %v1807 = vsel %vm130, %v1806, %v1773
    %v1808 = vsel %vm132, %v1807, %v1777
    %v1809 = vsel %vm128, %v1740, %v1781
    %v1810 = vsel %vm130, %v1809, %v1785
    %v1811 = vsel %vm132, %v1810, %v1789
    %v1812 = vsel %vm128, %v1748, %v1793
    %v1813 = vsel %vm130, %v1812, %v1797
    %v1814 = vsel %vm132, %v1813, %v1801
    %v1819 = vrot.slane %v1805, 7
    %v1820 = vrot.slane %v1808, 7
    %v1821 = vrot.slane %v1811, 7
    %v1822 = vrot.slane %v1814, 7
    %1827 = vst [vmem:[#allocation4 + $0x20] sm:$0xe] %v1819
    %1828 = vst [vmem:[#allocation4 + $0x28] sm:$0xe] %v1820
    %1829 = vst [vmem:[#allocation4 + $0x30] sm:$0xe] %v1821
    %1830 = vst [vmem:[#allocation4 + $0x38] sm:$0xe] %v1822
    %v1831 = vld [vmem:[%s1739] ss:$2 sm:$0x7]
    %v1832 = vld [vmem:[%s1741] ss:$2 sm:$0x7]
    %v1833 = vld [vmem:[%s1743] ss:$2 sm:$0x7]
    %v1834 = vld [vmem:[%s1745] ss:$2 sm:$0x7]
    %v1835 = vld [vmem:[%s1747] ss:$2 sm:$0x7]
    %v1836 = vld [vmem:[%s1749] ss:$2 sm:$0x7]
    %v1837 = vld [vmem:[%s1751] ss:$2 sm:$0x7]
    %v1838 = vld [vmem:[%s1753] ss:$2 sm:$0x7]
    %s1839 = scalar_lea.vmem [#allocation3], 96
    %v1840 = vld [vmem:[%s1839] ss:$2 sm:$0x7]
    %s1841 = scalar_lea.vmem [#allocation3], 97
    %v1842 = vld [vmem:[%s1841] ss:$2 sm:$0x7]
    %s1843 = scalar_lea.vmem [#allocation3], 98
    %v1844 = vld [vmem:[%s1843] ss:$2 sm:$0x7]
    %s1845 = scalar_lea.vmem [#allocation3], 99
    %v1846 = vld [vmem:[%s1845] ss:$2 sm:$0x7]
    %s1847 = scalar_lea.vmem [#allocation3], 104
    %v1848 = vld [vmem:[%s1847] ss:$2 sm:$0x7]
    %s1849 = scalar_lea.vmem [#allocation3], 105
    %v1850 = vld [vmem:[%s1849] ss:$2 sm:$0x7]
    %s1851 = scalar_lea.vmem [#allocation3], 106
    %v1852 = vld [vmem:[%s1851] ss:$2 sm:$0x7]
    %s1853 = scalar_lea.vmem [#allocation3], 107
    %v1854 = vld [vmem:[%s1853] ss:$2 sm:$0x7]
    %1856 = vrot.lane.b32.xlu0 %v1832, 32
    %v1857 = vpop.permute.xlu0 %1856
    %1860 = vrot.lane.b32.xlu0 %v1833, 64
    %v1861 = vpop.permute.xlu0 %1860
    %1864 = vrot.lane.b32.xlu0 %v1834, 96
    %v1865 = vpop.permute.xlu0 %1864
    %1868 = vrot.lane.b32.xlu0 %v1836, 32
    %v1869 = vpop.permute.xlu0 %1868
    %1872 = vrot.lane.b32.xlu0 %v1837, 64
    %v1873 = vpop.permute.xlu0 %1872
    %1876 = vrot.lane.b32.xlu0 %v1838, 96
    %v1877 = vpop.permute.xlu0 %1876
    %1880 = vrot.lane.b32.xlu0 %v1842, 32
    %v1881 = vpop.permute.xlu0 %1880
    %1884 = vrot.lane.b32.xlu0 %v1844, 64
    %v1885 = vpop.permute.xlu0 %1884
    %1888 = vrot.lane.b32.xlu0 %v1846, 96
    %v1889 = vpop.permute.xlu0 %1888
    %1892 = vrot.lane.b32.xlu0 %v1850, 32
    %v1893 = vpop.permute.xlu0 %1892
    %1896 = vrot.lane.b32.xlu0 %v1852, 64
    %v1897 = vpop.permute.xlu0 %1896
    %1900 = vrot.lane.b32.xlu0 %v1854, 96
    %v1901 = vpop.permute.xlu0 %1900
    %v1903 = vsel %vm128, %v1831, %v1857
    %v1904 = vsel %vm130, %v1903, %v1861
    %v1905 = vsel %vm132, %v1904, %v1865
    %v1906 = vsel %vm128, %v1835, %v1869
    %v1907 = vsel %vm130, %v1906, %v1873
    %v1908 = vsel %vm132, %v1907, %v1877
    %v1909 = vsel %vm128, %v1840, %v1881
    %v1910 = vsel %vm130, %v1909, %v1885
    %v1911 = vsel %vm132, %v1910, %v1889
    %v1912 = vsel %vm128, %v1848, %v1893
    %v1913 = vsel %vm130, %v1912, %v1897
    %v1914 = vsel %vm132, %v1913, %v1901
    %v1919 = vrot.slane %v1905, 4
    %v1920 = vrot.slane %v1908, 4
    %v1921 = vrot.slane %v1911, 4
    %v1922 = vrot.slane %v1914, 4
    %1927 = vst [vmem:[#allocation4 + $0x20] sm:$0x70] %v1919
    %1928 = vst [vmem:[#allocation4 + $0x28] sm:$0x70] %v1920
    %1929 = vst [vmem:[#allocation4 + $0x30] sm:$0x70] %v1921
    %1930 = vst [vmem:[#allocation4 + $0x38] sm:$0x70] %v1922
    %v1931 = vld [vmem:[%s1839] ss:$2 sm:$0x7]
    %v1932 = vld [vmem:[%s1841] ss:$2 sm:$0x7]
    %v1933 = vld [vmem:[%s1843] ss:$2 sm:$0x7]
    %v1934 = vld [vmem:[%s1845] ss:$2 sm:$0x7]
    %v1935 = vld [vmem:[%s1847] ss:$2 sm:$0x7]
    %v1936 = vld [vmem:[%s1849] ss:$2 sm:$0x7]
    %v1937 = vld [vmem:[%s1851] ss:$2 sm:$0x7]
    %v1938 = vld [vmem:[%s1853] ss:$2 sm:$0x7]
    %s1939 = scalar_lea.vmem [#allocation3], 112
    %v1940 = vld [vmem:[%s1939] ss:$2 sm:$0x7]
    %s1941 = scalar_lea.vmem [#allocation3], 113
    %v1942 = vld [vmem:[%s1941] ss:$2 sm:$0x7]
    %s1943 = scalar_lea.vmem [#allocation3], 114
    %v1944 = vld [vmem:[%s1943] ss:$2 sm:$0x7]
    %s1945 = scalar_lea.vmem [#allocation3], 115
    %v1946 = vld [vmem:[%s1945] ss:$2 sm:$0x7]
    %s1947 = scalar_lea.vmem [#allocation3], 120
    %v1948 = vld [vmem:[%s1947] ss:$2 sm:$0x7]
    %s1949 = scalar_lea.vmem [#allocation3], 121
    %v1950 = vld [vmem:[%s1949] ss:$2 sm:$0x7]
    %s1951 = scalar_lea.vmem [#allocation3], 122
    %v1952 = vld [vmem:[%s1951] ss:$2 sm:$0x7]
    %s1953 = scalar_lea.vmem [#allocation3], 123
    %v1954 = vld [vmem:[%s1953] ss:$2 sm:$0x7]
    %1956 = vrot.lane.b32.xlu0 %v1932, 32
    %v1957 = vpop.permute.xlu0 %1956
    %1960 = vrot.lane.b32.xlu0 %v1933, 64
    %v1961 = vpop.permute.xlu0 %1960
    %1964 = vrot.lane.b32.xlu0 %v1934, 96
    %v1965 = vpop.permute.xlu0 %1964
    %1968 = vrot.lane.b32.xlu0 %v1936, 32
    %v1969 = vpop.permute.xlu0 %1968
    %1972 = vrot.lane.b32.xlu0 %v1937, 64
    %v1973 = vpop.permute.xlu0 %1972
    %1976 = vrot.lane.b32.xlu0 %v1938, 96
    %v1977 = vpop.permute.xlu0 %1976
    %1980 = vrot.lane.b32.xlu0 %v1942, 32
    %v1981 = vpop.permute.xlu0 %1980
    %1984 = vrot.lane.b32.xlu0 %v1944, 64
    %v1985 = vpop.permute.xlu0 %1984
    %1988 = vrot.lane.b32.xlu0 %v1946, 96
    %v1989 = vpop.permute.xlu0 %1988
    %1992 = vrot.lane.b32.xlu0 %v1950, 32
    %v1993 = vpop.permute.xlu0 %1992
    %1996 = vrot.lane.b32.xlu0 %v1952, 64
    %v1997 = vpop.permute.xlu0 %1996
    %2000 = vrot.lane.b32.xlu0 %v1954, 96
    %v2001 = vpop.permute.xlu0 %2000
    %v2003 = vsel %vm128, %v1931, %v1957
    %v2004 = vsel %vm130, %v2003, %v1961
    %v2005 = vsel %vm132, %v2004, %v1965
    %v2006 = vsel %vm128, %v1935, %v1969
    %v2007 = vsel %vm130, %v2006, %v1973
    %v2008 = vsel %vm132, %v2007, %v1977
    %v2009 = vsel %vm128, %v1940, %v1981
    %v2010 = vsel %vm130, %v2009, %v1985
    %v2011 = vsel %vm132, %v2010, %v1989
    %v2012 = vsel %vm128, %v1948, %v1993
    %v2013 = vsel %vm130, %v2012, %v1997
    %v2014 = vsel %vm132, %v2013, %v2001
    %v2019 = vrot.slane %v2005, 1
    %v2020 = vrot.slane %v2008, 1
    %v2021 = vrot.slane %v2011, 1
    %v2022 = vrot.slane %v2014, 1
    %2027 = vst [vmem:[#allocation4 + $0x20] sm:$0x80] %v2019
    %2028 = vst [vmem:[#allocation4 + $0x28] sm:$0x80] %v2020
    %2029 = vst [vmem:[#allocation4 + $0x30] sm:$0x80] %v2021
    %2030 = vst [vmem:[#allocation4 + $0x38] sm:$0x80] %v2022
    %2031 = vst [vmem:[#allocation4 + $0x40] sm:$0x3] %v2019
    %2032 = vst [vmem:[#allocation4 + $0x48] sm:$0x3] %v2020
    %2033 = vst [vmem:[#allocation4 + $0x50] sm:$0x3] %v2021
    %2034 = vst [vmem:[#allocation4 + $0x58] sm:$0x3] %v2022
    %v2035 = vld [vmem:[#allocation4] sm:$0xff]
    %v2036 = vld [vmem:[#allocation4 + $0x8] sm:$0xff]
    %v2037 = vld [vmem:[#allocation4 + $0x10] sm:$0xff]
    %v2038 = vld [vmem:[#allocation4 + $0x18] sm:$0xff]
    %v2039 = vld [vmem:[#allocation4 + $0x20] sm:$0xff]
    %v2040 = vld [vmem:[#allocation4 + $0x28] sm:$0xff]
    %v2041 = vld [vmem:[#allocation4 + $0x30] sm:$0xff]
    %v2042 = vld [vmem:[#allocation4 + $0x38] sm:$0xff]
    %v2043 = vld [vmem:[#allocation4 + $0x40] sm:$0x3]
    %v2044 = vld [vmem:[#allocation4 + $0x48] sm:$0x3]
    %v2045 = vld [vmem:[#allocation4 + $0x50] sm:$0x3]
    %v2046 = vld [vmem:[#allocation4 + $0x58] sm:$0x3]
    %v2047 = vpack.c.bf16 %v2039, %v2035
    %v2048 = vpack.c.bf16 %v2040, %v2036
    %v2049 = vpack.c.bf16 %v2041, %v2037
    %v2050 = vpack.c.bf16 %v2042, %v2038
    %v2051 = vpack.c.bf16 %v2043, %v2043
    %v2052 = vpack.c.bf16 %v2044, %v2044
    %v2053 = vpack.c.bf16 %v2045, %v2045
    %v2054 = vpack.c.bf16 %v2046, %v2046
    %v2055 = vld [vmem:[%s3] sm:$0xf]
    %v2056 = vld [vmem:[%s3 + $0x4] sm:$0xf]
    %v2057 = vld [vmem:[%s3 + $0x8] sm:$0xf]
    %v2058 = vld [vmem:[%s3 + $0xc] sm:$0xf]
    %v2059 = vld [vmem:[%s3 + $0x10] sm:$0xf]
    %v2060 = vld [vmem:[%s3 + $0x14] sm:$0xf]
    %v2061 = vld [vmem:[%s3 + $0x18] sm:$0xf]
    %v2062 = vld [vmem:[%s3 + $0x1c] sm:$0xf]
    %v2063 = vld [vmem:[%s3 + $0x20] sm:$0xf]
    %v2064 = vld [vmem:[%s3 + $0x24] sm:$0xf]
    %v2065 = vld [vmem:[%s3 + $0x28] sm:$0xf]
    %v2066 = vld [vmem:[%s3 + $0x2c] sm:$0xf]
    %v2067 = vld [vmem:[%s3 + $0x30] sm:$0xf]
    %v2068 = vld [vmem:[%s3 + $0x34] sm:$0xf]
    %v2069 = vld [vmem:[%s3 + $0x38] sm:$0xf]
    %v2070 = vld [vmem:[%s3 + $0x3c] sm:$0xf]
    %v2071 = vld [vmem:[%s3 + $0x40] sm:$0xf]
    %v2072 = vld [vmem:[%s3 + $0x44] sm:$0xf]
    %v2073 = vld [vmem:[%s3 + $0x48] sm:$0xf]
    %v2074 = vld [vmem:[%s3 + $0x4c] sm:$0xf]
    %v2075 = vld [vmem:[%s3 + $0x50] sm:$0xf]
    %v2076 = vld [vmem:[%s3 + $0x54] sm:$0xf]
    %v2077 = vld [vmem:[%s3 + $0x58] sm:$0xf]
    %v2078 = vld [vmem:[%s3 + $0x5c] sm:$0xf]
    %v2079 = vld [vmem:[%s3 + $0x60] sm:$0xf]
    %v2080 = vld [vmem:[%s3 + $0x64] sm:$0xf]
    %v2081 = vld [vmem:[%s3 + $0x68] sm:$0xf]
    %v2082 = vld [vmem:[%s3 + $0x6c] sm:$0xf]
    %v2083 = vld [vmem:[%s3 + $0x70] sm:$0xf]
    %v2084 = vld [vmem:[%s3 + $0x74] sm:$0xf]
    %v2085 = vld [vmem:[%s3 + $0x78] sm:$0xf]
    %v2086 = vld [vmem:[%s3 + $0x7c] sm:$0xf]
    %v2087 = vld [vmem:[%s3 + $0x80] sm:$0xf]
    %v2088 = vld [vmem:[%s3 + $0x84] sm:$0xf]
    %v2089 = vld [vmem:[%s3 + $0x88] sm:$0xf]
    %v2090 = vld [vmem:[%s3 + $0x8c] sm:$0xf]
    %v2091 = vld [vmem:[%s3 + $0x90] sm:$0xf]
    %v2092 = vld [vmem:[%s3 + $0x94] sm:$0xf]
    %v2093 = vld [vmem:[%s3 + $0x98] sm:$0xf]
    %v2094 = vld [vmem:[%s3 + $0x9c] sm:$0xf]
    %v2095 = vld [vmem:[%s3 + $0xa0] sm:$0xf]
    %v2096 = vld [vmem:[%s3 + $0xa4] sm:$0xf]
    %v2097 = vld [vmem:[%s3 + $0xa8] sm:$0xf]
    %v2098 = vld [vmem:[%s3 + $0xac] sm:$0xf]
    %v2099 = vld [vmem:[%s3 + $0xb0] sm:$0xf]
    %v2100 = vld [vmem:[%s3 + $0xb4] sm:$0xf]
    %v2101 = vld [vmem:[%s3 + $0xb8] sm:$0xf]
    %v2102 = vld [vmem:[%s3 + $0xbc] sm:$0xf]
    %v2103 = vld [vmem:[%s3 + $0xc0] sm:$0xf]
    %v2104 = vld [vmem:[%s3 + $0xc4] sm:$0xf]
    %v2105 = vld [vmem:[%s3 + $0xc8] sm:$0xf]
    %v2106 = vld [vmem:[%s3 + $0xcc] sm:$0xf]
    %v2107 = vld [vmem:[%s3 + $0xd0] sm:$0xf]
    %v2108 = vld [vmem:[%s3 + $0xd4] sm:$0xf]
    %v2109 = vld [vmem:[%s3 + $0xd8] sm:$0xf]
    %v2110 = vld [vmem:[%s3 + $0xdc] sm:$0xf]
    %v2111 = vld [vmem:[%s3 + $0xe0] sm:$0xf]
    %v2112 = vld [vmem:[%s3 + $0xe4] sm:$0xf]
    %v2113 = vld [vmem:[%s3 + $0xe8] sm:$0xf]
    %v2114 = vld [vmem:[%s3 + $0xec] sm:$0xf]
    %v2115 = vld [vmem:[%s3 + $0xf0] sm:$0xf]
    %v2116 = vld [vmem:[%s3 + $0xf4] sm:$0xf]
    %v2117 = vld [vmem:[%s3 + $0xf8] sm:$0xf]
    %v2118 = vld [vmem:[%s3 + $0xfc] sm:$0xf]
    %v2119 = vld [vmem:[%s4] sm:$0x1]
    %v2121 = vperm.slane %v2119, 0
    %v2187 = vunpack.c.l.b16 %v2055
    %v2188 = vunpack.c.l.b16 %v2056
    %v2189 = vunpack.c.l.b16 %v2057
    %v2190 = vunpack.c.l.b16 %v2058
    %v2191 = vunpack.c.l.b16 %v2059
    %v2192 = vunpack.c.l.b16 %v2060
    %v2193 = vunpack.c.l.b16 %v2061
    %v2194 = vunpack.c.l.b16 %v2062
    %v2195 = vunpack.c.l.b16 %v2063
    %v2196 = vunpack.c.l.b16 %v2064
    %v2197 = vunpack.c.l.b16 %v2065
    %v2198 = vunpack.c.l.b16 %v2066
    %v2199 = vunpack.c.l.b16 %v2067
    %v2200 = vunpack.c.l.b16 %v2068
    %v2201 = vunpack.c.l.b16 %v2069
    %v2202 = vunpack.c.l.b16 %v2070
    %v2203 = vunpack.c.l.b16 %v2071
    %v2204 = vunpack.c.l.b16 %v2072
    %v2205 = vunpack.c.l.b16 %v2073
    %v2206 = vunpack.c.l.b16 %v2074
    %v2207 = vunpack.c.l.b16 %v2075
    %v2208 = vunpack.c.l.b16 %v2076
    %v2209 = vunpack.c.l.b16 %v2077
    %v2210 = vunpack.c.l.b16 %v2078
    %v2211 = vunpack.c.l.b16 %v2079
    %v2212 = vunpack.c.l.b16 %v2080
    %v2213 = vunpack.c.l.b16 %v2081
    %v2214 = vunpack.c.l.b16 %v2082
    %v2215 = vunpack.c.l.b16 %v2083
    %v2216 = vunpack.c.l.b16 %v2084
    %v2217 = vunpack.c.l.b16 %v2085
    %v2218 = vunpack.c.l.b16 %v2086
    %v2219 = vunpack.c.l.b16 %v2087
    %v2220 = vunpack.c.l.b16 %v2088
    %v2221 = vunpack.c.l.b16 %v2089
    %v2222 = vunpack.c.l.b16 %v2090
    %v2223 = vunpack.c.l.b16 %v2091
    %v2224 = vunpack.c.l.b16 %v2092
    %v2225 = vunpack.c.l.b16 %v2093
    %v2226 = vunpack.c.l.b16 %v2094
    %v2227 = vunpack.c.l.b16 %v2095
    %v2228 = vunpack.c.l.b16 %v2096
    %v2229 = vunpack.c.l.b16 %v2097
    %v2230 = vunpack.c.l.b16 %v2098
    %v2231 = vunpack.c.l.b16 %v2099
    %v2232 = vunpack.c.l.b16 %v2100
    %v2233 = vunpack.c.l.b16 %v2101
    %v2234 = vunpack.c.l.b16 %v2102
    %v2235 = vunpack.c.l.b16 %v2103
    %v2236 = vunpack.c.l.b16 %v2104
    %v2237 = vunpack.c.l.b16 %v2105
    %v2238 = vunpack.c.l.b16 %v2106
    %v2239 = vunpack.c.l.b16 %v2107
    %v2240 = vunpack.c.l.b16 %v2108
    %v2241 = vunpack.c.l.b16 %v2109
    %v2242 = vunpack.c.l.b16 %v2110
    %v2243 = vunpack.c.l.b16 %v2111
    %v2244 = vunpack.c.l.b16 %v2112
    %v2245 = vunpack.c.l.b16 %v2113
    %v2246 = vunpack.c.l.b16 %v2114
    %v2247 = vunpack.c.l.b16 %v2115
    %v2248 = vunpack.c.l.b16 %v2116
    %v2249 = vunpack.c.l.b16 %v2117
    %v2250 = vunpack.c.l.b16 %v2118
    %v2251 = vpack.c.b16 %v2188, %v2187
    %v2252 = vpack.c.b16 %v2190, %v2189
    %v2253 = vpack.c.b16 %v2192, %v2191
    %v2254 = vpack.c.b16 %v2194, %v2193
    %v2255 = vpack.c.b16 %v2196, %v2195
    %v2256 = vpack.c.b16 %v2198, %v2197
    %v2257 = vpack.c.b16 %v2200, %v2199
    %v2258 = vpack.c.b16 %v2202, %v2201
    %v2259 = vpack.c.b16 %v2204, %v2203
    %v2260 = vpack.c.b16 %v2206, %v2205
    %v2261 = vpack.c.b16 %v2208, %v2207
    %v2262 = vpack.c.b16 %v2210, %v2209
    %v2263 = vpack.c.b16 %v2212, %v2211
    %v2264 = vpack.c.b16 %v2214, %v2213
    %v2265 = vpack.c.b16 %v2216, %v2215
    %v2266 = vpack.c.b16 %v2218, %v2217
    %v2267 = vpack.c.b16 %v2220, %v2219
    %v2268 = vpack.c.b16 %v2222, %v2221
    %v2269 = vpack.c.b16 %v2224, %v2223
    %v2270 = vpack.c.b16 %v2226, %v2225
    %v2271 = vpack.c.b16 %v2228, %v2227
    %v2272 = vpack.c.b16 %v2230, %v2229
    %v2273 = vpack.c.b16 %v2232, %v2231
    %v2274 = vpack.c.b16 %v2234, %v2233
    %v2275 = vpack.c.b16 %v2236, %v2235
    %v2276 = vpack.c.b16 %v2238, %v2237
    %v2277 = vpack.c.b16 %v2240, %v2239
    %v2278 = vpack.c.b16 %v2242, %v2241
    %v2279 = vpack.c.b16 %v2244, %v2243
    %v2280 = vpack.c.b16 %v2246, %v2245
    %v2281 = vpack.c.b16 %v2248, %v2247
    %v2282 = vpack.c.b16 %v2250, %v2249
    %2315 = vmatpush.bf16.msra.mxu0 %v2258
    %2316 = vmatpush.bf16.msra.mxu0 %v2257
    %2317 = vmatpush.bf16.msra.mxu0 %v2256
    %2318 = vmatpush.bf16.msra.mxu0 %v2255
    %2319 = vmatpush.bf16.msra.mxu0 %v2254
    %2320 = vmatpush.bf16.msra.mxu0 %v2253
    %2321 = vmatpush.bf16.msra.mxu0 %v2252
    %2322 = vmatpush.bf16.msra.mxu0 %v2251
    %2323 = vmatmul.bf16.gmra.mxu0 %v2047
    %v2324 = vpop.f32.mrf.mxu0
    %v2325 = vadd.f32 %v2121, %v2324
    %v2326 = vpop.f32.mrf.mxu0
    %v2327 = vadd.f32 %v2121, %v2326
    %2328 = vmatmul.bf16.gmra.mxu0 %v2051
    %v2329 = vpop.f32.mrf.mxu0
    %v2330 = vadd.f32 %v2121, %v2329
    %v2331 = vpop.f32.mrf.mxu0
    %2332 = vdwg.mxu0
    %2333 = vmatpush.bf16.msra.mxu0 %v2266
    %2334 = vmatpush.bf16.msra.mxu0 %v2265
    %2335 = vmatpush.bf16.msra.mxu0 %v2264
    %2336 = vmatpush.bf16.msra.mxu0 %v2263
    %2337 = vmatpush.bf16.msra.mxu0 %v2262
    %2338 = vmatpush.bf16.msra.mxu0 %v2261
    %2339 = vmatpush.bf16.msra.mxu0 %v2260
    %2340 = vmatpush.bf16.msra.mxu0 %v2259
    %2341 = vmatmul.bf16.gmra.mxu0 %v2048
    %v2342 = vpop.f32.mrf.mxu0
    %v2343 = vadd.f32 %v2325, %v2342
    %v2344 = vpop.f32.mrf.mxu0
    %v2345 = vadd.f32 %v2327, %v2344
    %2346 = vmatmul.bf16.gmra.mxu0 %v2052
    %v2347 = vpop.f32.mrf.mxu0
    %v2348 = vadd.f32 %v2330, %v2347
    %v2349 = vpop.f32.mrf.mxu0
    %2350 = vdwg.mxu0
    %2351 = vmatpush.bf16.msra.mxu0 %v2274
    %2352 = vmatpush.bf16.msra.mxu0 %v2273
    %2353 = vmatpush.bf16.msra.mxu0 %v2272
    %2354 = vmatpush.bf16.msra.mxu0 %v2271
    %2355 = vmatpush.bf16.msra.mxu0 %v2270
    %2356 = vmatpush.bf16.msra.mxu0 %v2269
    %2357 = vmatpush.bf16.msra.mxu0 %v2268
    %2358 = vmatpush.bf16.msra.mxu0 %v2267
    %2359 = vmatmul.bf16.gmra.mxu0 %v2049
    %v2360 = vpop.f32.mrf.mxu0
    %v2361 = vadd.f32 %v2343, %v2360
    %v2362 = vpop.f32.mrf.mxu0
    %v2363 = vadd.f32 %v2345, %v2362
    %2364 = vmatmul.bf16.gmra.mxu0 %v2053
    %v2365 = vpop.f32.mrf.mxu0
    %v2366 = vadd.f32 %v2348, %v2365
    %v2367 = vpop.f32.mrf.mxu0
    %2368 = vdwg.mxu0
    %2369 = vmatpush.bf16.msra.mxu0 %v2282
    %2370 = vmatpush.bf16.msra.mxu0 %v2281
    %2371 = vmatpush.bf16.msra.mxu0 %v2280
    %2372 = vmatpush.bf16.msra.mxu0 %v2279
    %2373 = vmatpush.bf16.msra.mxu0 %v2278
    %2374 = vmatpush.bf16.msra.mxu0 %v2277
    %2375 = vmatpush.bf16.msra.mxu0 %v2276
    %2376 = vmatpush.bf16.msra.mxu0 %v2275
    %2377 = vmatmul.bf16.gmra.mxu0 %v2050
    %v2378 = vpop.f32.mrf.mxu0
    %v2379 = vadd.f32 %v2361, %v2378
    %v2380 = vpop.f32.mrf.mxu0
    %v2381 = vadd.f32 %v2363, %v2380
    %2382 = vmatmul.bf16.gmra.mxu0 %v2054
    %v2383 = vpop.f32.mrf.mxu0
    %v2384 = vadd.f32 %v2366, %v2383
    %v2385 = vpop.f32.mrf.mxu0
    %2386 = vdwg.mxu0
    %v2387 = vmax.f32 %v2379, 0.0
    %v2388 = vmax.f32 %v2381, 0.0
    %v2389 = vmax.f32 %v2384, 0.0
    %2390 = vst.msk [vmem:[#allocation5] sm:$0xff] %vm130, %v2387
    %2391 = vst.msk [vmem:[#allocation5 + $0x8] sm:$0xff] %vm130, %v2388
    %vm2392 = vcmask 517120
    %2393 = vst.msk [vmem:[#allocation5 + $0x10] sm:$0x3] %vm2392, %v2389
    %v2394 = vld [vmem:[#allocation5] sm:$0x1]
    %v2395 = vld [vmem:[#allocation5 + $0x1] sm:$0x1]
    %v2396 = vld [vmem:[#allocation5 + $0x2] sm:$0x1]
    %v2397 = vld [vmem:[#allocation5 + $0x3] sm:$0x1]
    %v2398 = vld [vmem:[#allocation5 + $0x4] sm:$0x1]
    %v2399 = vld [vmem:[#allocation5 + $0x5] sm:$0x1]
    %v2400 = vld [vmem:[#allocation5 + $0x6] sm:$0x1]
    %v2401 = vld [vmem:[#allocation5 + $0x7] sm:$0x1]
    %v2402 = vld [vmem:[#allocation5 + $0x8] sm:$0x1]
    %2404 = vrot.lane.b32.xlu0 %v2395, 64
    %v2405 = vpop.permute.xlu0 %2404
    %2408 = vrot.lane.b32.xlu0 %v2397, 64
    %v2409 = vpop.permute.xlu0 %2408
    %2412 = vrot.lane.b32.xlu0 %v2399, 64
    %v2413 = vpop.permute.xlu0 %2412
    %2416 = vrot.lane.b32.xlu0 %v2401, 64
    %v2417 = vpop.permute.xlu0 %2416
    %v2419 = vsel %vm130, %v2394, %v2405
    %v2420 = vsel %vm130, %v2396, %v2409
    %v2421 = vsel %vm130, %v2398, %v2413
    %v2422 = vsel %vm130, %v2400, %v2417
    %v2428 = vrot.slane %v2420, 7
    %v2429 = vrot.slane %v2421, 6
    %v2430 = vrot.slane %v2422, 5
    %v2431 = vrot.slane %v2402, 4
    %vm2432 = vcmask 1040384
    %v2433 = vsel %vm2432, %v2419, %v2428
    %vm2434 = vcmask 1041408
    %v2435 = vsel %vm2434, %v2433, %v2429
    %vm2436 = vcmask 1043459
    %v2437 = vsel %vm2436, %v2430, %v2431
    %vm2438 = vcmask 1042432
    %v2439 = vsel %vm2438, %v2435, %v2437
    %v2441 = vlaneseq
    %vm2442 = vcmp.ge.s32.totalorder %v2441, 0
    %vm2443 = vcmp.lt.s32.totalorder %v2441, 576
    %vm2444 = vmand %vm2442, %vm2443
    %2445 = vst.msk [vmem:[#allocation6] ss:$2 sm:$0x1f] %vm2444, %v2439
    %v2446 = vld [vmem:[#allocation5 + $0x9] sm:$0x1]
    %v2447 = vld [vmem:[#allocation5 + $0xa] sm:$0x1]
    %v2448 = vld [vmem:[#allocation5 + $0xb] sm:$0x1]
    %v2449 = vld [vmem:[#allocation5 + $0xc] sm:$0x1]
    %v2450 = vld [vmem:[#allocation5 + $0xd] sm:$0x1]
    %v2451 = vld [vmem:[#allocation5 + $0xe] sm:$0x1]
    %v2452 = vld [vmem:[#allocation5 + $0xf] sm:$0x1]
    %v2453 = vld [vmem:[#allocation5 + $0x10] sm:$0x1]
    %v2454 = vld [vmem:[#allocation5 + $0x11] sm:$0x1]
    %2456 = vrot.lane.b32.xlu0 %v2447, 64
    %v2457 = vpop.permute.xlu0 %2456
    %2460 = vrot.lane.b32.xlu0 %v2449, 64
    %v2461 = vpop.permute.xlu0 %2460
    %2464 = vrot.lane.b32.xlu0 %v2451, 64
    %v2465 = vpop.permute.xlu0 %2464
    %2468 = vrot.lane.b32.xlu0 %v2453, 64
    %v2469 = vpop.permute.xlu0 %2468
    %v2471 = vsel %vm130, %v2446, %v2457
    %v2472 = vsel %vm130, %v2448, %v2461
    %v2473 = vsel %vm130, %v2450, %v2465
    %v2474 = vsel %vm130, %v2452, %v2469
    %v2480 = vrot.slane %v2472, 7
    %v2481 = vrot.slane %v2473, 6
    %v2482 = vrot.slane %v2474, 5
    %v2483 = vrot.slane %v2454, 4
    %v2484 = vsel %vm2432, %v2471, %v2480
    %v2485 = vsel %vm2434, %v2484, %v2481
    %v2486 = vsel %vm2436, %v2482, %v2483
    %v2487 = vsel %vm2438, %v2485, %v2486
    %s2489 = scalar_lea.vmem [#allocation6], 1
    %2490 = vst.msk [vmem:[%s2489] ss:$2 sm:$0x1f] %vm2444, %v2487
    %v2491 = vld [vmem:[#allocation6] sm:$0xff]
    %v2492 = vld [vmem:[#allocation6 + $0x8] sm:$0x3]
    %2495 = vst [vmem:[#allocation1] ss:$4 sm:$0xff] %v2491
    %s2496 = scalar_lea.vmem [#allocation1], 32
    %2497 = vst [vmem:[%s2496] ss:$4 sm:$0xff] %v2492
    %v2498 = vld.sshfl [vmem:[#allocation1] sm:$0xff pattern:$0x73625140]
    %v2499 = vld.sshfl [vmem:[#allocation1 + $0x8] sm:$0xff pattern:$0x73625140]
    %v2500 = vld.sshfl [vmem:[#allocation1 + $0x10] sm:$0xff pattern:$0x73625140]
    %v2501 = vld.sshfl [vmem:[#allocation1 + $0x18] sm:$0xff pattern:$0x73625140]
    %v2502 = vld.sshfl [vmem:[#allocation1 + $0x20] sm:$0xff pattern:$0x73625140]
    %v2508 = vpack.c.bf16 %v2498, %v2498
    %v2509 = vpack.c.bf16 %v2499, %v2499
    %v2510 = vpack.c.bf16 %v2500, %v2500
    %v2511 = vpack.c.bf16 %v2501, %v2501
    %v2512 = vpack.c.bf16 %v2502, %v2502
    %v2513 = vld [vmem:[%s5] sm:$0xf]
    %v2514 = vld [vmem:[%s5 + $0x4] sm:$0xf]
    %v2515 = vld [vmem:[%s5 + $0x8] sm:$0xf]
    %v2516 = vld [vmem:[%s5 + $0xc] sm:$0xf]
    %v2517 = vld [vmem:[%s5 + $0x10] sm:$0xf]
    %v2518 = vld [vmem:[%s5 + $0x14] sm:$0xf]
    %v2519 = vld [vmem:[%s5 + $0x18] sm:$0xf]
    %v2520 = vld [vmem:[%s5 + $0x1c] sm:$0xf]
    %v2521 = vld [vmem:[%s5 + $0x20] sm:$0xf]
    %v2522 = vld [vmem:[%s5 + $0x24] sm:$0xf]
    %v2523 = vld [vmem:[%s5 + $0x28] sm:$0xf]
    %v2524 = vld [vmem:[%s5 + $0x2c] sm:$0xf]
    %v2525 = vld [vmem:[%s5 + $0x30] sm:$0xf]
    %v2526 = vld [vmem:[%s5 + $0x34] sm:$0xf]
    %v2527 = vld [vmem:[%s5 + $0x38] sm:$0xf]
    %v2528 = vld [vmem:[%s5 + $0x3c] sm:$0xf]
    %v2529 = vld [vmem:[%s5 + $0x40] sm:$0xf]
    %v2530 = vld [vmem:[%s5 + $0x44] sm:$0xf]
    %v2531 = vld [vmem:[%s5 + $0x48] sm:$0xf]
    %v2532 = vld [vmem:[%s5 + $0x4c] sm:$0xf]
    %v2533 = vld [vmem:[%s5 + $0x50] sm:$0xf]
    %v2534 = vld [vmem:[%s5 + $0x54] sm:$0xf]
    %v2535 = vld [vmem:[%s5 + $0x58] sm:$0xf]
    %v2536 = vld [vmem:[%s5 + $0x5c] sm:$0xf]
    %v2537 = vld [vmem:[%s5 + $0x60] sm:$0xf]
    %v2538 = vld [vmem:[%s5 + $0x64] sm:$0xf]
    %v2539 = vld [vmem:[%s5 + $0x68] sm:$0xf]
    %v2540 = vld [vmem:[%s5 + $0x6c] sm:$0xf]
    %v2541 = vld [vmem:[%s5 + $0x70] sm:$0xf]
    %v2542 = vld [vmem:[%s5 + $0x74] sm:$0xf]
    %v2543 = vld [vmem:[%s5 + $0x78] sm:$0xf]
    %v2544 = vld [vmem:[%s5 + $0x7c] sm:$0xf]
    %v2545 = vld [vmem:[%s5 + $0x80] sm:$0xf]
    %v2546 = vld [vmem:[%s5 + $0x84] sm:$0xf]
    %v2547 = vld [vmem:[%s5 + $0x88] sm:$0xf]
    %v2548 = vld [vmem:[%s5 + $0x8c] sm:$0xf]
    %v2549 = vld [vmem:[%s5 + $0x90] sm:$0xf]
    %v2550 = vld [vmem:[%s5 + $0x94] sm:$0xf]
    %v2551 = vld [vmem:[%s5 + $0x98] sm:$0xf]
    %v2552 = vld [vmem:[%s5 + $0x9c] sm:$0xf]
    %v2553 = vld [vmem:[%s5 + $0xa0] sm:$0xf]
    %v2554 = vld [vmem:[%s5 + $0xa4] sm:$0xf]
    %v2555 = vld [vmem:[%s5 + $0xa8] sm:$0xf]
    %v2556 = vld [vmem:[%s5 + $0xac] sm:$0xf]
    %v2557 = vld [vmem:[%s5 + $0xb0] sm:$0xf]
    %v2558 = vld [vmem:[%s5 + $0xb4] sm:$0xf]
    %v2559 = vld [vmem:[%s5 + $0xb8] sm:$0xf]
    %v2560 = vld [vmem:[%s5 + $0xbc] sm:$0xf]
    %v2561 = vld [vmem:[%s5 + $0xc0] sm:$0xf]
    %v2562 = vld [vmem:[%s5 + $0xc4] sm:$0xf]
    %v2563 = vld [vmem:[%s5 + $0xc8] sm:$0xf]
    %v2564 = vld [vmem:[%s5 + $0xcc] sm:$0xf]
    %v2565 = vld [vmem:[%s5 + $0xd0] sm:$0xf]
    %v2566 = vld [vmem:[%s5 + $0xd4] sm:$0xf]
    %v2567 = vld [vmem:[%s5 + $0xd8] sm:$0xf]
    %v2568 = vld [vmem:[%s5 + $0xdc] sm:$0xf]
    %v2569 = vld [vmem:[%s5 + $0xe0] sm:$0xf]
    %v2570 = vld [vmem:[%s5 + $0xe4] sm:$0xf]
    %v2571 = vld [vmem:[%s5 + $0xe8] sm:$0xf]
    %v2572 = vld [vmem:[%s5 + $0xec] sm:$0xf]
    %v2573 = vld [vmem:[%s5 + $0xf0] sm:$0xf]
    %v2574 = vld [vmem:[%s5 + $0xf4] sm:$0xf]
    %v2575 = vld [vmem:[%s5 + $0xf8] sm:$0xf]
    %v2576 = vld [vmem:[%s5 + $0xfc] sm:$0xf]
    %v2577 = vld [vmem:[%s5 + $0x100] sm:$0xf]
    %v2578 = vld [vmem:[%s5 + $0x104] sm:$0xf]
    %v2579 = vld [vmem:[%s5 + $0x108] sm:$0xf]
    %v2580 = vld [vmem:[%s5 + $0x10c] sm:$0xf]
    %v2581 = vld [vmem:[%s5 + $0x110] sm:$0xf]
    %v2582 = vld [vmem:[%s5 + $0x114] sm:$0xf]
    %v2583 = vld [vmem:[%s5 + $0x118] sm:$0xf]
    %v2584 = vld [vmem:[%s5 + $0x11c] sm:$0xf]
    %v2585 = vld [vmem:[%s6] sm:$0x1]
    %v2587 = vperm.slane %v2585, 0
    %v2661 = vunpack.c.l.b16 %v2513
    %v2662 = vunpack.c.l.b16 %v2514
    %v2663 = vunpack.c.l.b16 %v2515
    %v2664 = vunpack.c.l.b16 %v2516
    %v2665 = vunpack.c.l.b16 %v2517
    %v2666 = vunpack.c.l.b16 %v2518
    %v2667 = vunpack.c.l.b16 %v2519
    %v2668 = vunpack.c.l.b16 %v2520
    %v2669 = vunpack.c.l.b16 %v2521
    %v2670 = vunpack.c.l.b16 %v2522
    %v2671 = vunpack.c.l.b16 %v2523
    %v2672 = vunpack.c.l.b16 %v2524
    %v2673 = vunpack.c.l.b16 %v2525
    %v2674 = vunpack.c.l.b16 %v2526
    %v2675 = vunpack.c.l.b16 %v2527
    %v2676 = vunpack.c.l.b16 %v2528
    %v2677 = vunpack.c.l.b16 %v2529
    %v2678 = vunpack.c.l.b16 %v2530
    %v2679 = vunpack.c.l.b16 %v2531
    %v2680 = vunpack.c.l.b16 %v2532
    %v2681 = vunpack.c.l.b16 %v2533
    %v2682 = vunpack.c.l.b16 %v2534
    %v2683 = vunpack.c.l.b16 %v2535
    %v2684 = vunpack.c.l.b16 %v2536
    %v2685 = vunpack.c.l.b16 %v2537
    %v2686 = vunpack.c.l.b16 %v2538
    %v2687 = vunpack.c.l.b16 %v2539
    %v2688 = vunpack.c.l.b16 %v2540
    %v2689 = vunpack.c.l.b16 %v2541
    %v2690 = vunpack.c.l.b16 %v2542
    %v2691 = vunpack.c.l.b16 %v2543
    %v2692 = vunpack.c.l.b16 %v2544
    %v2693 = vunpack.c.l.b16 %v2545
    %v2694 = vunpack.c.l.b16 %v2546
    %v2695 = vunpack.c.l.b16 %v2547
    %v2696 = vunpack.c.l.b16 %v2548
    %v2697 = vunpack.c.l.b16 %v2549
    %v2698 = vunpack.c.l.b16 %v2550
    %v2699 = vunpack.c.l.b16 %v2551
    %v2700 = vunpack.c.l.b16 %v2552
    %v2701 = vunpack.c.l.b16 %v2553
    %v2702 = vunpack.c.l.b16 %v2554
    %v2703 = vunpack.c.l.b16 %v2555
    %v2704 = vunpack.c.l.b16 %v2556
    %v2705 = vunpack.c.l.b16 %v2557
    %v2706 = vunpack.c.l.b16 %v2558
    %v2707 = vunpack.c.l.b16 %v2559
    %v2708 = vunpack.c.l.b16 %v2560
    %v2709 = vunpack.c.l.b16 %v2561
    %v2710 = vunpack.c.l.b16 %v2562
    %v2711 = vunpack.c.l.b16 %v2563
    %v2712 = vunpack.c.l.b16 %v2564
    %v2713 = vunpack.c.l.b16 %v2565
    %v2714 = vunpack.c.l.b16 %v2566
    %v2715 = vunpack.c.l.b16 %v2567
    %v2716 = vunpack.c.l.b16 %v2568
    %v2717 = vunpack.c.l.b16 %v2569
    %v2718 = vunpack.c.l.b16 %v2570
    %v2719 = vunpack.c.l.b16 %v2571
    %v2720 = vunpack.c.l.b16 %v2572
    %v2721 = vunpack.c.l.b16 %v2573
    %v2722 = vunpack.c.l.b16 %v2574
    %v2723 = vunpack.c.l.b16 %v2575
    %v2724 = vunpack.c.l.b16 %v2576
    %v2725 = vunpack.c.l.b16 %v2577
    %v2726 = vunpack.c.l.b16 %v2578
    %v2727 = vunpack.c.l.b16 %v2579
    %v2728 = vunpack.c.l.b16 %v2580
    %v2729 = vunpack.c.l.b16 %v2581
    %v2730 = vunpack.c.l.b16 %v2582
    %v2731 = vunpack.c.l.b16 %v2583
    %v2732 = vunpack.c.l.b16 %v2584
    %v2733 = vpack.c.b16 %v2662, %v2661
    %v2734 = vpack.c.b16 %v2664, %v2663
    %v2735 = vpack.c.b16 %v2666, %v2665
    %v2736 = vpack.c.b16 %v2668, %v2667
    %v2737 = vpack.c.b16 %v2670, %v2669
    %v2738 = vpack.c.b16 %v2672, %v2671
    %v2739 = vpack.c.b16 %v2674, %v2673
    %v2740 = vpack.c.b16 %v2676, %v2675
    %v2741 = vpack.c.b16 %v2678, %v2677
    %v2742 = vpack.c.b16 %v2680, %v2679
    %v2743 = vpack.c.b16 %v2682, %v2681
    %v2744 = vpack.c.b16 %v2684, %v2683
    %v2745 = vpack.c.b16 %v2686, %v2685
    %v2746 = vpack.c.b16 %v2688, %v2687
    %v2747 = vpack.c.b16 %v2690, %v2689
    %v2748 = vpack.c.b16 %v2692, %v2691
    %v2749 = vpack.c.b16 %v2694, %v2693
    %v2750 = vpack.c.b16 %v2696, %v2695
    %v2751 = vpack.c.b16 %v2698, %v2697
    %v2752 = vpack.c.b16 %v2700, %v2699
    %v2753 = vpack.c.b16 %v2702, %v2701
    %v2754 = vpack.c.b16 %v2704, %v2703
    %v2755 = vpack.c.b16 %v2706, %v2705
    %v2756 = vpack.c.b16 %v2708, %v2707
    %v2757 = vpack.c.b16 %v2710, %v2709
    %v2758 = vpack.c.b16 %v2712, %v2711
    %v2759 = vpack.c.b16 %v2714, %v2713
    %v2760 = vpack.c.b16 %v2716, %v2715
    %v2761 = vpack.c.b16 %v2718, %v2717
    %v2762 = vpack.c.b16 %v2720, %v2719
    %v2763 = vpack.c.b16 %v2722, %v2721
    %v2764 = vpack.c.b16 %v2724, %v2723
    %v2765 = vpack.c.b16 %v2726, %v2725
    %v2766 = vpack.c.b16 %v2728, %v2727
    %v2767 = vpack.c.b16 %v2730, %v2729
    %v2768 = vpack.c.b16 %v2732, %v2731
    %v2806 = vsel %vm130, %v2512, 0
    %2808 = vmatpush.bf16.msra.mxu0 %v2740
    %2809 = vmatpush.bf16.msra.mxu0 %v2739
    %2810 = vmatpush.bf16.msra.mxu0 %v2738
    %2811 = vmatpush.bf16.msra.mxu0 %v2737
    %2812 = vmatpush.bf16.msra.mxu0 %v2736
    %2813 = vmatpush.bf16.msra.mxu0 %v2735
    %2814 = vmatpush.bf16.msra.mxu0 %v2734
    %2815 = vmatpush.bf16.msra.mxu0 %v2733
    %2816 = vmatmul.bf16.gmra.mxu0 %v2508
    %v2817 = vpop.f32.mrf.mxu0
    %v2818 = vadd.f32 %v2587, %v2817
    %v2819 = vpop.f32.mrf.mxu0
    %2820 = vdwg.mxu0
    %2821 = vmatpush.bf16.msra.mxu0 %v2748
    %2822 = vmatpush.bf16.msra.mxu0 %v2747
    %2823 = vmatpush.bf16.msra.mxu0 %v2746
    %2824 = vmatpush.bf16.msra.mxu0 %v2745
    %2825 = vmatpush.bf16.msra.mxu0 %v2744
    %2826 = vmatpush.bf16.msra.mxu0 %v2743
    %2827 = vmatpush.bf16.msra.mxu0 %v2742
    %2828 = vmatpush.bf16.msra.mxu0 %v2741
    %2829 = vmatmul.bf16.gmra.mxu0 %v2509
    %v2830 = vpop.f32.mrf.mxu0
    %v2831 = vadd.f32 %v2818, %v2830
    %v2832 = vpop.f32.mrf.mxu0
    %2833 = vdwg.mxu0
    %2834 = vmatpush.bf16.msra.mxu0 %v2756
    %2835 = vmatpush.bf16.msra.mxu0 %v2755
    %2836 = vmatpush.bf16.msra.mxu0 %v2754
    %2837 = vmatpush.bf16.msra.mxu0 %v2753
    %2838 = vmatpush.bf16.msra.mxu0 %v2752
    %2839 = vmatpush.bf16.msra.mxu0 %v2751
    %2840 = vmatpush.bf16.msra.mxu0 %v2750
    %2841 = vmatpush.bf16.msra.mxu0 %v2749
    %2842 = vmatmul.bf16.gmra.mxu0 %v2510
    %v2843 = vpop.f32.mrf.mxu0
    %v2844 = vadd.f32 %v2831, %v2843
    %v2845 = vpop.f32.mrf.mxu0
    %2846 = vdwg.mxu0
    %2847 = vmatpush.bf16.msra.mxu0 %v2764
    %2848 = vmatpush.bf16.msra.mxu0 %v2763
    %2849 = vmatpush.bf16.msra.mxu0 %v2762
    %2850 = vmatpush.bf16.msra.mxu0 %v2761
    %2851 = vmatpush.bf16.msra.mxu0 %v2760
    %2852 = vmatpush.bf16.msra.mxu0 %v2759
    %2853 = vmatpush.bf16.msra.mxu0 %v2758
    %2854 = vmatpush.bf16.msra.mxu0 %v2757
    %2855 = vmatmul.bf16.gmra.mxu0 %v2511
    %v2856 = vpop.f32.mrf.mxu0
    %v2857 = vadd.f32 %v2844, %v2856
    %v2858 = vpop.f32.mrf.mxu0
    %2859 = vdwg.mxu0
    %2860 = vmatpush.bf16.msra.mxu0 0
    %2861 = vmatpush.bf16.msra.mxu0 0
    %2862 = vmatpush.bf16.msra.mxu0 0
    %2863 = vmatpush.bf16.msra.mxu0 0
    %2864 = vmatpush.bf16.msra.mxu0 %v2768
    %2865 = vmatpush.bf16.msra.mxu0 %v2767
    %2866 = vmatpush.bf16.msra.mxu0 %v2766
    %2867 = vmatpush.bf16.msra.mxu0 %v2765
    %2868 = vmatmul.bf16.gmra.mxu0 %v2806
    %v2869 = vpop.f32.mrf.mxu0
    %v2870 = vadd.f32 %v2857, %v2869
    %v2871 = vpop.f32.mrf.mxu0
    %2872 = vdwg.mxu0
    %v2873 = vmax.f32 %v2870, 0.0
    %2874 = vst.msk [vmem:[#allocation7] sm:$0x3] %vm2392, %v2873
    %v2875 = vld [vmem:[#allocation7] sm:$0x3]
    %v2876 = vpack.c.bf16 %v2875, %v2875
    %v2877 = vld [vmem:[%s7] sm:$0xff]
    %v2878 = vld [vmem:[%s7 + $0x8] sm:$0xff]
    %v2879 = vld [vmem:[%s7 + $0x10] sm:$0xff]
    %v2880 = vld [vmem:[%s7 + $0x18] sm:$0xff]
    %v2881 = vld [vmem:[%s7 + $0x20] sm:$0xff]
    %v2882 = vld [vmem:[%s7 + $0x28] sm:$0xff]
    %v2883 = vld [vmem:[%s7 + $0x30] sm:$0xff]
    %v2884 = vld [vmem:[%s7 + $0x38] sm:$0xff]
    %v2885 = vld [vmem:[%s7 + $0x40] sm:$0xff]
    %v2886 = vld [vmem:[%s7 + $0x48] sm:$0xff]
    %v2887 = vld [vmem:[%s7 + $0x50] sm:$0xff]
    %v2888 = vld [vmem:[%s7 + $0x58] sm:$0xff]
    %v2889 = vld [vmem:[%s7 + $0x60] sm:$0xff]
    %v2890 = vld [vmem:[%s7 + $0x68] sm:$0xff]
    %v2891 = vld [vmem:[%s7 + $0x70] sm:$0xff]
    %v2892 = vld [vmem:[%s7 + $0x78] sm:$0xff]
    %v2893 = vld [vmem:[%s8] sm:$0xf]
    %v2895 = vperm.slane %v2893, 0
    %v2896 = vperm.slane %v2893, 1
    %v2897 = vperm.slane %v2893, 2
    %v2898 = vperm.slane %v2893, 3
    %v2919 = vunpack.c.l.b16 %v2877
    %v2920 = vunpack.c.h.b16 %v2877
    %v2921 = vunpack.c.l.b16 %v2878
    %v2922 = vunpack.c.h.b16 %v2878
    %v2923 = vunpack.c.l.b16 %v2879
    %v2924 = vunpack.c.h.b16 %v2879
    %v2925 = vunpack.c.l.b16 %v2880
    %v2926 = vunpack.c.h.b16 %v2880
    %v2927 = vunpack.c.l.b16 %v2881
    %v2928 = vunpack.c.h.b16 %v2881
    %v2929 = vunpack.c.l.b16 %v2882
    %v2930 = vunpack.c.h.b16 %v2882
    %v2931 = vunpack.c.l.b16 %v2883
    %v2932 = vunpack.c.h.b16 %v2883
    %v2933 = vunpack.c.l.b16 %v2884
    %v2934 = vunpack.c.h.b16 %v2884
    %v2935 = vunpack.c.l.b16 %v2885
    %v2936 = vunpack.c.h.b16 %v2885
    %v2937 = vunpack.c.l.b16 %v2886
    %v2938 = vunpack.c.h.b16 %v2886
    %v2939 = vunpack.c.l.b16 %v2887
    %v2940 = vunpack.c.h.b16 %v2887
    %v2941 = vunpack.c.l.b16 %v2888
    %v2942 = vunpack.c.h.b16 %v2888
    %v2943 = vunpack.c.l.b16 %v2889
    %v2944 = vunpack.c.h.b16 %v2889
    %v2945 = vunpack.c.l.b16 %v2890
    %v2946 = vunpack.c.h.b16 %v2890
    %v2947 = vunpack.c.l.b16 %v2891
    %v2948 = vunpack.c.h.b16 %v2891
    %v2949 = vunpack.c.l.b16 %v2892
    %v2950 = vunpack.c.h.b16 %v2892
    %v2951 = vpack.c.b16 %v2923, %v2919
    %v2952 = vpack.c.b16 %v2924, %v2920
    %v2953 = vpack.c.b16 %v2925, %v2921
    %v2954 = vpack.c.b16 %v2926, %v2922
    %v2955 = vpack.c.b16 %v2931, %v2927
    %v2956 = vpack.c.b16 %v2932, %v2928
    %v2957 = vpack.c.b16 %v2933, %v2929
    %v2958 = vpack.c.b16 %v2934, %v2930
    %v2959 = vpack.c.b16 %v2939, %v2935
    %v2960 = vpack.c.b16 %v2940, %v2936
    %v2961 = vpack.c.b16 %v2941, %v2937
    %v2962 = vpack.c.b16 %v2942, %v2938
    %v2963 = vpack.c.b16 %v2947, %v2943
    %v2964 = vpack.c.b16 %v2948, %v2944
    %v2965 = vpack.c.b16 %v2949, %v2945
    %v2966 = vpack.c.b16 %v2950, %v2946
    %v2984 = vsel %vm130, %v2876, 0
    %2986 = vmatpush.bf16.msra.mxu0 0
    %2987 = vmatpush.bf16.msra.mxu0 0
    %2988 = vmatpush.bf16.msra.mxu0 0
    %2989 = vmatpush.bf16.msra.mxu0 0
    %2990 = vmatpush.bf16.msra.mxu0 %v2963
    %2991 = vmatpush.bf16.msra.mxu0 %v2959
    %2992 = vmatpush.bf16.msra.mxu0 %v2955
    %2993 = vmatpush.bf16.msra.mxu0 %v2951
    %2994 = vmatmul.bf16.gmra.mxu0 %v2984
    %v2995 = vpop.f32.mrf.mxu0
    %v2996 = vadd.f32 %v2895, %v2995
    %v2997 = vpop.f32.mrf.mxu0
    %2998 = vdwg.mxu0
    %2999 = vmatpush.bf16.msra.mxu0 0
    %3000 = vmatpush.bf16.msra.mxu0 0
    %3001 = vmatpush.bf16.msra.mxu0 0
    %3002 = vmatpush.bf16.msra.mxu0 0
    %3003 = vmatpush.bf16.msra.mxu0 %v2964
    %3004 = vmatpush.bf16.msra.mxu0 %v2960
    %3005 = vmatpush.bf16.msra.mxu0 %v2956
    %3006 = vmatpush.bf16.msra.mxu0 %v2952
    %3007 = vmatmul.bf16.gmra.mxu0 %v2984
    %v3008 = vpop.f32.mrf.mxu0
    %v3009 = vadd.f32 %v2896, %v3008
    %v3010 = vpop.f32.mrf.mxu0
    %3011 = vdwg.mxu0
    %3012 = vmatpush.bf16.msra.mxu0 0
    %3013 = vmatpush.bf16.msra.mxu0 0
    %3014 = vmatpush.bf16.msra.mxu0 0
    %3015 = vmatpush.bf16.msra.mxu0 0
    %3016 = vmatpush.bf16.msra.mxu0 %v2965
    %3017 = vmatpush.bf16.msra.mxu0 %v2961
    %3018 = vmatpush.bf16.msra.mxu0 %v2957
    %3019 = vmatpush.bf16.msra.mxu0 %v2953
    %3020 = vmatmul.bf16.gmra.mxu0 %v2984
    %v3021 = vpop.f32.mrf.mxu0
    %v3022 = vadd.f32 %v2897, %v3021
    %v3023 = vpop.f32.mrf.mxu0
    %3024 = vdwg.mxu0
    %3025 = vmatpush.bf16.msra.mxu0 0
    %3026 = vmatpush.bf16.msra.mxu0 0
    %3027 = vmatpush.bf16.msra.mxu0 0
    %3028 = vmatpush.bf16.msra.mxu0 0
    %3029 = vmatpush.bf16.msra.mxu0 %v2966
    %3030 = vmatpush.bf16.msra.mxu0 %v2962
    %3031 = vmatpush.bf16.msra.mxu0 %v2958
    %3032 = vmatpush.bf16.msra.mxu0 %v2954
    %3033 = vmatmul.bf16.gmra.mxu0 %v2984
    %v3034 = vpop.f32.mrf.mxu0
    %v3035 = vadd.f32 %v2898, %v3034
    %v3036 = vpop.f32.mrf.mxu0
    %3037 = vdwg.mxu0
    %v3038 = vmax.f32 %v2996, 0.0
    %v3039 = vmax.f32 %v3009, 0.0
    %v3040 = vmax.f32 %v3022, 0.0
    %v3041 = vmax.f32 %v3035, 0.0
    %v3042 = vpack.c.bf16 %v3038, %v3038
    %v3043 = vpack.c.bf16 %v3039, %v3039
    %v3044 = vpack.c.bf16 %v3040, %v3040
    %v3045 = vpack.c.bf16 %v3041, %v3041
    %v3046 = vld [vmem:[%s9] sm:$0xf]
    %v3047 = vld [vmem:[%s9 + $0x4] sm:$0xf]
    %v3048 = vld [vmem:[%s9 + $0x8] sm:$0xf]
    %v3049 = vld [vmem:[%s9 + $0xc] sm:$0xf]
    %v3050 = vld [vmem:[%s9 + $0x10] sm:$0xf]
    %v3051 = vld [vmem:[%s9 + $0x14] sm:$0xf]
    %v3052 = vld [vmem:[%s9 + $0x18] sm:$0xf]
    %v3053 = vld [vmem:[%s9 + $0x1c] sm:$0xf]
    %v3054 = vld [vmem:[%s9 + $0x20] sm:$0xf]
    %v3055 = vld [vmem:[%s9 + $0x24] sm:$0xf]
    %v3056 = vld [vmem:[%s9 + $0x28] sm:$0xf]
    %v3057 = vld [vmem:[%s9 + $0x2c] sm:$0xf]
    %v3058 = vld [vmem:[%s9 + $0x30] sm:$0xf]
    %v3059 = vld [vmem:[%s9 + $0x34] sm:$0xf]
    %v3060 = vld [vmem:[%s9 + $0x38] sm:$0xf]
    %v3061 = vld [vmem:[%s9 + $0x3c] sm:$0xf]
    %v3062 = vld [vmem:[%s9 + $0x40] sm:$0xf]
    %v3063 = vld [vmem:[%s9 + $0x44] sm:$0xf]
    %v3064 = vld [vmem:[%s9 + $0x48] sm:$0xf]
    %v3065 = vld [vmem:[%s9 + $0x4c] sm:$0xf]
    %v3066 = vld [vmem:[%s9 + $0x50] sm:$0xf]
    %v3067 = vld [vmem:[%s9 + $0x54] sm:$0xf]
    %v3068 = vld [vmem:[%s9 + $0x58] sm:$0xf]
    %v3069 = vld [vmem:[%s9 + $0x5c] sm:$0xf]
    %v3070 = vld [vmem:[%s9 + $0x60] sm:$0xf]
    %v3071 = vld [vmem:[%s9 + $0x64] sm:$0xf]
    %v3072 = vld [vmem:[%s9 + $0x68] sm:$0xf]
    %v3073 = vld [vmem:[%s9 + $0x6c] sm:$0xf]
    %v3074 = vld [vmem:[%s9 + $0x70] sm:$0xf]
    %v3075 = vld [vmem:[%s9 + $0x74] sm:$0xf]
    %v3076 = vld [vmem:[%s9 + $0x78] sm:$0xf]
    %v3077 = vld [vmem:[%s9 + $0x7c] sm:$0xf]
    %v3078 = vld [vmem:[%s9 + $0x80] sm:$0xf]
    %v3079 = vld [vmem:[%s9 + $0x84] sm:$0xf]
    %v3080 = vld [vmem:[%s9 + $0x88] sm:$0xf]
    %v3081 = vld [vmem:[%s9 + $0x8c] sm:$0xf]
    %v3082 = vld [vmem:[%s9 + $0x90] sm:$0xf]
    %v3083 = vld [vmem:[%s9 + $0x94] sm:$0xf]
    %v3084 = vld [vmem:[%s9 + $0x98] sm:$0xf]
    %v3085 = vld [vmem:[%s9 + $0x9c] sm:$0xf]
    %v3086 = vld [vmem:[%s9 + $0xa0] sm:$0xf]
    %v3087 = vld [vmem:[%s9 + $0xa4] sm:$0xf]
    %v3088 = vld [vmem:[%s9 + $0xa8] sm:$0xf]
    %v3089 = vld [vmem:[%s9 + $0xac] sm:$0xf]
    %v3090 = vld [vmem:[%s9 + $0xb0] sm:$0xf]
    %v3091 = vld [vmem:[%s9 + $0xb4] sm:$0xf]
    %v3092 = vld [vmem:[%s9 + $0xb8] sm:$0xf]
    %v3093 = vld [vmem:[%s9 + $0xbc] sm:$0xf]
    %v3094 = vld [vmem:[%s9 + $0xc0] sm:$0xf]
    %v3095 = vld [vmem:[%s9 + $0xc4] sm:$0xf]
    %v3096 = vld [vmem:[%s9 + $0xc8] sm:$0xf]
    %v3097 = vld [vmem:[%s9 + $0xcc] sm:$0xf]
    %v3098 = vld [vmem:[%s9 + $0xd0] sm:$0xf]
    %v3099 = vld [vmem:[%s9 + $0xd4] sm:$0xf]
    %v3100 = vld [vmem:[%s9 + $0xd8] sm:$0xf]
    %v3101 = vld [vmem:[%s9 + $0xdc] sm:$0xf]
    %v3102 = vld [vmem:[%s9 + $0xe0] sm:$0xf]
    %v3103 = vld [vmem:[%s9 + $0xe4] sm:$0xf]
    %v3104 = vld [vmem:[%s9 + $0xe8] sm:$0xf]
    %v3105 = vld [vmem:[%s9 + $0xec] sm:$0xf]
    %v3106 = vld [vmem:[%s9 + $0xf0] sm:$0xf]
    %v3107 = vld [vmem:[%s9 + $0xf4] sm:$0xf]
    %v3108 = vld [vmem:[%s9 + $0xf8] sm:$0xf]
    %v3109 = vld [vmem:[%s9 + $0xfc] sm:$0xf]
    %v3110 = vld [vmem:[%s10] sm:$0x1]
    %v3112 = vperm.slane %v3110, 0
    %v3178 = vunpack.c.l.b16 %v3046
    %v3179 = vunpack.c.l.b16 %v3047
    %v3180 = vunpack.c.l.b16 %v3048
    %v3181 = vunpack.c.l.b16 %v3049
    %v3182 = vunpack.c.l.b16 %v3050
    %v3183 = vunpack.c.l.b16 %v3051
    %v3184 = vunpack.c.l.b16 %v3052
    %v3185 = vunpack.c.l.b16 %v3053
    %v3186 = vunpack.c.l.b16 %v3054
    %v3187 = vunpack.c.l.b16 %v3055
    %v3188 = vunpack.c.l.b16 %v3056
    %v3189 = vunpack.c.l.b16 %v3057
    %v3190 = vunpack.c.l.b16 %v3058
    %v3191 = vunpack.c.l.b16 %v3059
    %v3192 = vunpack.c.l.b16 %v3060
    %v3193 = vunpack.c.l.b16 %v3061
    %v3194 = vunpack.c.l.b16 %v3062
    %v3195 = vunpack.c.l.b16 %v3063
    %v3196 = vunpack.c.l.b16 %v3064
    %v3197 = vunpack.c.l.b16 %v3065
    %v3198 = vunpack.c.l.b16 %v3066
    %v3199 = vunpack.c.l.b16 %v3067
    %v3200 = vunpack.c.l.b16 %v3068
    %v3201 = vunpack.c.l.b16 %v3069
    %v3202 = vunpack.c.l.b16 %v3070
    %v3203 = vunpack.c.l.b16 %v3071
    %v3204 = vunpack.c.l.b16 %v3072
    %v3205 = vunpack.c.l.b16 %v3073
    %v3206 = vunpack.c.l.b16 %v3074
    %v3207 = vunpack.c.l.b16 %v3075
    %v3208 = vunpack.c.l.b16 %v3076
    %v3209 = vunpack.c.l.b16 %v3077
    %v3210 = vunpack.c.l.b16 %v3078
    %v3211 = vunpack.c.l.b16 %v3079
    %v3212 = vunpack.c.l.b16 %v3080
    %v3213 = vunpack.c.l.b16 %v3081
    %v3214 = vunpack.c.l.b16 %v3082
    %v3215 = vunpack.c.l.b16 %v3083
    %v3216 = vunpack.c.l.b16 %v3084
    %v3217 = vunpack.c.l.b16 %v3085
    %v3218 = vunpack.c.l.b16 %v3086
    %v3219 = vunpack.c.l.b16 %v3087
    %v3220 = vunpack.c.l.b16 %v3088
    %v3221 = vunpack.c.l.b16 %v3089
    %v3222 = vunpack.c.l.b16 %v3090
    %v3223 = vunpack.c.l.b16 %v3091
    %v3224 = vunpack.c.l.b16 %v3092
    %v3225 = vunpack.c.l.b16 %v3093
    %v3226 = vunpack.c.l.b16 %v3094
    %v3227 = vunpack.c.l.b16 %v3095
    %v3228 = vunpack.c.l.b16 %v3096
    %v3229 = vunpack.c.l.b16 %v3097
    %v3230 = vunpack.c.l.b16 %v3098
    %v3231 = vunpack.c.l.b16 %v3099
    %v3232 = vunpack.c.l.b16 %v3100
    %v3233 = vunpack.c.l.b16 %v3101
    %v3234 = vunpack.c.l.b16 %v3102
    %v3235 = vunpack.c.l.b16 %v3103
    %v3236 = vunpack.c.l.b16 %v3104
    %v3237 = vunpack.c.l.b16 %v3105
    %v3238 = vunpack.c.l.b16 %v3106
    %v3239 = vunpack.c.l.b16 %v3107
    %v3240 = vunpack.c.l.b16 %v3108
    %v3241 = vunpack.c.l.b16 %v3109
    %v3242 = vpack.c.b16 %v3179, %v3178
    %v3243 = vpack.c.b16 %v3181, %v3180
    %v3244 = vpack.c.b16 %v3183, %v3182
    %v3245 = vpack.c.b16 %v3185, %v3184
    %v3246 = vpack.c.b16 %v3187, %v3186
    %v3247 = vpack.c.b16 %v3189, %v3188
    %v3248 = vpack.c.b16 %v3191, %v3190
    %v3249 = vpack.c.b16 %v3193, %v3192
    %v3250 = vpack.c.b16 %v3195, %v3194
    %v3251 = vpack.c.b16 %v3197, %v3196
    %v3252 = vpack.c.b16 %v3199, %v3198
    %v3253 = vpack.c.b16 %v3201, %v3200
    %v3254 = vpack.c.b16 %v3203, %v3202
    %v3255 = vpack.c.b16 %v3205, %v3204
    %v3256 = vpack.c.b16 %v3207, %v3206
    %v3257 = vpack.c.b16 %v3209, %v3208
    %v3258 = vpack.c.b16 %v3211, %v3210
    %v3259 = vpack.c.b16 %v3213, %v3212
    %v3260 = vpack.c.b16 %v3215, %v3214
    %v3261 = vpack.c.b16 %v3217, %v3216
    %v3262 = vpack.c.b16 %v3219, %v3218
    %v3263 = vpack.c.b16 %v3221, %v3220
    %v3264 = vpack.c.b16 %v3223, %v3222
    %v3265 = vpack.c.b16 %v3225, %v3224
    %v3266 = vpack.c.b16 %v3227, %v3226
    %v3267 = vpack.c.b16 %v3229, %v3228
    %v3268 = vpack.c.b16 %v3231, %v3230
    %v3269 = vpack.c.b16 %v3233, %v3232
    %v3270 = vpack.c.b16 %v3235, %v3234
    %v3271 = vpack.c.b16 %v3237, %v3236
    %v3272 = vpack.c.b16 %v3239, %v3238
    %v3273 = vpack.c.b16 %v3241, %v3240
    %3306 = vmatpush.bf16.msra.mxu0 %v3249
    %3307 = vmatpush.bf16.msra.mxu0 %v3248
    %3308 = vmatpush.bf16.msra.mxu0 %v3247
    %3309 = vmatpush.bf16.msra.mxu0 %v3246
    %3310 = vmatpush.bf16.msra.mxu0 %v3245
    %3311 = vmatpush.bf16.msra.mxu0 %v3244
    %3312 = vmatpush.bf16.msra.mxu0 %v3243
    %3313 = vmatpush.bf16.msra.mxu0 %v3242
    %3314 = vmatmul.bf16.gmra.mxu0 %v3042
    %v3315 = vpop.f32.mrf.mxu0
    %v3316 = vadd.f32 %v3112, %v3315
    %v3317 = vpop.f32.mrf.mxu0
    %3318 = vdwg.mxu0
    %3319 = vmatpush.bf16.msra.mxu0 %v3257
    %3320 = vmatpush.bf16.msra.mxu0 %v3256
    %3321 = vmatpush.bf16.msra.mxu0 %v3255
    %3322 = vmatpush.bf16.msra.mxu0 %v3254
    %3323 = vmatpush.bf16.msra.mxu0 %v3253
    %3324 = vmatpush.bf16.msra.mxu0 %v3252
    %3325 = vmatpush.bf16.msra.mxu0 %v3251
    %3326 = vmatpush.bf16.msra.mxu0 %v3250
    %3327 = vmatmul.bf16.gmra.mxu0 %v3043
    %v3328 = vpop.f32.mrf.mxu0
    %v3329 = vadd.f32 %v3316, %v3328
    %v3330 = vpop.f32.mrf.mxu0
    %3331 = vdwg.mxu0
    %3332 = vmatpush.bf16.msra.mxu0 %v3265
    %3333 = vmatpush.bf16.msra.mxu0 %v3264
    %3334 = vmatpush.bf16.msra.mxu0 %v3263
    %3335 = vmatpush.bf16.msra.mxu0 %v3262
    %3336 = vmatpush.bf16.msra.mxu0 %v3261
    %3337 = vmatpush.bf16.msra.mxu0 %v3260
    %3338 = vmatpush.bf16.msra.mxu0 %v3259
    %3339 = vmatpush.bf16.msra.mxu0 %v3258
    %3340 = vmatmul.bf16.gmra.mxu0 %v3044
    %v3341 = vpop.f32.mrf.mxu0
    %v3342 = vadd.f32 %v3329, %v3341
    %v3343 = vpop.f32.mrf.mxu0
    %3344 = vdwg.mxu0
    %3345 = vmatpush.bf16.msra.mxu0 %v3273
    %3346 = vmatpush.bf16.msra.mxu0 %v3272
    %3347 = vmatpush.bf16.msra.mxu0 %v3271
    %3348 = vmatpush.bf16.msra.mxu0 %v3270
    %3349 = vmatpush.bf16.msra.mxu0 %v3269
    %3350 = vmatpush.bf16.msra.mxu0 %v3268
    %3351 = vmatpush.bf16.msra.mxu0 %v3267
    %3352 = vmatpush.bf16.msra.mxu0 %v3266
    %3353 = vmatmul.bf16.gmra.mxu0 %v3045
    %v3354 = vpop.f32.mrf.mxu0
    %v3355 = vadd.f32 %v3342, %v3354
    %v3356 = vpop.f32.mrf.mxu0
    %3357 = vdwg.mxu0
    %3358 = vst [vmem:[#allocation8] sm:$0x3] %v3355
    // Predicated region
    $region46: #{soft_q_forward.1} parent=1 // pred_check
      _
    $region47: #{soft_q_forward.1} parent=1 // pred_check_branch
      %3360 = sbr.rel (0) target = $region49
    $region48: #{soft_q_forward.1} parent=1 // pred_region
      %3362 = vsyncadd [#allocation9], 0
      %s3364 = sshll.u32 [#allocation8], 4
      %s3365 = int_to_ptr.vmem [resolvable:$true] %s3364
      %s3366 = sshll.u32 %s11, 4
      %s3367 = int_to_ptr.hbm [resolvable:$true] %s3366
      %3369 = dma.vmem_to_hbm [thread:$0]  %s3365, 32, %s3367, [#allocation9]
    $region49: #{soft_q_forward.1} parent=1 // pred_fallthru
      _
    // Predicated region
    $region50: #{soft_q_forward.1} parent=1 // pred_check
      _
    $region51: #{soft_q_forward.1} parent=1 // pred_check_branch
      %3371 = sbr.rel (0) target = $region53
    $region52: #{soft_q_forward.1} parent=1 // pred_region
      %3373 = dma.done [#allocation9], 32
    $region53: #{soft_q_forward.1} parent=1 // pred_fallthru
      _
    %3374 = vsyncpa [#allocation9], 1

</llo_original>
